<compile_context>
chip_gen: v6e
topology: v6e:2x2x1
jax: 0.10.0
libtpu: 0.0.40
codegen_flags: <defaults>
</compile_context>

<pallas_src>
import functools
import numpy as np
import jax
import jax.numpy as jnp
from jax.experimental import pallas as pl
from jax.experimental.pallas import tpu as pltpu

# --- SSIM constants (torchmetrics defaults with data_range=1.0) -------------
SIGMA = 1.5
KSIZE = int(3.5 * SIGMA + 0.5) * 2 + 1   # = 11
PAD = (KSIZE - 1) // 2                   # = 5
K1, K2 = 0.01, 0.03
DATA_RANGE = 1.0
C1 = (K1 * DATA_RANGE) ** 2
C2 = (K2 * DATA_RANGE) ** 2


def _gauss_1d(kernel_size, sigma):
    dist = np.arange((1 - kernel_size) / 2.0, (1 + kernel_size) / 2.0, 1.0)
    g = np.exp(-((dist / sigma) ** 2) / 2.0)
    return (g / g.sum()).astype(np.float64)


GW = _gauss_1d(KSIZE, SIGMA)


def _blur_matrix(n):
    """Banded (n, n) matrix M with M[i, j] = weight of source pixel j in
    blurred output pixel i, with numpy/torch 'reflect' boundary handling
    folded in (equivalent to reflect-pad by PAD then 'valid' 11-tap conv)."""
    m = np.zeros((n, n), np.float64)
    for i in range(n):
        for k in range(KSIZE):
            j = i + k - PAD
            if j < 0:
                j = -j
            elif j >= n:
                j = 2 * n - 2 - j
            m[i, j] += GW[k]
    return m.astype(np.float32)


def _pick_batch_tile(n, h, w, budget_bytes=20 * 2**20):
    """Largest divisor of n whose per-step f32 working set fits the budget."""
    per_img = 4 * (2 * 2 * h * w      # t, p (double-buffered)
                   + 15 * h * w       # 5 moments: raw + h-blur + v-blur
                   + 6 * h * w        # ssim elementwise temps
                   + 5 * h * h)       # broadcast A_h slab
    tb = max(1, min(n, budget_bytes // max(per_img, 1)))
    while n % tb:
        tb -= 1
    return tb


def _mse_ssim_kernel(a_h_ref, a_w_ref, t_ref, p_ref, ssim_ref, sse_ref,
                     *, tb, h, w):
    t = t_ref[...].astype(jnp.float32)   # (tb, h, w), unpadded
    p = p_ref[...].astype(jnp.float32)
    a_h = a_h_ref[...]                   # (h, h)
    a_w = a_w_ref[...]                   # (w, w)

    # --- fused separable Gaussian blur of all 5 moment maps on the MXU ---
    b5 = 5 * tb
    m = jnp.concatenate([t, p, t * t, p * p, t * p], axis=0)   # (b5, h, w)

    # horizontal pass: plain matmul, reflect boundary baked into a_w
    yh = jnp.dot(m.reshape(b5 * h, w), a_w,
                 preferred_element_type=jnp.float32).reshape(b5, h, w)

    # vertical pass: batched matmul, reflect boundary baked into a_h
    a_hb = jnp.broadcast_to(a_h[None, :, :], (b5, h, h))
    z = jnp.einsum("bij,bjw->biw", a_hb, yh,
                   preferred_element_type=jnp.float32)          # (b5, h, w)

    mu_t = z[0 * tb:1 * tb]
    mu_p = z[1 * tb:2 * tb]
    e_tt = z[2 * tb:3 * tb]
    e_pp = z[3 * tb:4 * tb]
    e_tp = z[4 * tb:5 * tb]

    sigma_t = e_tt - mu_t * mu_t
    sigma_p = e_pp - mu_p * mu_p
    sigma_tp = e_tp - mu_t * mu_p

    numer = (2.0 * mu_t * mu_p + C1) * (2.0 * sigma_tp + C2)
    denom = (mu_t * mu_t + mu_p * mu_p + C1) * (sigma_t + sigma_p + C2)
    # exact reciprocal (approx=True shifts SSIM in the ~4th decimal; C1=1e-4
    # makes the luminance term sensitive, so keep it exact).
    ssim_map = numer * pl.reciprocal(denom, approx=False)       # (tb, h, w)

    # interior crop [PAD:h-PAD, PAD:w-PAD] as a mask (avoids unaligned slices)
    rows = jax.lax.broadcasted_iota(jnp.int32, (h, w), 0)
    cols = jax.lax.broadcasted_iota(jnp.int32, (h, w), 1)
    interior = ((rows >= PAD) & (rows < h - PAD)
                & (cols >= PAD) & (cols < w - PAD))
    ssim_ref[...] = jnp.sum(
        jnp.where(interior[None, :, :], ssim_map, 0.0)).reshape(1, 1, 1)

    # MSE partial sum over the full (unpadded) pixels of this block.
    dt = p - t
    sse_ref[...] = jnp.sum(dt * dt).reshape(1, 1, 1)


def mse_ssim_loss(target, pred):
    """target, pred: (B, C, H, W) float32 in [0, 1]. Returns scalar loss."""
    b, c, h, w = target.shape
    assert h > 2 * PAD and w > 2 * PAD, "spatial dims must exceed 2*PAD=10"
    n = b * c

    t = target.reshape(n, h, w).astype(jnp.float32)
    p = pred.reshape(n, h, w).astype(jnp.float32)
    a_h = jnp.asarray(_blur_matrix(h))          # vertical:   out = A_h @ x
    a_w = jnp.asarray(_blur_matrix(w).T)        # horizontal: out = x @ A_w

    tb = _pick_batch_tile(n, h, w)
    nblk = n // tb

    kernel = functools.partial(_mse_ssim_kernel, tb=tb, h=h, w=w)

    ssim_part, sse_part = pl.pallas_call(
        kernel,
        out_shape=(jax.ShapeDtypeStruct((nblk, 1, 1), jnp.float32),
                   jax.ShapeDtypeStruct((nblk, 1, 1), jnp.float32)),
        grid_spec=pltpu.PrefetchScalarGridSpec(
            num_scalar_prefetch=0,
            grid=(nblk,),
            in_specs=[
                pl.BlockSpec((h, h), lambda i: (0, 0)),      # A_h, resident
                pl.BlockSpec((w, w), lambda i: (0, 0)),      # A_w, resident
                pl.BlockSpec((tb, h, w), lambda i: (i, 0, 0)),
                pl.BlockSpec((tb, h, w), lambda i: (i, 0, 0)),
            ],
            out_specs=(pl.BlockSpec((1, 1, 1), lambda i: (i, 0, 0)),
                       pl.BlockSpec((1, 1, 1), lambda i: (i, 0, 0))),
        ),
        compiler_params=pltpu.CompilerParams(
            dimension_semantics=("parallel",),      # per-block partials -> megacore-safe
            vmem_limit_bytes=48 * 1024 * 1024,
        ),
    )(a_h, a_w, t, p)

    # Final tiny reduction + normalization in JAX.
    mse = jnp.sum(sse_part) / (n * h * w)
    ssim = jnp.sum(ssim_part) / (n * (h - 2 * PAD) * (w - 2 * PAD))
    return mse + (1.0 - ssim)


if __name__ == "__main__":
    key = jax.random.PRNGKey(0)
    k1, k2 = jax.random.split(key)
    target = jax.random.uniform(k1, (2, 4, 16, 16), dtype=jnp.float32)
    pred = jax.random.uniform(k2, (2, 4, 16, 16), dtype=jnp.float32)

    loss = jax.jit(mse_ssim_loss)(target, pred)
    jax.block_until_ready(loss)
    print("KERNEL_OK")
</pallas_src>

<mosaic_0001>
module attributes {stable_mosaic.version = 11 : i64} {
  func.func @_mse_ssim_kernel(%arg0: i32, %arg1: memref<16x16xf32, #tpu.memory_space<vmem>>, %arg2: memref<16x16xf32, #tpu.memory_space<vmem>>, %arg3: memref<8x16x16xf32, #tpu.memory_space<vmem>>, %arg4: memref<8x16x16xf32, #tpu.memory_space<vmem>>, %arg5: memref<1x1x1xf32, #tpu.memory_space<vmem>>, %arg6: memref<1x1x1xf32, #tpu.memory_space<vmem>>) attributes {dimension_semantics = [#tpu.dimension_semantics<parallel>], iteration_bounds = array<i64: 1>, scalar_prefetch = 0 : i64, scratch_operands = 0 : i64, tpu.core_type = #tpu.core_type<tc>, window_params = [{pipeline_mode = #tpu.pipeline_mode<synchronous>, transform_indices = @transform_0, window_bounds = array<i64: 16, 16>}, {pipeline_mode = #tpu.pipeline_mode<synchronous>, transform_indices = @transform_1, window_bounds = array<i64: 16, 16>}, {transform_indices = @transform_2, window_bounds = array<i64: 8, 16, 16>}, {transform_indices = @transform_3, window_bounds = array<i64: 8, 16, 16>}, {transform_indices = @transform_4, window_bounds = array<i64: 1, 1, 1>}, {transform_indices = @transform_5, window_bounds = array<i64: 1, 1, 1>}]} {
    %c0 = arith.constant 0 : index
    %c0_0 = arith.constant 0 : index
    %c0_1 = arith.constant 0 : index
    %0 = vector.load %arg3[%c0, %c0_0, %c0_1] : memref<8x16x16xf32, #tpu.memory_space<vmem>>, vector<8x16x16xf32>
    %c0_2 = arith.constant 0 : index
    %c0_3 = arith.constant 0 : index
    %c0_4 = arith.constant 0 : index
    %1 = vector.load %arg4[%c0_2, %c0_3, %c0_4] : memref<8x16x16xf32, #tpu.memory_space<vmem>>, vector<8x16x16xf32>
    %c0_5 = arith.constant 0 : index
    %c0_6 = arith.constant 0 : index
    %2 = vector.load %arg1[%c0_5, %c0_6] : memref<16x16xf32, #tpu.memory_space<vmem>>, vector<16x16xf32>
    %c0_7 = arith.constant 0 : index
    %c0_8 = arith.constant 0 : index
    %3 = vector.load %arg2[%c0_7, %c0_8] : memref<16x16xf32, #tpu.memory_space<vmem>>, vector<16x16xf32>
    %4 = arith.mulf %0, %0 : vector<8x16x16xf32>
    %5 = arith.mulf %1, %1 : vector<8x16x16xf32>
    %6 = arith.mulf %0, %1 : vector<8x16x16xf32>
    %7 = tpu.concatenate %0, %1, %4, %5, %6 in 0 : vector<8x16x16xf32>, vector<8x16x16xf32>, vector<8x16x16xf32>, vector<8x16x16xf32>, vector<8x16x16xf32> -> vector<40x16x16xf32>
    %8 = vector.shape_cast %7 : vector<40x16x16xf32> to vector<640x16xf32>
    %cst = arith.constant dense<0.000000e+00> : vector<640x16xf32>
    %9 = tpu.matmul %8, %3, %cst {dimension_numbers = #tpu.dot_dimension_numbers<[1], [0], [0], [1], [0, 0, 1, 1], [], []>} : vector<640x16xf32>, vector<16x16xf32>, vector<640x16xf32> -> vector<640x16xf32>
    %10 = vector.shape_cast %9 : vector<640x16xf32> to vector<40x16x16xf32>
    %11 = vector.shape_cast %2 : vector<16x16xf32> to vector<1x16x16xf32>
    %12 = vector.shape_cast %11 : vector<1x16x16xf32> to vector<1x16x16xf32>
    %13 = vector.broadcast %12 : vector<1x16x16xf32> to vector<40x16x16xf32>
    "tpu.trace_start"() <{level = 10 : i32, message = "bij,bjw->biw"}> : () -> ()
    %cst_9 = arith.constant dense<0.000000e+00> : vector<40x16x16xf32>
    %14 = tpu.matmul %13, %10, %cst_9 {dimension_numbers = #tpu.dot_dimension_numbers<[2], [1], [1], [2], [0, 0, 0, 1, 1, 2], [0], [0]>} : vector<40x16x16xf32>, vector<40x16x16xf32>, vector<40x16x16xf32> -> vector<40x16x16xf32>
    "tpu.trace_stop"() : () -> ()
    %15 = vector.extract_strided_slice %14 {offsets = [0, 0, 0], sizes = [8, 16, 16], strides = [1, 1, 1]} : vector<40x16x16xf32> to vector<8x16x16xf32>
    %16 = vector.extract_strided_slice %14 {offsets = [8, 0, 0], sizes = [8, 16, 16], strides = [1, 1, 1]} : vector<40x16x16xf32> to vector<8x16x16xf32>
    %17 = vector.extract_strided_slice %14 {offsets = [16, 0, 0], sizes = [8, 16, 16], strides = [1, 1, 1]} : vector<40x16x16xf32> to vector<8x16x16xf32>
    %18 = vector.extract_strided_slice %14 {offsets = [24, 0, 0], sizes = [8, 16, 16], strides = [1, 1, 1]} : vector<40x16x16xf32> to vector<8x16x16xf32>
    %19 = vector.extract_strided_slice %14 {offsets = [32, 0, 0], sizes = [8, 16, 16], strides = [1, 1, 1]} : vector<40x16x16xf32> to vector<8x16x16xf32>
    %20 = arith.mulf %15, %15 : vector<8x16x16xf32>
    %21 = arith.subf %17, %20 : vector<8x16x16xf32>
    %22 = arith.mulf %16, %16 : vector<8x16x16xf32>
    %23 = arith.subf %18, %22 : vector<8x16x16xf32>
    %24 = arith.mulf %15, %16 : vector<8x16x16xf32>
    %25 = arith.subf %19, %24 : vector<8x16x16xf32>
    %cst_10 = arith.constant 2.000000e+00 : f32
    %26 = vector.broadcast %cst_10 : f32 to vector<8x16x16xf32>
    %27 = arith.mulf %26, %15 : vector<8x16x16xf32>
    %28 = arith.mulf %27, %16 : vector<8x16x16xf32>
    %cst_11 = arith.constant 9.99999974E-5 : f32
    %29 = vector.broadcast %cst_11 : f32 to vector<8x16x16xf32>
    %30 = arith.addf %28, %29 : vector<8x16x16xf32>
    %cst_12 = arith.constant 2.000000e+00 : f32
    %31 = vector.broadcast %cst_12 : f32 to vector<8x16x16xf32>
    %32 = arith.mulf %31, %25 : vector<8x16x16xf32>
    %cst_13 = arith.constant 8.99999984E-4 : f32
    %33 = vector.broadcast %cst_13 : f32 to vector<8x16x16xf32>
    %34 = arith.addf %32, %33 : vector<8x16x16xf32>
    %35 = arith.mulf %30, %34 : vector<8x16x16xf32>
    %36 = arith.mulf %15, %15 : vector<8x16x16xf32>
    %37 = arith.mulf %16, %16 : vector<8x16x16xf32>
    %38 = arith.addf %36, %37 : vector<8x16x16xf32>
    %cst_14 = arith.constant 9.99999974E-5 : f32
    %39 = vector.broadcast %cst_14 : f32 to vector<8x16x16xf32>
    %40 = arith.addf %38, %39 : vector<8x16x16xf32>
    %41 = arith.addf %21, %23 : vector<8x16x16xf32>
    %cst_15 = arith.constant 8.99999984E-4 : f32
    %42 = vector.broadcast %cst_15 : f32 to vector<8x16x16xf32>
    %43 = arith.addf %41, %42 : vector<8x16x16xf32>
    %44 = arith.mulf %40, %43 : vector<8x16x16xf32>
    %45 = tpu.reciprocal %44 : vector<8x16x16xf32> -> vector<8x16x16xf32>
    %46 = arith.mulf %35, %45 : vector<8x16x16xf32>
    %47 = tpu.iota {dimensions = array<i32: 0>} : vector<16x16xi32>
    %48 = tpu.iota {dimensions = array<i32: 1>} : vector<16x16xi32>
    %c5_i32 = arith.constant 5 : i32
    %49 = vector.broadcast %c5_i32 : i32 to vector<16x16xi32>
    %50 = arith.cmpi sge, %47, %49 : vector<16x16xi32>
    %c11_i32 = arith.constant 11 : i32
    %51 = vector.broadcast %c11_i32 : i32 to vector<16x16xi32>
    %52 = arith.cmpi slt, %47, %51 : vector<16x16xi32>
    %53 = arith.andi %50, %52 : vector<16x16xi1>
    %c5_i32_16 = arith.constant 5 : i32
    %54 = vector.broadcast %c5_i32_16 : i32 to vector<16x16xi32>
    %55 = arith.cmpi sge, %48, %54 : vector<16x16xi32>
    %56 = arith.andi %53, %55 : vector<16x16xi1>
    %c11_i32_17 = arith.constant 11 : i32
    %57 = vector.broadcast %c11_i32_17 : i32 to vector<16x16xi32>
    %58 = arith.cmpi slt, %48, %57 : vector<16x16xi32>
    %59 = arith.andi %56, %58 : vector<16x16xi1>
    %60 = vector.shape_cast %59 : vector<16x16xi1> to vector<1x16x16xi1>
    %cst_18 = arith.constant 0.000000e+00 : f32
    %61 = vector.shape_cast %60 : vector<1x16x16xi1> to vector<1x16x16xi1>
    %62 = vector.broadcast %61 : vector<1x16x16xi1> to vector<8x16x16xi1>
    %63 = vector.broadcast %cst_18 : f32 to vector<8x16x16xf32>
    %64 = arith.select %62, %46, %63 : vector<8x16x16xi1>, vector<8x16x16xf32>
    %65 = vector.shape_cast %64 : vector<8x16x16xf32> to vector<1x8x16x16xf32>
    %cst_19 = arith.constant dense<0.000000e+00> : vector<1xf32>
    %66 = vector.multi_reduction <add>, %65, %cst_19 [1, 2, 3] : vector<1x8x16x16xf32> to vector<1xf32>
    %67 = vector.shape_cast %66 : vector<1xf32> to vector<1x1x1x1xf32>
    %68 = vector.extract %67[0, 0, 0, 0] : f32 from vector<1x1x1x1xf32>
    %69 = vector.broadcast %68 : f32 to vector<1x1x1xf32>
    %c0_20 = arith.constant 0 : index
    %c0_21 = arith.constant 0 : index
    %c0_22 = arith.constant 0 : index
    %70 = vector.load %arg5[%c0_20, %c0_21, %c0_22] : memref<1x1x1xf32, #tpu.memory_space<vmem>>, vector<1x1x1xf32>
    tpu.vector_store %arg5[%c0_20, %c0_21, %c0_22], %69 {strides = array<i32>} : memref<1x1x1xf32, #tpu.memory_space<vmem>>, vector<1x1x1xf32>,
    %71 = arith.subf %1, %0 : vector<8x16x16xf32>
    %72 = arith.mulf %71, %71 : vector<8x16x16xf32>
    %73 = vector.shape_cast %72 : vector<8x16x16xf32> to vector<1x8x16x16xf32>
    %cst_23 = arith.constant dense<0.000000e+00> : vector<1xf32>
    %74 = vector.multi_reduction <add>, %73, %cst_23 [1, 2, 3] : vector<1x8x16x16xf32> to vector<1xf32>
    %75 = vector.shape_cast %74 : vector<1xf32> to vector<1x1x1x1xf32>
    %76 = vector.extract %75[0, 0, 0, 0] : f32 from vector<1x1x1x1xf32>
    %77 = vector.broadcast %76 : f32 to vector<1x1x1xf32>
    %c0_24 = arith.constant 0 : index
    %c0_25 = arith.constant 0 : index
    %c0_26 = arith.constant 0 : index
    %78 = vector.load %arg6[%c0_24, %c0_25, %c0_26] : memref<1x1x1xf32, #tpu.memory_space<vmem>>, vector<1x1x1xf32>
    tpu.vector_store %arg6[%c0_24, %c0_25, %c0_26], %77 {strides = array<i32>} : memref<1x1x1xf32, #tpu.memory_space<vmem>>, vector<1x1x1xf32>,
    return
  }
  func.func @transform_0(%arg0: i32) -> (i32, i32) {
    %c0_i32 = arith.constant 0 : i32
    %c0_i32_0 = arith.constant 0 : i32
    %c0_i32_1 = arith.constant 0 : i32
    return %c0_i32, %c0_i32_0 : i32, i32
  }
  func.func @transform_1(%arg0: i32) -> (i32, i32) {
    %c0_i32 = arith.constant 0 : i32
    %c0_i32_0 = arith.constant 0 : i32
    %c0_i32_1 = arith.constant 0 : i32
    return %c0_i32, %c0_i32_0 : i32, i32
  }
  func.func @transform_2(%arg0: i32) -> (i32, i32, i32) {
    %c0_i32 = arith.constant 0 : i32
    %c0_i32_0 = arith.constant 0 : i32
    %c0_i32_1 = arith.constant 0 : i32
    return %arg0, %c0_i32, %c0_i32_0 : i32, i32, i32
  }
  func.func @transform_3(%arg0: i32) -> (i32, i32, i32) {
    %c0_i32 = arith.constant 0 : i32
    %c0_i32_0 = arith.constant 0 : i32
    %c0_i32_1 = arith.constant 0 : i32
    return %arg0, %c0_i32, %c0_i32_0 : i32, i32, i32
  }
  func.func @transform_4(%arg0: i32) -> (i32, i32, i32) {
    %c0_i32 = arith.constant 0 : i32
    %c0_i32_0 = arith.constant 0 : i32
    %c0_i32_1 = arith.constant 0 : i32
    return %arg0, %c0_i32, %c0_i32_0 : i32, i32, i32
  }
  func.func @transform_5(%arg0: i32) -> (i32, i32, i32) {
    %c0_i32 = arith.constant 0 : i32
    %c0_i32_0 = arith.constant 0 : i32
    %c0_i32_1 = arith.constant 0 : i32
    return %arg0, %c0_i32, %c0_i32_0 : i32, i32, i32
  }
}

</mosaic_0001>

<llo_original>
// kernel: mse_ssim_loss.1
$region0: #{mse_ssim_loss.1}
  #allocation0 [shape = 'u32[]', space=smem, size = 0x4, offset = 0x4, fixed_abs, tag = 'smem constant byte address 0x4 - core index']
  #allocation1 [shape = 'u32[144,128]{1,0:T(1,128)}', space=vmem, size = 0x12000, scoped, tag = 'internal scratch']
  %s0 = inlined_call_operand.hbm [shape: f32[16,16], index: 0, kind: input, shape index: {}]
  %s1 = inlined_call_operand.hbm [shape: f32[16,16], index: 1, kind: input, shape index: {}]
  %s2 = inlined_call_operand.hbm [shape: f32[8,16,16], index: 2, kind: input, shape index: {}]
  %s3 = inlined_call_operand.hbm [shape: f32[8,16,16], index: 3, kind: input, shape index: {}]
  %s4 = inlined_call_operand.hbm [shape: f32[1,1,1], index: 4, kind: output, shape index: {0}]
  %s5 = inlined_call_operand.hbm [shape: f32[1,1,1], index: 5, kind: output, shape index: {1}]
  %6 = xla_tuple %s4, %s5
  %s7 = sld [smem:[#allocation0]]
  $region50: #{mse_ssim_loss.1} parent=0
    _
  %s9 = ssub.s32 1, %s7
  %s10 = scalar_select 0, %s9, %s7
  $region1: #{mse_ssim_loss.1} parent=0
    #allocation2 [shape = 'u8[8192]{0}', space=vmem, size = 0x2000, scoped, tag = 'input window, operand 0, single buffered']
    #allocation3 [shape = 's32[1]{0}', space=sflag, size = 0x4, scoped, tag = 'scoped memory for mse_ssim_loss.1']
    #allocation4 [shape = 's32[1]{0}', space=sflag, size = 0x4, scoped, tag = 'scoped memory for mse_ssim_loss.1']
    #allocation5 [shape = 'u8[8192]{0}', space=vmem, size = 0x2000, scoped, tag = 'input window, operand 1, single buffered']
    #allocation6 [shape = 's32[1]{0}', space=sflag, size = 0x4, scoped, tag = 'scoped memory for mse_ssim_loss.1']
    #allocation7 [shape = 'u8[65536]{0}', space=vmem, size = 0x10000, scoped, tag = 'input window, operand 2, single buffered']
    #allocation8 [shape = 'u8[65536]{0}', space=vmem, size = 0x10000, scoped, tag = 'input window, operand 3, single buffered']
    #allocation9 [shape = 's32[1]{0}', space=sflag, size = 0x4, scoped, tag = 'scoped memory for mse_ssim_loss.1']
    #allocation10 [shape = 'u8[512]{0}', space=vmem, size = 0x400, scoped, tag = 'output window, operand 0, single buffered']
    #allocation11 [shape = 'u8[512]{0}', space=vmem, size = 0x400, scoped, tag = 'output window, operand 1, single buffered']
    #allocation12 [shape = 's32[1]{0}', space=sflag, size = 0x4, scoped, tag = 'scoped memory for mse_ssim_loss.1']
    %11 = vsyncpa [#allocation3], 0
    %12 = vsyncpa [#allocation6], 0
    %13 = vsyncpa [#allocation9], 0
    %14 = vsyncpa [#allocation4], 0
    %15 = vsyncpa [#allocation12], 0
    // Predicated region
    $region2: #{mse_ssim_loss.1} parent=1 // pred_check
      _
    $region3: #{mse_ssim_loss.1} parent=1 // pred_check_branch
      %17 = sbr.rel (0) target = $region5
    $region4: #{mse_ssim_loss.1} parent=1 // pred_region
      %s19 = ssub.s32 256, 256
      %20 = vsyncadd [#allocation3], %s19
      %s21 = sshll.u32 [#allocation2], 4
      %s22 = int_to_ptr.vmem [resolvable:$true] %s21
      %27 = dma.hbm_to_vmem [thread:$0]  %s0, 256, %s22, [#allocation3], 128, 128, 8
    $region5: #{mse_ssim_loss.1} parent=1 // pred_fallthru
      _
    // Predicated region
    $region6: #{mse_ssim_loss.1} parent=1 // pred_check
      _
    $region7: #{mse_ssim_loss.1} parent=1 // pred_check_branch
      %29 = sbr.rel (0) target = $region9
    $region8: #{mse_ssim_loss.1} parent=1 // pred_region
      %s31 = ssub.s32 256, 256
      %32 = vsyncadd [#allocation6], %s31
      %s33 = sshll.u32 [#allocation5], 4
      %s34 = int_to_ptr.vmem [resolvable:$true] %s33
      %39 = dma.hbm_to_vmem [thread:$0]  %s1, 256, %s34, [#allocation6], 128, 128, 8
    $region9: #{mse_ssim_loss.1} parent=1 // pred_fallthru
      _
    // Predicated region
    $region10: #{mse_ssim_loss.1} parent=1 // pred_check
      _
    $region11: #{mse_ssim_loss.1} parent=1 // pred_check_branch
      %41 = sbr.rel (0) target = $region13
    $region12: #{mse_ssim_loss.1} parent=1 // pred_region
      %s43 = ssub.s32 2048, 2048
      %44 = vsyncadd [#allocation6], %s43
      %s45 = sshll.u32 [#allocation7], 4
      %s46 = int_to_ptr.vmem [resolvable:$true] %s45
      %51 = dma.hbm_to_vmem [thread:$0]  %s2, 2048, %s46, [#allocation6], 128, 128, 8
    $region13: #{mse_ssim_loss.1} parent=1 // pred_fallthru
      _
    // Predicated region
    $region14: #{mse_ssim_loss.1} parent=1 // pred_check
      _
    $region15: #{mse_ssim_loss.1} parent=1 // pred_check_branch
      %53 = sbr.rel (0) target = $region17
    $region16: #{mse_ssim_loss.1} parent=1 // pred_region
      %s55 = ssub.s32 2048, 2048
      %56 = vsyncadd [#allocation9], %s55
      %s57 = sshll.u32 [#allocation8], 4
      %s58 = int_to_ptr.vmem [resolvable:$true] %s57
      %63 = dma.hbm_to_vmem [thread:$0]  %s3, 2048, %s58, [#allocation9], 128, 128, 8
    $region17: #{mse_ssim_loss.1} parent=1 // pred_fallthru
      _
    // Predicated region
    $region18: #{mse_ssim_loss.1} parent=1 // pred_check
      _
    $region19: #{mse_ssim_loss.1} parent=1 // pred_check_branch
      %65 = sbr.rel (0) target = $region21
    $region20: #{mse_ssim_loss.1} parent=1 // pred_region
      %66 = dma.done [#allocation3], 256
    $region21: #{mse_ssim_loss.1} parent=1 // pred_fallthru
      _
    // Predicated region
    $region22: #{mse_ssim_loss.1} parent=1 // pred_check
      _
    $region23: #{mse_ssim_loss.1} parent=1 // pred_check_branch
      %68 = sbr.rel (0) target = $region25
    $region24: #{mse_ssim_loss.1} parent=1 // pred_region
      %69 = dma.done [#allocation6], 256
    $region25: #{mse_ssim_loss.1} parent=1 // pred_fallthru
      _
    // Predicated region
    $region26: #{mse_ssim_loss.1} parent=1 // pred_check
      _
    $region27: #{mse_ssim_loss.1} parent=1 // pred_check_branch
      %71 = sbr.rel (0) target = $region29
    $region28: #{mse_ssim_loss.1} parent=1 // pred_region
      %72 = dma.done [#allocation6], 2048
    $region29: #{mse_ssim_loss.1} parent=1 // pred_fallthru
      _
    // Predicated region
    $region30: #{mse_ssim_loss.1} parent=1 // pred_check
      _
    $region31: #{mse_ssim_loss.1} parent=1 // pred_check_branch
      %74 = sbr.rel (0) target = $region33
    $region32: #{mse_ssim_loss.1} parent=1 // pred_region
      %75 = dma.done [#allocation9], 2048
    $region33: #{mse_ssim_loss.1} parent=1 // pred_fallthru
      _
    %v76 = vld [vmem:[#allocation7] sm:$0xff]
    %v77 = vld [vmem:[#allocation7 + $0x8] sm:$0xff]
    %v78 = vld [vmem:[#allocation7 + $0x10] sm:$0xff]
    %v79 = vld [vmem:[#allocation7 + $0x18] sm:$0xff]
    %v80 = vld [vmem:[#allocation7 + $0x20] sm:$0xff]
    %v81 = vld [vmem:[#allocation7 + $0x28] sm:$0xff]
    %v82 = vld [vmem:[#allocation7 + $0x30] sm:$0xff]
    %v83 = vld [vmem:[#allocation7 + $0x38] sm:$0xff]
    %v84 = vld [vmem:[#allocation7 + $0x40] sm:$0xff]
    %v85 = vld [vmem:[#allocation7 + $0x48] sm:$0xff]
    %v86 = vld [vmem:[#allocation7 + $0x50] sm:$0xff]
    %v87 = vld [vmem:[#allocation7 + $0x58] sm:$0xff]
    %v88 = vld [vmem:[#allocation7 + $0x60] sm:$0xff]
    %v89 = vld [vmem:[#allocation7 + $0x68] sm:$0xff]
    %v90 = vld [vmem:[#allocation7 + $0x70] sm:$0xff]
    %v91 = vld [vmem:[#allocation7 + $0x78] sm:$0xff]
    %v92 = vld [vmem:[#allocation8] sm:$0xff]
    %v93 = vld [vmem:[#allocation8 + $0x8] sm:$0xff]
    %v94 = vld [vmem:[#allocation8 + $0x10] sm:$0xff]
    %v95 = vld [vmem:[#allocation8 + $0x18] sm:$0xff]
    %v96 = vld [vmem:[#allocation8 + $0x20] sm:$0xff]
    %v97 = vld [vmem:[#allocation8 + $0x28] sm:$0xff]
    %v98 = vld [vmem:[#allocation8 + $0x30] sm:$0xff]
    %v99 = vld [vmem:[#allocation8 + $0x38] sm:$0xff]
    %v100 = vld [vmem:[#allocation8 + $0x40] sm:$0xff]
    %v101 = vld [vmem:[#allocation8 + $0x48] sm:$0xff]
    %v102 = vld [vmem:[#allocation8 + $0x50] sm:$0xff]
    %v103 = vld [vmem:[#allocation8 + $0x58] sm:$0xff]
    %v104 = vld [vmem:[#allocation8 + $0x60] sm:$0xff]
    %v105 = vld [vmem:[#allocation8 + $0x68] sm:$0xff]
    %v106 = vld [vmem:[#allocation8 + $0x70] sm:$0xff]
    %v107 = vld [vmem:[#allocation8 + $0x78] sm:$0xff]
    %v108 = vld [vmem:[#allocation2] sm:$0xff]
    %v109 = vld [vmem:[#allocation2 + $0x8] sm:$0xff]
    %v110 = vld [vmem:[#allocation5] sm:$0xff]
    %v111 = vld [vmem:[#allocation5 + $0x8] sm:$0xff]
    %v112 = vmul.f32 %v76, %v76
    %v113 = vmul.f32 %v77, %v77
    %v114 = vmul.f32 %v78, %v78
    %v115 = vmul.f32 %v79, %v79
    %v116 = vmul.f32 %v80, %v80
    %v117 = vmul.f32 %v81, %v81
    %v118 = vmul.f32 %v82, %v82
    %v119 = vmul.f32 %v83, %v83
    %v120 = vmul.f32 %v84, %v84
    %v121 = vmul.f32 %v85, %v85
    %v122 = vmul.f32 %v86, %v86
    %v123 = vmul.f32 %v87, %v87
    %v124 = vmul.f32 %v88, %v88
    %v125 = vmul.f32 %v89, %v89
    %v126 = vmul.f32 %v90, %v90
    %v127 = vmul.f32 %v91, %v91
    %v128 = vmul.f32 %v92, %v92
    %v129 = vmul.f32 %v93, %v93
    %v130 = vmul.f32 %v94, %v94
    %v131 = vmul.f32 %v95, %v95
    %v132 = vmul.f32 %v96, %v96
    %v133 = vmul.f32 %v97, %v97
    %v134 = vmul.f32 %v98, %v98
    %v135 = vmul.f32 %v99, %v99
    %v136 = vmul.f32 %v100, %v100
    %v137 = vmul.f32 %v101, %v101
    %v138 = vmul.f32 %v102, %v102
    %v139 = vmul.f32 %v103, %v103
    %v140 = vmul.f32 %v104, %v104
    %v141 = vmul.f32 %v105, %v105
    %v142 = vmul.f32 %v106, %v106
    %v143 = vmul.f32 %v107, %v107
    %v144 = vmul.f32 %v76, %v92
    %v145 = vmul.f32 %v77, %v93
    %v146 = vmul.f32 %v78, %v94
    %v147 = vmul.f32 %v79, %v95
    %v148 = vmul.f32 %v80, %v96
    %v149 = vmul.f32 %v81, %v97
    %v150 = vmul.f32 %v82, %v98
    %v151 = vmul.f32 %v83, %v99
    %v152 = vmul.f32 %v84, %v100
    %v153 = vmul.f32 %v85, %v101
    %v154 = vmul.f32 %v86, %v102
    %v155 = vmul.f32 %v87, %v103
    %v156 = vmul.f32 %v88, %v104
    %v157 = vmul.f32 %v89, %v105
    %v158 = vmul.f32 %v90, %v106
    %v159 = vmul.f32 %v91, %v107
    %vm160 = vcmask 130048
    %v162 = vsel %vm160, %v76, 0
    %v165 = vsel %vm160, %v77, 0
    %v168 = vsel %vm160, %v78, 0
    %v171 = vsel %vm160, %v79, 0
    %v174 = vsel %vm160, %v80, 0
    %v177 = vsel %vm160, %v81, 0
    %v180 = vsel %vm160, %v82, 0
    %v183 = vsel %vm160, %v83, 0
    %v186 = vsel %vm160, %v84, 0
    %v189 = vsel %vm160, %v85, 0
    %v192 = vsel %vm160, %v86, 0
    %v195 = vsel %vm160, %v87, 0
    %v198 = vsel %vm160, %v88, 0
    %v201 = vsel %vm160, %v89, 0
    %v204 = vsel %vm160, %v90, 0
    %v207 = vsel %vm160, %v91, 0
    %v210 = vsel %vm160, %v92, 0
    %v213 = vsel %vm160, %v93, 0
    %v216 = vsel %vm160, %v94, 0
    %v219 = vsel %vm160, %v95, 0
    %v222 = vsel %vm160, %v96, 0
    %v225 = vsel %vm160, %v97, 0
    %v228 = vsel %vm160, %v98, 0
    %v231 = vsel %vm160, %v99, 0
    %v234 = vsel %vm160, %v100, 0
    %v237 = vsel %vm160, %v101, 0
    %v240 = vsel %vm160, %v102, 0
    %v243 = vsel %vm160, %v103, 0
    %v246 = vsel %vm160, %v104, 0
    %v249 = vsel %vm160, %v105, 0
    %v252 = vsel %vm160, %v106, 0
    %v255 = vsel %vm160, %v107, 0
    %v258 = vsel %vm160, %v112, 0
    %v261 = vsel %vm160, %v113, 0
    %v264 = vsel %vm160, %v114, 0
    %v267 = vsel %vm160, %v115, 0
    %v270 = vsel %vm160, %v116, 0
    %v273 = vsel %vm160, %v117, 0
    %v276 = vsel %vm160, %v118, 0
    %v279 = vsel %vm160, %v119, 0
    %v282 = vsel %vm160, %v120, 0
    %v285 = vsel %vm160, %v121, 0
    %v288 = vsel %vm160, %v122, 0
    %v291 = vsel %vm160, %v123, 0
    %v294 = vsel %vm160, %v124, 0
    %v297 = vsel %vm160, %v125, 0
    %v300 = vsel %vm160, %v126, 0
    %v303 = vsel %vm160, %v127, 0
    %v306 = vsel %vm160, %v128, 0
    %v309 = vsel %vm160, %v129, 0
    %v312 = vsel %vm160, %v130, 0
    %v315 = vsel %vm160, %v131, 0
    %v318 = vsel %vm160, %v132, 0
    %v321 = vsel %vm160, %v133, 0
    %v324 = vsel %vm160, %v134, 0
    %v327 = vsel %vm160, %v135, 0
    %v330 = vsel %vm160, %v136, 0
    %v333 = vsel %vm160, %v137, 0
    %v336 = vsel %vm160, %v138, 0
    %v339 = vsel %vm160, %v139, 0
    %v342 = vsel %vm160, %v140, 0
    %v345 = vsel %vm160, %v141, 0
    %v348 = vsel %vm160, %v142, 0
    %v351 = vsel %vm160, %v143, 0
    %v354 = vsel %vm160, %v144, 0
    %v357 = vsel %vm160, %v145, 0
    %v360 = vsel %vm160, %v146, 0
    %v363 = vsel %vm160, %v147, 0
    %v366 = vsel %vm160, %v148, 0
    %v369 = vsel %vm160, %v149, 0
    %v372 = vsel %vm160, %v150, 0
    %v375 = vsel %vm160, %v151, 0
    %v378 = vsel %vm160, %v152, 0
    %v381 = vsel %vm160, %v153, 0
    %v384 = vsel %vm160, %v154, 0
    %v387 = vsel %vm160, %v155, 0
    %v390 = vsel %vm160, %v156, 0
    %v393 = vsel %vm160, %v157, 0
    %v396 = vsel %vm160, %v158, 0
    %v399 = vsel %vm160, %v159, 0
    %401 = vmatprep.subr.mxu0 0.0
    %402 = vmatpush1.msra.mxu0 0.0
    %403 = vmatprep.subr.mxu0 0.0
    %404 = vmatpush1.msra.mxu0 0.0
    %405 = vmatprep.subr.mxu0 0.0
    %406 = vmatpush1.msra.mxu0 0.0
    %407 = vmatprep.subr.mxu0 0.0
    %408 = vmatpush1.msra.mxu0 0.0
    %409 = vmatprep.subr.mxu0 0.0
    %410 = vmatpush1.msra.mxu0 0.0
    %411 = vmatprep.subr.mxu0 0.0
    %412 = vmatpush1.msra.mxu0 0.0
    %413 = vmatprep.subr.mxu0 0.0
    %414 = vmatpush1.msra.mxu0 0.0
    %415 = vmatprep.subr.mxu0 0.0
    %416 = vmatpush1.msra.mxu0 0.0
    %417 = vmatprep.subr.mxu0 0.0
    %418 = vmatpush1.msra.mxu0 0.0
    %419 = vmatprep.subr.mxu0 0.0
    %420 = vmatpush1.msra.mxu0 0.0
    %421 = vmatprep.subr.mxu0 0.0
    %422 = vmatpush1.msra.mxu0 0.0
    %423 = vmatprep.subr.mxu0 0.0
    %424 = vmatpush1.msra.mxu0 0.0
    %425 = vmatprep.subr.mxu0 0.0
    %426 = vmatpush1.msra.mxu0 0.0
    %427 = vmatprep.subr.mxu0 0.0
    %428 = vmatpush1.msra.mxu0 0.0
    %429 = vmatprep.subr.mxu0 0.0
    %430 = vmatpush1.msra.mxu0 %v111
    %431 = vmatprep.subr.mxu0 0.0
    %432 = vmatpush1.msra.mxu0 %v110
    %433 = vmatprep.subr.mxu0 0.0
    %434 = vmatpush2.msra.mxu0 0.0
    %435 = vmatprep.subr.mxu0 0.0
    %436 = vmatpush2.msra.mxu0 0.0
    %437 = vmatprep.subr.mxu0 0.0
    %438 = vmatpush2.msra.mxu0 0.0
    %439 = vmatprep.subr.mxu0 0.0
    %440 = vmatpush2.msra.mxu0 0.0
    %441 = vmatprep.subr.mxu0 0.0
    %442 = vmatpush2.msra.mxu0 0.0
    %443 = vmatprep.subr.mxu0 0.0
    %444 = vmatpush2.msra.mxu0 0.0
    %445 = vmatprep.subr.mxu0 0.0
    %446 = vmatpush2.msra.mxu0 0.0
    %447 = vmatprep.subr.mxu0 0.0
    %448 = vmatpush2.msra.mxu0 0.0
    %449 = vmatprep.subr.mxu0 0.0
    %450 = vmatpush2.msra.mxu0 0.0
    %451 = vmatprep.subr.mxu0 0.0
    %452 = vmatpush2.msra.mxu0 0.0
    %453 = vmatprep.subr.mxu0 0.0
    %454 = vmatpush2.msra.mxu0 0.0
    %455 = vmatprep.subr.mxu0 0.0
    %456 = vmatpush2.msra.mxu0 0.0
    %457 = vmatprep.subr.mxu0 0.0
    %458 = vmatpush2.msra.mxu0 0.0
    %459 = vmatprep.subr.mxu0 0.0
    %460 = vmatpush2.msra.mxu0 0.0
    %461 = vmatprep.subr.mxu0 0.0
    %462 = vmatpush2.msra.mxu0 0.0
    %463 = vmatprep.subr.mxu0 0.0
    %464 = vmatpush2.msra.mxu0 0.0
    %465 = vmatprep.mubr.f32.mxu0 0.0
    %466 = vmatmul.mubr.f32.gmra.mxu0 %v162
    %v467 = vpop.f32.mrf.mxu0
    %v468 = vadd.f32 0.0, %v467
    %v469 = vpop.f32.mrf.mxu0
    %470 = vmatprep.mubr.f32.mxu0 0.0
    %471 = vmatmul.mubr.f32.gmra.mxu0 %v165
    %v472 = vpop.f32.mrf.mxu0
    %v473 = vadd.f32 0.0, %v472
    %v474 = vpop.f32.mrf.mxu0
    %475 = vmatprep.mubr.f32.mxu0 0.0
    %476 = vmatmul.mubr.f32.gmra.mxu0 %v168
    %v477 = vpop.f32.mrf.mxu0
    %v478 = vadd.f32 0.0, %v477
    %v479 = vpop.f32.mrf.mxu0
    %480 = vmatprep.mubr.f32.mxu0 0.0
    %481 = vmatmul.mubr.f32.gmra.mxu0 %v171
    %v482 = vpop.f32.mrf.mxu0
    %v483 = vadd.f32 0.0, %v482
    %v484 = vpop.f32.mrf.mxu0
    %485 = vmatprep.mubr.f32.mxu0 0.0
    %486 = vmatmul.mubr.f32.gmra.mxu0 %v174
    %v487 = vpop.f32.mrf.mxu0
    %v488 = vadd.f32 0.0, %v487
    %v489 = vpop.f32.mrf.mxu0
    %490 = vmatprep.mubr.f32.mxu0 0.0
    %491 = vmatmul.mubr.f32.gmra.mxu0 %v177
    %v492 = vpop.f32.mrf.mxu0
    %v493 = vadd.f32 0.0, %v492
    %v494 = vpop.f32.mrf.mxu0
    %495 = vmatprep.mubr.f32.mxu0 0.0
    %496 = vmatmul.mubr.f32.gmra.mxu0 %v180
    %v497 = vpop.f32.mrf.mxu0
    %v498 = vadd.f32 0.0, %v497
    %v499 = vpop.f32.mrf.mxu0
    %500 = vmatprep.mubr.f32.mxu0 0.0
    %501 = vmatmul.mubr.f32.gmra.mxu0 %v183
    %v502 = vpop.f32.mrf.mxu0
    %v503 = vadd.f32 0.0, %v502
    %v504 = vpop.f32.mrf.mxu0
    %505 = vmatprep.mubr.f32.mxu0 0.0
    %506 = vmatmul.mubr.f32.gmra.mxu0 %v186
    %v507 = vpop.f32.mrf.mxu0
    %v508 = vadd.f32 0.0, %v507
    %v509 = vpop.f32.mrf.mxu0
    %510 = vmatprep.mubr.f32.mxu0 0.0
    %511 = vmatmul.mubr.f32.gmra.mxu0 %v189
    %v512 = vpop.f32.mrf.mxu0
    %v513 = vadd.f32 0.0, %v512
    %v514 = vpop.f32.mrf.mxu0
    %515 = vmatprep.mubr.f32.mxu0 0.0
    %516 = vmatmul.mubr.f32.gmra.mxu0 %v192
    %v517 = vpop.f32.mrf.mxu0
    %v518 = vadd.f32 0.0, %v517
    %v519 = vpop.f32.mrf.mxu0
    %520 = vmatprep.mubr.f32.mxu0 0.0
    %521 = vmatmul.mubr.f32.gmra.mxu0 %v195
    %v522 = vpop.f32.mrf.mxu0
    %v523 = vadd.f32 0.0, %v522
    %v524 = vpop.f32.mrf.mxu0
    %525 = vmatprep.mubr.f32.mxu0 0.0
    %526 = vmatmul.mubr.f32.gmra.mxu0 %v198
    %v527 = vpop.f32.mrf.mxu0
    %v528 = vadd.f32 0.0, %v527
    %v529 = vpop.f32.mrf.mxu0
    %530 = vmatprep.mubr.f32.mxu0 0.0
    %531 = vmatmul.mubr.f32.gmra.mxu0 %v201
    %v532 = vpop.f32.mrf.mxu0
    %v533 = vadd.f32 0.0, %v532
    %v534 = vpop.f32.mrf.mxu0
    %535 = vmatprep.mubr.f32.mxu0 0.0
    %536 = vmatmul.mubr.f32.gmra.mxu0 %v204
    %v537 = vpop.f32.mrf.mxu0
    %v538 = vadd.f32 0.0, %v537
    %v539 = vpop.f32.mrf.mxu0
    %540 = vmatprep.mubr.f32.mxu0 0.0
    %541 = vmatmul.mubr.f32.gmra.mxu0 %v207
    %v542 = vpop.f32.mrf.mxu0
    %v543 = vadd.f32 0.0, %v542
    %v544 = vpop.f32.mrf.mxu0
    %545 = vmatprep.mubr.f32.mxu0 0.0
    %546 = vmatmul.mubr.f32.gmra.mxu0 %v210
    %v547 = vpop.f32.mrf.mxu0
    %v548 = vadd.f32 0.0, %v547
    %v549 = vpop.f32.mrf.mxu0
    %550 = vmatprep.mubr.f32.mxu0 0.0
    %551 = vmatmul.mubr.f32.gmra.mxu0 %v213
    %v552 = vpop.f32.mrf.mxu0
    %v553 = vadd.f32 0.0, %v552
    %v554 = vpop.f32.mrf.mxu0
    %555 = vmatprep.mubr.f32.mxu0 0.0
    %556 = vmatmul.mubr.f32.gmra.mxu0 %v216
    %v557 = vpop.f32.mrf.mxu0
    %v558 = vadd.f32 0.0, %v557
    %v559 = vpop.f32.mrf.mxu0
    %560 = vmatprep.mubr.f32.mxu0 0.0
    %561 = vmatmul.mubr.f32.gmra.mxu0 %v219
    %v562 = vpop.f32.mrf.mxu0
    %v563 = vadd.f32 0.0, %v562
    %v564 = vpop.f32.mrf.mxu0
    %565 = vmatprep.mubr.f32.mxu0 0.0
    %566 = vmatmul.mubr.f32.gmra.mxu0 %v222
    %v567 = vpop.f32.mrf.mxu0
    %v568 = vadd.f32 0.0, %v567
    %v569 = vpop.f32.mrf.mxu0
    %570 = vmatprep.mubr.f32.mxu0 0.0
    %571 = vmatmul.mubr.f32.gmra.mxu0 %v225
    %v572 = vpop.f32.mrf.mxu0
    %v573 = vadd.f32 0.0, %v572
    %v574 = vpop.f32.mrf.mxu0
    %575 = vmatprep.mubr.f32.mxu0 0.0
    %576 = vmatmul.mubr.f32.gmra.mxu0 %v228
    %v577 = vpop.f32.mrf.mxu0
    %v578 = vadd.f32 0.0, %v577
    %v579 = vpop.f32.mrf.mxu0
    %580 = vmatprep.mubr.f32.mxu0 0.0
    %581 = vmatmul.mubr.f32.gmra.mxu0 %v231
    %v582 = vpop.f32.mrf.mxu0
    %v583 = vadd.f32 0.0, %v582
    %v584 = vpop.f32.mrf.mxu0
    %585 = vmatprep.mubr.f32.mxu0 0.0
    %586 = vmatmul.mubr.f32.gmra.mxu0 %v234
    %v587 = vpop.f32.mrf.mxu0
    %v588 = vadd.f32 0.0, %v587
    %v589 = vpop.f32.mrf.mxu0
    %590 = vmatprep.mubr.f32.mxu0 0.0
    %591 = vmatmul.mubr.f32.gmra.mxu0 %v237
    %v592 = vpop.f32.mrf.mxu0
    %v593 = vadd.f32 0.0, %v592
    %v594 = vpop.f32.mrf.mxu0
    %595 = vmatprep.mubr.f32.mxu0 0.0
    %596 = vmatmul.mubr.f32.gmra.mxu0 %v240
    %v597 = vpop.f32.mrf.mxu0
    %v598 = vadd.f32 0.0, %v597
    %v599 = vpop.f32.mrf.mxu0
    %600 = vmatprep.mubr.f32.mxu0 0.0
    %601 = vmatmul.mubr.f32.gmra.mxu0 %v243
    %v602 = vpop.f32.mrf.mxu0
    %v603 = vadd.f32 0.0, %v602
    %v604 = vpop.f32.mrf.mxu0
    %605 = vmatprep.mubr.f32.mxu0 0.0
    %606 = vmatmul.mubr.f32.gmra.mxu0 %v246
    %v607 = vpop.f32.mrf.mxu0
    %v608 = vadd.f32 0.0, %v607
    %v609 = vpop.f32.mrf.mxu0
    %610 = vmatprep.mubr.f32.mxu0 0.0
    %611 = vmatmul.mubr.f32.gmra.mxu0 %v249
    %v612 = vpop.f32.mrf.mxu0
    %v613 = vadd.f32 0.0, %v612
    %v614 = vpop.f32.mrf.mxu0
    %615 = vmatprep.mubr.f32.mxu0 0.0
    %616 = vmatmul.mubr.f32.gmra.mxu0 %v252
    %v617 = vpop.f32.mrf.mxu0
    %v618 = vadd.f32 0.0, %v617
    %v619 = vpop.f32.mrf.mxu0
    %620 = vmatprep.mubr.f32.mxu0 0.0
    %621 = vmatmul.mubr.f32.gmra.mxu0 %v255
    %v622 = vpop.f32.mrf.mxu0
    %v623 = vadd.f32 0.0, %v622
    %v624 = vpop.f32.mrf.mxu0
    %625 = vmatprep.mubr.f32.mxu0 0.0
    %626 = vmatmul.mubr.f32.gmra.mxu0 %v258
    %v627 = vpop.f32.mrf.mxu0
    %v628 = vadd.f32 0.0, %v627
    %v629 = vpop.f32.mrf.mxu0
    %630 = vmatprep.mubr.f32.mxu0 0.0
    %631 = vmatmul.mubr.f32.gmra.mxu0 %v261
    %v632 = vpop.f32.mrf.mxu0
    %v633 = vadd.f32 0.0, %v632
    %v634 = vpop.f32.mrf.mxu0
    %635 = vmatprep.mubr.f32.mxu0 0.0
    %636 = vmatmul.mubr.f32.gmra.mxu0 %v264
    %v637 = vpop.f32.mrf.mxu0
    %v638 = vadd.f32 0.0, %v637
    %v639 = vpop.f32.mrf.mxu0
    %640 = vmatprep.mubr.f32.mxu0 0.0
    %641 = vmatmul.mubr.f32.gmra.mxu0 %v267
    %v642 = vpop.f32.mrf.mxu0
    %v643 = vadd.f32 0.0, %v642
    %v644 = vpop.f32.mrf.mxu0
    %645 = vmatprep.mubr.f32.mxu0 0.0
    %646 = vmatmul.mubr.f32.gmra.mxu0 %v270
    %v647 = vpop.f32.mrf.mxu0
    %v648 = vadd.f32 0.0, %v647
    %v649 = vpop.f32.mrf.mxu0
    %650 = vmatprep.mubr.f32.mxu0 0.0
    %651 = vmatmul.mubr.f32.gmra.mxu0 %v273
    %v652 = vpop.f32.mrf.mxu0
    %v653 = vadd.f32 0.0, %v652
    %v654 = vpop.f32.mrf.mxu0
    %655 = vmatprep.mubr.f32.mxu0 0.0
    %656 = vmatmul.mubr.f32.gmra.mxu0 %v276
    %v657 = vpop.f32.mrf.mxu0
    %v658 = vadd.f32 0.0, %v657
    %v659 = vpop.f32.mrf.mxu0
    %660 = vmatprep.mubr.f32.mxu0 0.0
    %661 = vmatmul.mubr.f32.gmra.mxu0 %v279
    %v662 = vpop.f32.mrf.mxu0
    %v663 = vadd.f32 0.0, %v662
    %v664 = vpop.f32.mrf.mxu0
    %665 = vmatprep.mubr.f32.mxu0 0.0
    %666 = vmatmul.mubr.f32.gmra.mxu0 %v282
    %v667 = vpop.f32.mrf.mxu0
    %v668 = vadd.f32 0.0, %v667
    %v669 = vpop.f32.mrf.mxu0
    %670 = vmatprep.mubr.f32.mxu0 0.0
    %671 = vmatmul.mubr.f32.gmra.mxu0 %v285
    %v672 = vpop.f32.mrf.mxu0
    %v673 = vadd.f32 0.0, %v672
    %v674 = vpop.f32.mrf.mxu0
    %675 = vmatprep.mubr.f32.mxu0 0.0
    %676 = vmatmul.mubr.f32.gmra.mxu0 %v288
    %v677 = vpop.f32.mrf.mxu0
    %v678 = vadd.f32 0.0, %v677
    %v679 = vpop.f32.mrf.mxu0
    %680 = vmatprep.mubr.f32.mxu0 0.0
    %681 = vmatmul.mubr.f32.gmra.mxu0 %v291
    %v682 = vpop.f32.mrf.mxu0
    %v683 = vadd.f32 0.0, %v682
    %v684 = vpop.f32.mrf.mxu0
    %685 = vmatprep.mubr.f32.mxu0 0.0
    %686 = vmatmul.mubr.f32.gmra.mxu0 %v294
    %v687 = vpop.f32.mrf.mxu0
    %v688 = vadd.f32 0.0, %v687
    %v689 = vpop.f32.mrf.mxu0
    %690 = vmatprep.mubr.f32.mxu0 0.0
    %691 = vmatmul.mubr.f32.gmra.mxu0 %v297
    %v692 = vpop.f32.mrf.mxu0
    %v693 = vadd.f32 0.0, %v692
    %v694 = vpop.f32.mrf.mxu0
    %695 = vmatprep.mubr.f32.mxu0 0.0
    %696 = vmatmul.mubr.f32.gmra.mxu0 %v300
    %v697 = vpop.f32.mrf.mxu0
    %v698 = vadd.f32 0.0, %v697
    %v699 = vpop.f32.mrf.mxu0
    %700 = vmatprep.mubr.f32.mxu0 0.0
    %701 = vmatmul.mubr.f32.gmra.mxu0 %v303
    %v702 = vpop.f32.mrf.mxu0
    %v703 = vadd.f32 0.0, %v702
    %v704 = vpop.f32.mrf.mxu0
    %705 = vmatprep.mubr.f32.mxu0 0.0
    %706 = vmatmul.mubr.f32.gmra.mxu0 %v306
    %v707 = vpop.f32.mrf.mxu0
    %v708 = vadd.f32 0.0, %v707
    %v709 = vpop.f32.mrf.mxu0
    %710 = vmatprep.mubr.f32.mxu0 0.0
    %711 = vmatmul.mubr.f32.gmra.mxu0 %v309
    %v712 = vpop.f32.mrf.mxu0
    %v713 = vadd.f32 0.0, %v712
    %v714 = vpop.f32.mrf.mxu0
    %715 = vmatprep.mubr.f32.mxu0 0.0
    %716 = vmatmul.mubr.f32.gmra.mxu0 %v312
    %v717 = vpop.f32.mrf.mxu0
    %v718 = vadd.f32 0.0, %v717
    %v719 = vpop.f32.mrf.mxu0
    %720 = vmatprep.mubr.f32.mxu0 0.0
    %721 = vmatmul.mubr.f32.gmra.mxu0 %v315
    %v722 = vpop.f32.mrf.mxu0
    %v723 = vadd.f32 0.0, %v722
    %v724 = vpop.f32.mrf.mxu0
    %725 = vmatprep.mubr.f32.mxu0 0.0
    %726 = vmatmul.mubr.f32.gmra.mxu0 %v318
    %v727 = vpop.f32.mrf.mxu0
    %v728 = vadd.f32 0.0, %v727
    %v729 = vpop.f32.mrf.mxu0
    %730 = vmatprep.mubr.f32.mxu0 0.0
    %731 = vmatmul.mubr.f32.gmra.mxu0 %v321
    %v732 = vpop.f32.mrf.mxu0
    %v733 = vadd.f32 0.0, %v732
    %v734 = vpop.f32.mrf.mxu0
    %735 = vmatprep.mubr.f32.mxu0 0.0
    %736 = vmatmul.mubr.f32.gmra.mxu0 %v324
    %v737 = vpop.f32.mrf.mxu0
    %v738 = vadd.f32 0.0, %v737
    %v739 = vpop.f32.mrf.mxu0
    %740 = vmatprep.mubr.f32.mxu0 0.0
    %741 = vmatmul.mubr.f32.gmra.mxu0 %v327
    %v742 = vpop.f32.mrf.mxu0
    %v743 = vadd.f32 0.0, %v742
    %v744 = vpop.f32.mrf.mxu0
    %745 = vmatprep.mubr.f32.mxu0 0.0
    %746 = vmatmul.mubr.f32.gmra.mxu0 %v330
    %v747 = vpop.f32.mrf.mxu0
    %v748 = vadd.f32 0.0, %v747
    %v749 = vpop.f32.mrf.mxu0
    %750 = vmatprep.mubr.f32.mxu0 0.0
    %751 = vmatmul.mubr.f32.gmra.mxu0 %v333
    %v752 = vpop.f32.mrf.mxu0
    %v753 = vadd.f32 0.0, %v752
    %v754 = vpop.f32.mrf.mxu0
    %755 = vmatprep.mubr.f32.mxu0 0.0
    %756 = vmatmul.mubr.f32.gmra.mxu0 %v336
    %v757 = vpop.f32.mrf.mxu0
    %v758 = vadd.f32 0.0, %v757
    %v759 = vpop.f32.mrf.mxu0
    %760 = vmatprep.mubr.f32.mxu0 0.0
    %761 = vmatmul.mubr.f32.gmra.mxu0 %v339
    %v762 = vpop.f32.mrf.mxu0
    %v763 = vadd.f32 0.0, %v762
    %v764 = vpop.f32.mrf.mxu0
    %765 = vmatprep.mubr.f32.mxu0 0.0
    %766 = vmatmul.mubr.f32.gmra.mxu0 %v342
    %v767 = vpop.f32.mrf.mxu0
    %v768 = vadd.f32 0.0, %v767
    %v769 = vpop.f32.mrf.mxu0
    %770 = vmatprep.mubr.f32.mxu0 0.0
    %771 = vmatmul.mubr.f32.gmra.mxu0 %v345
    %v772 = vpop.f32.mrf.mxu0
    %v773 = vadd.f32 0.0, %v772
    %v774 = vpop.f32.mrf.mxu0
    %775 = vmatprep.mubr.f32.mxu0 0.0
    %776 = vmatmul.mubr.f32.gmra.mxu0 %v348
    %v777 = vpop.f32.mrf.mxu0
    %v778 = vadd.f32 0.0, %v777
    %v779 = vpop.f32.mrf.mxu0
    %780 = vmatprep.mubr.f32.mxu0 0.0
    %781 = vmatmul.mubr.f32.gmra.mxu0 %v351
    %v782 = vpop.f32.mrf.mxu0
    %v783 = vadd.f32 0.0, %v782
    %v784 = vpop.f32.mrf.mxu0
    %785 = vmatprep.mubr.f32.mxu0 0.0
    %786 = vmatmul.mubr.f32.gmra.mxu0 %v354
    %v787 = vpop.f32.mrf.mxu0
    %v788 = vadd.f32 0.0, %v787
    %v789 = vpop.f32.mrf.mxu0
    %790 = vmatprep.mubr.f32.mxu0 0.0
    %791 = vmatmul.mubr.f32.gmra.mxu0 %v357
    %v792 = vpop.f32.mrf.mxu0
    %v793 = vadd.f32 0.0, %v792
    %v794 = vpop.f32.mrf.mxu0
    %795 = vmatprep.mubr.f32.mxu0 0.0
    %796 = vmatmul.mubr.f32.gmra.mxu0 %v360
    %v797 = vpop.f32.mrf.mxu0
    %v798 = vadd.f32 0.0, %v797
    %v799 = vpop.f32.mrf.mxu0
    %800 = vmatprep.mubr.f32.mxu0 0.0
    %801 = vmatmul.mubr.f32.gmra.mxu0 %v363
    %v802 = vpop.f32.mrf.mxu0
    %v803 = vadd.f32 0.0, %v802
    %v804 = vpop.f32.mrf.mxu0
    %805 = vmatprep.mubr.f32.mxu0 0.0
    %806 = vmatmul.mubr.f32.gmra.mxu0 %v366
    %v807 = vpop.f32.mrf.mxu0
    %v808 = vadd.f32 0.0, %v807
    %v809 = vpop.f32.mrf.mxu0
    %810 = vmatprep.mubr.f32.mxu0 0.0
    %811 = vmatmul.mubr.f32.gmra.mxu0 %v369
    %v812 = vpop.f32.mrf.mxu0
    %v813 = vadd.f32 0.0, %v812
    %v814 = vpop.f32.mrf.mxu0
    %815 = vmatprep.mubr.f32.mxu0 0.0
    %816 = vmatmul.mubr.f32.gmra.mxu0 %v372
    %v817 = vpop.f32.mrf.mxu0
    %v818 = vadd.f32 0.0, %v817
    %v819 = vpop.f32.mrf.mxu0
    %820 = vmatprep.mubr.f32.mxu0 0.0
    %821 = vmatmul.mubr.f32.gmra.mxu0 %v375
    %v822 = vpop.f32.mrf.mxu0
    %v823 = vadd.f32 0.0, %v822
    %v824 = vpop.f32.mrf.mxu0
    %825 = vmatprep.mubr.f32.mxu0 0.0
    %826 = vmatmul.mubr.f32.gmra.mxu0 %v378
    %v827 = vpop.f32.mrf.mxu0
    %v828 = vadd.f32 0.0, %v827
    %v829 = vpop.f32.mrf.mxu0
    %830 = vmatprep.mubr.f32.mxu0 0.0
    %831 = vmatmul.mubr.f32.gmra.mxu0 %v381
    %v832 = vpop.f32.mrf.mxu0
    %v833 = vadd.f32 0.0, %v832
    %v834 = vpop.f32.mrf.mxu0
    %835 = vmatprep.mubr.f32.mxu0 0.0
    %836 = vmatmul.mubr.f32.gmra.mxu0 %v384
    %v837 = vpop.f32.mrf.mxu0
    %v838 = vadd.f32 0.0, %v837
    %v839 = vpop.f32.mrf.mxu0
    %840 = vmatprep.mubr.f32.mxu0 0.0
    %841 = vmatmul.mubr.f32.gmra.mxu0 %v387
    %v842 = vpop.f32.mrf.mxu0
    %v843 = vadd.f32 0.0, %v842
    %v844 = vpop.f32.mrf.mxu0
    %845 = vmatprep.mubr.f32.mxu0 0.0
    %846 = vmatmul.mubr.f32.gmra.mxu0 %v390
    %v847 = vpop.f32.mrf.mxu0
    %v848 = vadd.f32 0.0, %v847
    %v849 = vpop.f32.mrf.mxu0
    %850 = vmatprep.mubr.f32.mxu0 0.0
    %851 = vmatmul.mubr.f32.gmra.mxu0 %v393
    %v852 = vpop.f32.mrf.mxu0
    %v853 = vadd.f32 0.0, %v852
    %v854 = vpop.f32.mrf.mxu0
    %855 = vmatprep.mubr.f32.mxu0 0.0
    %856 = vmatmul.mubr.f32.gmra.mxu0 %v396
    %v857 = vpop.f32.mrf.mxu0
    %v858 = vadd.f32 0.0, %v857
    %v859 = vpop.f32.mrf.mxu0
    %860 = vmatprep.mubr.f32.mxu0 0.0
    %861 = vmatmul.mubr.f32.gmra.mxu0 %v399
    %v862 = vpop.f32.mrf.mxu0
    %v863 = vadd.f32 0.0, %v862
    %v864 = vpop.f32.mrf.mxu0
    %865 = vdwg.mxu0
    %v867 = vsel %vm160, %v108, 0
    %v870 = vsel %vm160, %v109, 0
    %872 = vmatprep.subr.mxu0 0.0
    %873 = vmatpush1.msra.mxu0 0.0
    %874 = vmatprep.subr.mxu0 0.0
    %875 = vmatpush1.msra.mxu0 0.0
    %876 = vmatprep.subr.mxu0 0.0
    %877 = vmatpush1.msra.mxu0 0.0
    %878 = vmatprep.subr.mxu0 0.0
    %879 = vmatpush1.msra.mxu0 0.0
    %880 = vmatprep.subr.mxu0 0.0
    %881 = vmatpush1.msra.mxu0 0.0
    %882 = vmatprep.subr.mxu0 0.0
    %883 = vmatpush1.msra.mxu0 0.0
    %884 = vmatprep.subr.mxu0 0.0
    %885 = vmatpush1.msra.mxu0 0.0
    %886 = vmatprep.subr.mxu0 0.0
    %887 = vmatpush1.msra.mxu0 0.0
    %888 = vmatprep.subr.mxu0 0.0
    %889 = vmatpush1.msra.mxu0 0.0
    %890 = vmatprep.subr.mxu0 0.0
    %891 = vmatpush1.msra.mxu0 0.0
    %892 = vmatprep.subr.mxu0 0.0
    %893 = vmatpush1.msra.mxu0 0.0
    %894 = vmatprep.subr.mxu0 0.0
    %895 = vmatpush1.msra.mxu0 0.0
    %896 = vmatprep.subr.mxu0 0.0
    %897 = vmatpush1.msra.mxu0 0.0
    %898 = vmatprep.subr.mxu0 0.0
    %899 = vmatpush1.msra.mxu0 0.0
    %900 = vmatprep.subr.mxu0 0.0
    %901 = vmatpush1.msra.mxu0 %v473
    %902 = vmatprep.subr.mxu0 0.0
    %903 = vmatpush1.msra.mxu0 %v468
    %904 = vmatprep.subr.mxu0 0.0
    %905 = vmatpush2.msra.mxu0 0.0
    %906 = vmatprep.subr.mxu0 0.0
    %907 = vmatpush2.msra.mxu0 0.0
    %908 = vmatprep.subr.mxu0 0.0
    %909 = vmatpush2.msra.mxu0 0.0
    %910 = vmatprep.subr.mxu0 0.0
    %911 = vmatpush2.msra.mxu0 0.0
    %912 = vmatprep.subr.mxu0 0.0
    %913 = vmatpush2.msra.mxu0 0.0
    %914 = vmatprep.subr.mxu0 0.0
    %915 = vmatpush2.msra.mxu0 0.0
    %916 = vmatprep.subr.mxu0 0.0
    %917 = vmatpush2.msra.mxu0 0.0
    %918 = vmatprep.subr.mxu0 0.0
    %919 = vmatpush2.msra.mxu0 0.0
    %920 = vmatprep.subr.mxu0 0.0
    %921 = vmatpush2.msra.mxu0 0.0
    %922 = vmatprep.subr.mxu0 0.0
    %923 = vmatpush2.msra.mxu0 0.0
    %924 = vmatprep.subr.mxu0 0.0
    %925 = vmatpush2.msra.mxu0 0.0
    %926 = vmatprep.subr.mxu0 0.0
    %927 = vmatpush2.msra.mxu0 0.0
    %928 = vmatprep.subr.mxu0 0.0
    %929 = vmatpush2.msra.mxu0 0.0
    %930 = vmatprep.subr.mxu0 0.0
    %931 = vmatpush2.msra.mxu0 0.0
    %932 = vmatprep.subr.mxu0 0.0
    %933 = vmatpush2.msra.mxu0 0.0
    %934 = vmatprep.subr.mxu0 0.0
    %935 = vmatpush2.msra.mxu0 0.0
    %936 = vmatprep.mubr.f32.mxu0 0.0
    %937 = vmatmul.mubr.f32.gmra.mxu0 %v867
    %v938 = vpop.f32.mrf.mxu0
    %v939 = vadd.f32 0.0, %v938
    %v940 = vpop.f32.mrf.mxu0
    %941 = vmatprep.mubr.f32.mxu0 0.0
    %942 = vmatmul.mubr.f32.gmra.mxu0 %v870
    %v943 = vpop.f32.mrf.mxu0
    %v944 = vadd.f32 0.0, %v943
    %v945 = vpop.f32.mrf.mxu0
    %946 = vdwg.mxu0
    %947 = vmatprep.subr.mxu0 0.0
    %948 = vmatpush1.msra.mxu0 0.0
    %949 = vmatprep.subr.mxu0 0.0
    %950 = vmatpush1.msra.mxu0 0.0
    %951 = vmatprep.subr.mxu0 0.0
    %952 = vmatpush1.msra.mxu0 0.0
    %953 = vmatprep.subr.mxu0 0.0
    %954 = vmatpush1.msra.mxu0 0.0
    %955 = vmatprep.subr.mxu0 0.0
    %956 = vmatpush1.msra.mxu0 0.0
    %957 = vmatprep.subr.mxu0 0.0
    %958 = vmatpush1.msra.mxu0 0.0
    %959 = vmatprep.subr.mxu0 0.0
    %960 = vmatpush1.msra.mxu0 0.0
    %961 = vmatprep.subr.mxu0 0.0
    %962 = vmatpush1.msra.mxu0 0.0
    %963 = vmatprep.subr.mxu0 0.0
    %964 = vmatpush1.msra.mxu0 0.0
    %965 = vmatprep.subr.mxu0 0.0
    %966 = vmatpush1.msra.mxu0 0.0
    %967 = vmatprep.subr.mxu0 0.0
    %968 = vmatpush1.msra.mxu0 0.0
    %969 = vmatprep.subr.mxu0 0.0
    %970 = vmatpush1.msra.mxu0 0.0
    %971 = vmatprep.subr.mxu0 0.0
    %972 = vmatpush1.msra.mxu0 0.0
    %973 = vmatprep.subr.mxu0 0.0
    %974 = vmatpush1.msra.mxu0 0.0
    %975 = vmatprep.subr.mxu0 0.0
    %976 = vmatpush1.msra.mxu0 %v483
    %977 = vmatprep.subr.mxu0 0.0
    %978 = vmatpush1.msra.mxu0 %v478
    %979 = vmatprep.subr.mxu0 0.0
    %980 = vmatpush2.msra.mxu0 0.0
    %981 = vmatprep.subr.mxu0 0.0
    %982 = vmatpush2.msra.mxu0 0.0
    %983 = vmatprep.subr.mxu0 0.0
    %984 = vmatpush2.msra.mxu0 0.0
    %985 = vmatprep.subr.mxu0 0.0
    %986 = vmatpush2.msra.mxu0 0.0
    %987 = vmatprep.subr.mxu0 0.0
    %988 = vmatpush2.msra.mxu0 0.0
    %989 = vmatprep.subr.mxu0 0.0
    %990 = vmatpush2.msra.mxu0 0.0
    %991 = vmatprep.subr.mxu0 0.0
    %992 = vmatpush2.msra.mxu0 0.0
    %993 = vmatprep.subr.mxu0 0.0
    %994 = vmatpush2.msra.mxu0 0.0
    %995 = vmatprep.subr.mxu0 0.0
    %996 = vmatpush2.msra.mxu0 0.0
    %997 = vmatprep.subr.mxu0 0.0
    %998 = vmatpush2.msra.mxu0 0.0
    %999 = vmatprep.subr.mxu0 0.0
    %1000 = vmatpush2.msra.mxu0 0.0
    %1001 = vmatprep.subr.mxu0 0.0
    %1002 = vmatpush2.msra.mxu0 0.0
    %1003 = vmatprep.subr.mxu0 0.0
    %1004 = vmatpush2.msra.mxu0 0.0
    %1005 = vmatprep.subr.mxu0 0.0
    %1006 = vmatpush2.msra.mxu0 0.0
    %1007 = vmatprep.subr.mxu0 0.0
    %1008 = vmatpush2.msra.mxu0 0.0
    %1009 = vmatprep.subr.mxu0 0.0
    %1010 = vmatpush2.msra.mxu0 0.0
    %1011 = vmatprep.mubr.f32.mxu0 0.0
    %1012 = vmatmul.mubr.f32.gmra.mxu0 %v867
    %v1013 = vpop.f32.mrf.mxu0
    %v1014 = vadd.f32 0.0, %v1013
    %v1015 = vpop.f32.mrf.mxu0
    %1016 = vmatprep.mubr.f32.mxu0 0.0
    %1017 = vmatmul.mubr.f32.gmra.mxu0 %v870
    %v1018 = vpop.f32.mrf.mxu0
    %v1019 = vadd.f32 0.0, %v1018
    %v1020 = vpop.f32.mrf.mxu0
    %1021 = vdwg.mxu0
    %1022 = vmatprep.subr.mxu0 0.0
    %1023 = vmatpush1.msra.mxu0 0.0
    %1024 = vmatprep.subr.mxu0 0.0
    %1025 = vmatpush1.msra.mxu0 0.0
    %1026 = vmatprep.subr.mxu0 0.0
    %1027 = vmatpush1.msra.mxu0 0.0
    %1028 = vmatprep.subr.mxu0 0.0
    %1029 = vmatpush1.msra.mxu0 0.0
    %1030 = vmatprep.subr.mxu0 0.0
    %1031 = vmatpush1.msra.mxu0 0.0
    %1032 = vmatprep.subr.mxu0 0.0
    %1033 = vmatpush1.msra.mxu0 0.0
    %1034 = vmatprep.subr.mxu0 0.0
    %1035 = vmatpush1.msra.mxu0 0.0
    %1036 = vmatprep.subr.mxu0 0.0
    %1037 = vmatpush1.msra.mxu0 0.0
    %1038 = vmatprep.subr.mxu0 0.0
    %1039 = vmatpush1.msra.mxu0 0.0
    %1040 = vmatprep.subr.mxu0 0.0
    %1041 = vmatpush1.msra.mxu0 0.0
    %1042 = vmatprep.subr.mxu0 0.0
    %1043 = vmatpush1.msra.mxu0 0.0
    %1044 = vmatprep.subr.mxu0 0.0
    %1045 = vmatpush1.msra.mxu0 0.0
    %1046 = vmatprep.subr.mxu0 0.0
    %1047 = vmatpush1.msra.mxu0 0.0
    %1048 = vmatprep.subr.mxu0 0.0
    %1049 = vmatpush1.msra.mxu0 0.0
    %1050 = vmatprep.subr.mxu0 0.0
    %1051 = vmatpush1.msra.mxu0 %v493
    %1052 = vmatprep.subr.mxu0 0.0
    %1053 = vmatpush1.msra.mxu0 %v488
    %1054 = vmatprep.subr.mxu0 0.0
    %1055 = vmatpush2.msra.mxu0 0.0
    %1056 = vmatprep.subr.mxu0 0.0
    %1057 = vmatpush2.msra.mxu0 0.0
    %1058 = vmatprep.subr.mxu0 0.0
    %1059 = vmatpush2.msra.mxu0 0.0
    %1060 = vmatprep.subr.mxu0 0.0
    %1061 = vmatpush2.msra.mxu0 0.0
    %1062 = vmatprep.subr.mxu0 0.0
    %1063 = vmatpush2.msra.mxu0 0.0
    %1064 = vmatprep.subr.mxu0 0.0
    %1065 = vmatpush2.msra.mxu0 0.0
    %1066 = vmatprep.subr.mxu0 0.0
    %1067 = vmatpush2.msra.mxu0 0.0
    %1068 = vmatprep.subr.mxu0 0.0
    %1069 = vmatpush2.msra.mxu0 0.0
    %1070 = vmatprep.subr.mxu0 0.0
    %1071 = vmatpush2.msra.mxu0 0.0
    %1072 = vmatprep.subr.mxu0 0.0
    %1073 = vmatpush2.msra.mxu0 0.0
    %1074 = vmatprep.subr.mxu0 0.0
    %1075 = vmatpush2.msra.mxu0 0.0
    %1076 = vmatprep.subr.mxu0 0.0
    %1077 = vmatpush2.msra.mxu0 0.0
    %1078 = vmatprep.subr.mxu0 0.0
    %1079 = vmatpush2.msra.mxu0 0.0
    %1080 = vmatprep.subr.mxu0 0.0
    %1081 = vmatpush2.msra.mxu0 0.0
    %1082 = vmatprep.subr.mxu0 0.0
    %1083 = vmatpush2.msra.mxu0 0.0
    %1084 = vmatprep.subr.mxu0 0.0
    %1085 = vmatpush2.msra.mxu0 0.0
    %1086 = vmatprep.mubr.f32.mxu0 0.0
    %1087 = vmatmul.mubr.f32.gmra.mxu0 %v867
    %v1088 = vpop.f32.mrf.mxu0
    %v1089 = vadd.f32 0.0, %v1088
    %v1090 = vpop.f32.mrf.mxu0
    %1091 = vmatprep.mubr.f32.mxu0 0.0
    %1092 = vmatmul.mubr.f32.gmra.mxu0 %v870
    %v1093 = vpop.f32.mrf.mxu0
    %v1094 = vadd.f32 0.0, %v1093
    %v1095 = vpop.f32.mrf.mxu0
    %1096 = vdwg.mxu0
    %1097 = vmatprep.subr.mxu0 0.0
    %1098 = vmatpush1.msra.mxu0 0.0
    %1099 = vmatprep.subr.mxu0 0.0
    %1100 = vmatpush1.msra.mxu0 0.0
    %1101 = vmatprep.subr.mxu0 0.0
    %1102 = vmatpush1.msra.mxu0 0.0
    %1103 = vmatprep.subr.mxu0 0.0
    %1104 = vmatpush1.msra.mxu0 0.0
    %1105 = vmatprep.subr.mxu0 0.0
    %1106 = vmatpush1.msra.mxu0 0.0
    %1107 = vmatprep.subr.mxu0 0.0
    %1108 = vmatpush1.msra.mxu0 0.0
    %1109 = vmatprep.subr.mxu0 0.0
    %1110 = vmatpush1.msra.mxu0 0.0
    %1111 = vmatprep.subr.mxu0 0.0
    %1112 = vmatpush1.msra.mxu0 0.0
    %1113 = vmatprep.subr.mxu0 0.0
    %1114 = vmatpush1.msra.mxu0 0.0
    %1115 = vmatprep.subr.mxu0 0.0
    %1116 = vmatpush1.msra.mxu0 0.0
    %1117 = vmatprep.subr.mxu0 0.0
    %1118 = vmatpush1.msra.mxu0 0.0
    %1119 = vmatprep.subr.mxu0 0.0
    %1120 = vmatpush1.msra.mxu0 0.0
    %1121 = vmatprep.subr.mxu0 0.0
    %1122 = vmatpush1.msra.mxu0 0.0
    %1123 = vmatprep.subr.mxu0 0.0
    %1124 = vmatpush1.msra.mxu0 0.0
    %1125 = vmatprep.subr.mxu0 0.0
    %1126 = vmatpush1.msra.mxu0 %v503
    %1127 = vmatprep.subr.mxu0 0.0
    %1128 = vmatpush1.msra.mxu0 %v498
    %1129 = vmatprep.subr.mxu0 0.0
    %1130 = vmatpush2.msra.mxu0 0.0
    %1131 = vmatprep.subr.mxu0 0.0
    %1132 = vmatpush2.msra.mxu0 0.0
    %1133 = vmatprep.subr.mxu0 0.0
    %1134 = vmatpush2.msra.mxu0 0.0
    %1135 = vmatprep.subr.mxu0 0.0
    %1136 = vmatpush2.msra.mxu0 0.0
    %1137 = vmatprep.subr.mxu0 0.0
    %1138 = vmatpush2.msra.mxu0 0.0
    %1139 = vmatprep.subr.mxu0 0.0
    %1140 = vmatpush2.msra.mxu0 0.0
    %1141 = vmatprep.subr.mxu0 0.0
    %1142 = vmatpush2.msra.mxu0 0.0
    %1143 = vmatprep.subr.mxu0 0.0
    %1144 = vmatpush2.msra.mxu0 0.0
    %1145 = vmatprep.subr.mxu0 0.0
    %1146 = vmatpush2.msra.mxu0 0.0
    %1147 = vmatprep.subr.mxu0 0.0
    %1148 = vmatpush2.msra.mxu0 0.0
    %1149 = vmatprep.subr.mxu0 0.0
    %1150 = vmatpush2.msra.mxu0 0.0
    %1151 = vmatprep.subr.mxu0 0.0
    %1152 = vmatpush2.msra.mxu0 0.0
    %1153 = vmatprep.subr.mxu0 0.0
    %1154 = vmatpush2.msra.mxu0 0.0
    %1155 = vmatprep.subr.mxu0 0.0
    %1156 = vmatpush2.msra.mxu0 0.0
    %1157 = vmatprep.subr.mxu0 0.0
    %1158 = vmatpush2.msra.mxu0 0.0
    %1159 = vmatprep.subr.mxu0 0.0
    %1160 = vmatpush2.msra.mxu0 0.0
    %1161 = vmatprep.mubr.f32.mxu0 0.0
    %1162 = vmatmul.mubr.f32.gmra.mxu0 %v867
    %v1163 = vpop.f32.mrf.mxu0
    %v1164 = vadd.f32 0.0, %v1163
    %v1165 = vpop.f32.mrf.mxu0
    %1166 = vmatprep.mubr.f32.mxu0 0.0
    %1167 = vmatmul.mubr.f32.gmra.mxu0 %v870
    %v1168 = vpop.f32.mrf.mxu0
    %v1169 = vadd.f32 0.0, %v1168
    %v1170 = vpop.f32.mrf.mxu0
    %1171 = vdwg.mxu0
    %1172 = vmatprep.subr.mxu0 0.0
    %1173 = vmatpush1.msra.mxu0 0.0
    %1174 = vmatprep.subr.mxu0 0.0
    %1175 = vmatpush1.msra.mxu0 0.0
    %1176 = vmatprep.subr.mxu0 0.0
    %1177 = vmatpush1.msra.mxu0 0.0
    %1178 = vmatprep.subr.mxu0 0.0
    %1179 = vmatpush1.msra.mxu0 0.0
    %1180 = vmatprep.subr.mxu0 0.0
    %1181 = vmatpush1.msra.mxu0 0.0
    %1182 = vmatprep.subr.mxu0 0.0
    %1183 = vmatpush1.msra.mxu0 0.0
    %1184 = vmatprep.subr.mxu0 0.0
    %1185 = vmatpush1.msra.mxu0 0.0
    %1186 = vmatprep.subr.mxu0 0.0
    %1187 = vmatpush1.msra.mxu0 0.0
    %1188 = vmatprep.subr.mxu0 0.0
    %1189 = vmatpush1.msra.mxu0 0.0
    %1190 = vmatprep.subr.mxu0 0.0
    %1191 = vmatpush1.msra.mxu0 0.0
    %1192 = vmatprep.subr.mxu0 0.0
    %1193 = vmatpush1.msra.mxu0 0.0
    %1194 = vmatprep.subr.mxu0 0.0
    %1195 = vmatpush1.msra.mxu0 0.0
    %1196 = vmatprep.subr.mxu0 0.0
    %1197 = vmatpush1.msra.mxu0 0.0
    %1198 = vmatprep.subr.mxu0 0.0
    %1199 = vmatpush1.msra.mxu0 0.0
    %1200 = vmatprep.subr.mxu0 0.0
    %1201 = vmatpush1.msra.mxu0 %v513
    %1202 = vmatprep.subr.mxu0 0.0
    %1203 = vmatpush1.msra.mxu0 %v508
    %1204 = vmatprep.subr.mxu0 0.0
    %1205 = vmatpush2.msra.mxu0 0.0
    %1206 = vmatprep.subr.mxu0 0.0
    %1207 = vmatpush2.msra.mxu0 0.0
    %1208 = vmatprep.subr.mxu0 0.0
    %1209 = vmatpush2.msra.mxu0 0.0
    %1210 = vmatprep.subr.mxu0 0.0
    %1211 = vmatpush2.msra.mxu0 0.0
    %1212 = vmatprep.subr.mxu0 0.0
    %1213 = vmatpush2.msra.mxu0 0.0
    %1214 = vmatprep.subr.mxu0 0.0
    %1215 = vmatpush2.msra.mxu0 0.0
    %1216 = vmatprep.subr.mxu0 0.0
    %1217 = vmatpush2.msra.mxu0 0.0
    %1218 = vmatprep.subr.mxu0 0.0
    %1219 = vmatpush2.msra.mxu0 0.0
    %1220 = vmatprep.subr.mxu0 0.0
    %1221 = vmatpush2.msra.mxu0 0.0
    %1222 = vmatprep.subr.mxu0 0.0
    %1223 = vmatpush2.msra.mxu0 0.0
    %1224 = vmatprep.subr.mxu0 0.0
    %1225 = vmatpush2.msra.mxu0 0.0
    %1226 = vmatprep.subr.mxu0 0.0
    %1227 = vmatpush2.msra.mxu0 0.0
    %1228 = vmatprep.subr.mxu0 0.0
    %1229 = vmatpush2.msra.mxu0 0.0
    %1230 = vmatprep.subr.mxu0 0.0
    %1231 = vmatpush2.msra.mxu0 0.0
    %1232 = vmatprep.subr.mxu0 0.0
    %1233 = vmatpush2.msra.mxu0 0.0
    %1234 = vmatprep.subr.mxu0 0.0
    %1235 = vmatpush2.msra.mxu0 0.0
    %1236 = vmatprep.mubr.f32.mxu0 0.0
    %1237 = vmatmul.mubr.f32.gmra.mxu0 %v867
    %v1238 = vpop.f32.mrf.mxu0
    %v1239 = vadd.f32 0.0, %v1238
    %v1240 = vpop.f32.mrf.mxu0
    %1241 = vmatprep.mubr.f32.mxu0 0.0
    %1242 = vmatmul.mubr.f32.gmra.mxu0 %v870
    %v1243 = vpop.f32.mrf.mxu0
    %v1244 = vadd.f32 0.0, %v1243
    %v1245 = vpop.f32.mrf.mxu0
    %1246 = vdwg.mxu0
    %1247 = vmatprep.subr.mxu0 0.0
    %1248 = vmatpush1.msra.mxu0 0.0
    %1249 = vmatprep.subr.mxu0 0.0
    %1250 = vmatpush1.msra.mxu0 0.0
    %1251 = vmatprep.subr.mxu0 0.0
    %1252 = vmatpush1.msra.mxu0 0.0
    %1253 = vmatprep.subr.mxu0 0.0
    %1254 = vmatpush1.msra.mxu0 0.0
    %1255 = vmatprep.subr.mxu0 0.0
    %1256 = vmatpush1.msra.mxu0 0.0
    %1257 = vmatprep.subr.mxu0 0.0
    %1258 = vmatpush1.msra.mxu0 0.0
    %1259 = vmatprep.subr.mxu0 0.0
    %1260 = vmatpush1.msra.mxu0 0.0
    %1261 = vmatprep.subr.mxu0 0.0
    %1262 = vmatpush1.msra.mxu0 0.0
    %1263 = vmatprep.subr.mxu0 0.0
    %1264 = vmatpush1.msra.mxu0 0.0
    %1265 = vmatprep.subr.mxu0 0.0
    %1266 = vmatpush1.msra.mxu0 0.0
    %1267 = vmatprep.subr.mxu0 0.0
    %1268 = vmatpush1.msra.mxu0 0.0
    %1269 = vmatprep.subr.mxu0 0.0
    %1270 = vmatpush1.msra.mxu0 0.0
    %1271 = vmatprep.subr.mxu0 0.0
    %1272 = vmatpush1.msra.mxu0 0.0
    %1273 = vmatprep.subr.mxu0 0.0
    %1274 = vmatpush1.msra.mxu0 0.0
    %1275 = vmatprep.subr.mxu0 0.0
    %1276 = vmatpush1.msra.mxu0 %v523
    %1277 = vmatprep.subr.mxu0 0.0
    %1278 = vmatpush1.msra.mxu0 %v518
    %1279 = vmatprep.subr.mxu0 0.0
    %1280 = vmatpush2.msra.mxu0 0.0
    %1281 = vmatprep.subr.mxu0 0.0
    %1282 = vmatpush2.msra.mxu0 0.0
    %1283 = vmatprep.subr.mxu0 0.0
    %1284 = vmatpush2.msra.mxu0 0.0
    %1285 = vmatprep.subr.mxu0 0.0
    %1286 = vmatpush2.msra.mxu0 0.0
    %1287 = vmatprep.subr.mxu0 0.0
    %1288 = vmatpush2.msra.mxu0 0.0
    %1289 = vmatprep.subr.mxu0 0.0
    %1290 = vmatpush2.msra.mxu0 0.0
    %1291 = vmatprep.subr.mxu0 0.0
    %1292 = vmatpush2.msra.mxu0 0.0
    %1293 = vmatprep.subr.mxu0 0.0
    %1294 = vmatpush2.msra.mxu0 0.0
    %1295 = vmatprep.subr.mxu0 0.0
    %1296 = vmatpush2.msra.mxu0 0.0
    %1297 = vmatprep.subr.mxu0 0.0
    %1298 = vmatpush2.msra.mxu0 0.0
    %1299 = vmatprep.subr.mxu0 0.0
    %1300 = vmatpush2.msra.mxu0 0.0
    %1301 = vmatprep.subr.mxu0 0.0
    %1302 = vmatpush2.msra.mxu0 0.0
    %1303 = vmatprep.subr.mxu0 0.0
    %1304 = vmatpush2.msra.mxu0 0.0
    %1305 = vmatprep.subr.mxu0 0.0
    %1306 = vmatpush2.msra.mxu0 0.0
    %1307 = vmatprep.subr.mxu0 0.0
    %1308 = vmatpush2.msra.mxu0 0.0
    %1309 = vmatprep.subr.mxu0 0.0
    %1310 = vmatpush2.msra.mxu0 0.0
    %1311 = vmatprep.mubr.f32.mxu0 0.0
    %1312 = vmatmul.mubr.f32.gmra.mxu0 %v867
    %v1313 = vpop.f32.mrf.mxu0
    %v1314 = vadd.f32 0.0, %v1313
    %v1315 = vpop.f32.mrf.mxu0
    %1316 = vmatprep.mubr.f32.mxu0 0.0
    %1317 = vmatmul.mubr.f32.gmra.mxu0 %v870
    %v1318 = vpop.f32.mrf.mxu0
    %v1319 = vadd.f32 0.0, %v1318
    %v1320 = vpop.f32.mrf.mxu0
    %1321 = vdwg.mxu0
    %1322 = vmatprep.subr.mxu0 0.0
    %1323 = vmatpush1.msra.mxu0 0.0
    %1324 = vmatprep.subr.mxu0 0.0
    %1325 = vmatpush1.msra.mxu0 0.0
    %1326 = vmatprep.subr.mxu0 0.0
    %1327 = vmatpush1.msra.mxu0 0.0
    %1328 = vmatprep.subr.mxu0 0.0
    %1329 = vmatpush1.msra.mxu0 0.0
    %1330 = vmatprep.subr.mxu0 0.0
    %1331 = vmatpush1.msra.mxu0 0.0
    %1332 = vmatprep.subr.mxu0 0.0
    %1333 = vmatpush1.msra.mxu0 0.0
    %1334 = vmatprep.subr.mxu0 0.0
    %1335 = vmatpush1.msra.mxu0 0.0
    %1336 = vmatprep.subr.mxu0 0.0
    %1337 = vmatpush1.msra.mxu0 0.0
    %1338 = vmatprep.subr.mxu0 0.0
    %1339 = vmatpush1.msra.mxu0 0.0
    %1340 = vmatprep.subr.mxu0 0.0
    %1341 = vmatpush1.msra.mxu0 0.0
    %1342 = vmatprep.subr.mxu0 0.0
    %1343 = vmatpush1.msra.mxu0 0.0
    %1344 = vmatprep.subr.mxu0 0.0
    %1345 = vmatpush1.msra.mxu0 0.0
    %1346 = vmatprep.subr.mxu0 0.0
    %1347 = vmatpush1.msra.mxu0 0.0
    %1348 = vmatprep.subr.mxu0 0.0
    %1349 = vmatpush1.msra.mxu0 0.0
    %1350 = vmatprep.subr.mxu0 0.0
    %1351 = vmatpush1.msra.mxu0 %v533
    %1352 = vmatprep.subr.mxu0 0.0
    %1353 = vmatpush1.msra.mxu0 %v528
    %1354 = vmatprep.subr.mxu0 0.0
    %1355 = vmatpush2.msra.mxu0 0.0
    %1356 = vmatprep.subr.mxu0 0.0
    %1357 = vmatpush2.msra.mxu0 0.0
    %1358 = vmatprep.subr.mxu0 0.0
    %1359 = vmatpush2.msra.mxu0 0.0
    %1360 = vmatprep.subr.mxu0 0.0
    %1361 = vmatpush2.msra.mxu0 0.0
    %1362 = vmatprep.subr.mxu0 0.0
    %1363 = vmatpush2.msra.mxu0 0.0
    %1364 = vmatprep.subr.mxu0 0.0
    %1365 = vmatpush2.msra.mxu0 0.0
    %1366 = vmatprep.subr.mxu0 0.0
    %1367 = vmatpush2.msra.mxu0 0.0
    %1368 = vmatprep.subr.mxu0 0.0
    %1369 = vmatpush2.msra.mxu0 0.0
    %1370 = vmatprep.subr.mxu0 0.0
    %1371 = vmatpush2.msra.mxu0 0.0
    %1372 = vmatprep.subr.mxu0 0.0
    %1373 = vmatpush2.msra.mxu0 0.0
    %1374 = vmatprep.subr.mxu0 0.0
    %1375 = vmatpush2.msra.mxu0 0.0
    %1376 = vmatprep.subr.mxu0 0.0
    %1377 = vmatpush2.msra.mxu0 0.0
    %1378 = vmatprep.subr.mxu0 0.0
    %1379 = vmatpush2.msra.mxu0 0.0
    %1380 = vmatprep.subr.mxu0 0.0
    %1381 = vmatpush2.msra.mxu0 0.0
    %1382 = vmatprep.subr.mxu0 0.0
    %1383 = vmatpush2.msra.mxu0 0.0
    %1384 = vmatprep.subr.mxu0 0.0
    %1385 = vmatpush2.msra.mxu0 0.0
    %1386 = vmatprep.mubr.f32.mxu0 0.0
    %1387 = vmatmul.mubr.f32.gmra.mxu0 %v867
    %v1388 = vpop.f32.mrf.mxu0
    %v1389 = vadd.f32 0.0, %v1388
    %v1390 = vpop.f32.mrf.mxu0
    %1391 = vmatprep.mubr.f32.mxu0 0.0
    %1392 = vmatmul.mubr.f32.gmra.mxu0 %v870
    %v1393 = vpop.f32.mrf.mxu0
    %v1394 = vadd.f32 0.0, %v1393
    %v1395 = vpop.f32.mrf.mxu0
    %1396 = vdwg.mxu0
    %1397 = vmatprep.subr.mxu0 0.0
    %1398 = vmatpush1.msra.mxu0 0.0
    %1399 = vmatprep.subr.mxu0 0.0
    %1400 = vmatpush1.msra.mxu0 0.0
    %1401 = vmatprep.subr.mxu0 0.0
    %1402 = vmatpush1.msra.mxu0 0.0
    %1403 = vmatprep.subr.mxu0 0.0
    %1404 = vmatpush1.msra.mxu0 0.0
    %1405 = vmatprep.subr.mxu0 0.0
    %1406 = vmatpush1.msra.mxu0 0.0
    %1407 = vmatprep.subr.mxu0 0.0
    %1408 = vmatpush1.msra.mxu0 0.0
    %1409 = vmatprep.subr.mxu0 0.0
    %1410 = vmatpush1.msra.mxu0 0.0
    %1411 = vmatprep.subr.mxu0 0.0
    %1412 = vmatpush1.msra.mxu0 0.0
    %1413 = vmatprep.subr.mxu0 0.0
    %1414 = vmatpush1.msra.mxu0 0.0
    %1415 = vmatprep.subr.mxu0 0.0
    %1416 = vmatpush1.msra.mxu0 0.0
    %1417 = vmatprep.subr.mxu0 0.0
    %1418 = vmatpush1.msra.mxu0 0.0
    %1419 = vmatprep.subr.mxu0 0.0
    %1420 = vmatpush1.msra.mxu0 0.0
    %1421 = vmatprep.subr.mxu0 0.0
    %1422 = vmatpush1.msra.mxu0 0.0
    %1423 = vmatprep.subr.mxu0 0.0
    %1424 = vmatpush1.msra.mxu0 0.0
    %1425 = vmatprep.subr.mxu0 0.0
    %1426 = vmatpush1.msra.mxu0 %v543
    %1427 = vmatprep.subr.mxu0 0.0
    %1428 = vmatpush1.msra.mxu0 %v538
    %1429 = vmatprep.subr.mxu0 0.0
    %1430 = vmatpush2.msra.mxu0 0.0
    %1431 = vmatprep.subr.mxu0 0.0
    %1432 = vmatpush2.msra.mxu0 0.0
    %1433 = vmatprep.subr.mxu0 0.0
    %1434 = vmatpush2.msra.mxu0 0.0
    %1435 = vmatprep.subr.mxu0 0.0
    %1436 = vmatpush2.msra.mxu0 0.0
    %1437 = vmatprep.subr.mxu0 0.0
    %1438 = vmatpush2.msra.mxu0 0.0
    %1439 = vmatprep.subr.mxu0 0.0
    %1440 = vmatpush2.msra.mxu0 0.0
    %1441 = vmatprep.subr.mxu0 0.0
    %1442 = vmatpush2.msra.mxu0 0.0
    %1443 = vmatprep.subr.mxu0 0.0
    %1444 = vmatpush2.msra.mxu0 0.0
    %1445 = vmatprep.subr.mxu0 0.0
    %1446 = vmatpush2.msra.mxu0 0.0
    %1447 = vmatprep.subr.mxu0 0.0
    %1448 = vmatpush2.msra.mxu0 0.0
    %1449 = vmatprep.subr.mxu0 0.0
    %1450 = vmatpush2.msra.mxu0 0.0
    %1451 = vmatprep.subr.mxu0 0.0
    %1452 = vmatpush2.msra.mxu0 0.0
    %1453 = vmatprep.subr.mxu0 0.0
    %1454 = vmatpush2.msra.mxu0 0.0
    %1455 = vmatprep.subr.mxu0 0.0
    %1456 = vmatpush2.msra.mxu0 0.0
    %1457 = vmatprep.subr.mxu0 0.0
    %1458 = vmatpush2.msra.mxu0 0.0
    %1459 = vmatprep.subr.mxu0 0.0
    %1460 = vmatpush2.msra.mxu0 0.0
    %1461 = vmatprep.mubr.f32.mxu0 0.0
    %1462 = vmatmul.mubr.f32.gmra.mxu0 %v867
    %v1463 = vpop.f32.mrf.mxu0
    %v1464 = vadd.f32 0.0, %v1463
    %v1465 = vpop.f32.mrf.mxu0
    %1466 = vmatprep.mubr.f32.mxu0 0.0
    %1467 = vmatmul.mubr.f32.gmra.mxu0 %v870
    %v1468 = vpop.f32.mrf.mxu0
    %v1469 = vadd.f32 0.0, %v1468
    %v1470 = vpop.f32.mrf.mxu0
    %1471 = vdwg.mxu0
    %1472 = vmatprep.subr.mxu0 0.0
    %1473 = vmatpush1.msra.mxu0 0.0
    %1474 = vmatprep.subr.mxu0 0.0
    %1475 = vmatpush1.msra.mxu0 0.0
    %1476 = vmatprep.subr.mxu0 0.0
    %1477 = vmatpush1.msra.mxu0 0.0
    %1478 = vmatprep.subr.mxu0 0.0
    %1479 = vmatpush1.msra.mxu0 0.0
    %1480 = vmatprep.subr.mxu0 0.0
    %1481 = vmatpush1.msra.mxu0 0.0
    %1482 = vmatprep.subr.mxu0 0.0
    %1483 = vmatpush1.msra.mxu0 0.0
    %1484 = vmatprep.subr.mxu0 0.0
    %1485 = vmatpush1.msra.mxu0 0.0
    %1486 = vmatprep.subr.mxu0 0.0
    %1487 = vmatpush1.msra.mxu0 0.0
    %1488 = vmatprep.subr.mxu0 0.0
    %1489 = vmatpush1.msra.mxu0 0.0
    %1490 = vmatprep.subr.mxu0 0.0
    %1491 = vmatpush1.msra.mxu0 0.0
    %1492 = vmatprep.subr.mxu0 0.0
    %1493 = vmatpush1.msra.mxu0 0.0
    %1494 = vmatprep.subr.mxu0 0.0
    %1495 = vmatpush1.msra.mxu0 0.0
    %1496 = vmatprep.subr.mxu0 0.0
    %1497 = vmatpush1.msra.mxu0 0.0
    %1498 = vmatprep.subr.mxu0 0.0
    %1499 = vmatpush1.msra.mxu0 0.0
    %1500 = vmatprep.subr.mxu0 0.0
    %1501 = vmatpush1.msra.mxu0 %v553
    %1502 = vmatprep.subr.mxu0 0.0
    %1503 = vmatpush1.msra.mxu0 %v548
    %1504 = vmatprep.subr.mxu0 0.0
    %1505 = vmatpush2.msra.mxu0 0.0
    %1506 = vmatprep.subr.mxu0 0.0
    %1507 = vmatpush2.msra.mxu0 0.0
    %1508 = vmatprep.subr.mxu0 0.0
    %1509 = vmatpush2.msra.mxu0 0.0
    %1510 = vmatprep.subr.mxu0 0.0
    %1511 = vmatpush2.msra.mxu0 0.0
    %1512 = vmatprep.subr.mxu0 0.0
    %1513 = vmatpush2.msra.mxu0 0.0
    %1514 = vmatprep.subr.mxu0 0.0
    %1515 = vmatpush2.msra.mxu0 0.0
    %1516 = vmatprep.subr.mxu0 0.0
    %1517 = vmatpush2.msra.mxu0 0.0
    %1518 = vmatprep.subr.mxu0 0.0
    %1519 = vmatpush2.msra.mxu0 0.0
    %1520 = vmatprep.subr.mxu0 0.0
    %1521 = vmatpush2.msra.mxu0 0.0
    %1522 = vmatprep.subr.mxu0 0.0
    %1523 = vmatpush2.msra.mxu0 0.0
    %1524 = vmatprep.subr.mxu0 0.0
    %1525 = vmatpush2.msra.mxu0 0.0
    %1526 = vmatprep.subr.mxu0 0.0
    %1527 = vmatpush2.msra.mxu0 0.0
    %1528 = vmatprep.subr.mxu0 0.0
    %1529 = vmatpush2.msra.mxu0 0.0
    %1530 = vmatprep.subr.mxu0 0.0
    %1531 = vmatpush2.msra.mxu0 0.0
    %1532 = vmatprep.subr.mxu0 0.0
    %1533 = vmatpush2.msra.mxu0 0.0
    %1534 = vmatprep.subr.mxu0 0.0
    %1535 = vmatpush2.msra.mxu0 0.0
    %1536 = vmatprep.mubr.f32.mxu0 0.0
    %1537 = vmatmul.mubr.f32.gmra.mxu0 %v867
    %v1538 = vpop.f32.mrf.mxu0
    %v1539 = vadd.f32 0.0, %v1538
    %v1540 = vpop.f32.mrf.mxu0
    %1541 = vmatprep.mubr.f32.mxu0 0.0
    %1542 = vmatmul.mubr.f32.gmra.mxu0 %v870
    %v1543 = vpop.f32.mrf.mxu0
    %v1544 = vadd.f32 0.0, %v1543
    %v1545 = vpop.f32.mrf.mxu0
    %1546 = vdwg.mxu0
    %1547 = vmatprep.subr.mxu0 0.0
    %1548 = vmatpush1.msra.mxu0 0.0
    %1549 = vmatprep.subr.mxu0 0.0
    %1550 = vmatpush1.msra.mxu0 0.0
    %1551 = vmatprep.subr.mxu0 0.0
    %1552 = vmatpush1.msra.mxu0 0.0
    %1553 = vmatprep.subr.mxu0 0.0
    %1554 = vmatpush1.msra.mxu0 0.0
    %1555 = vmatprep.subr.mxu0 0.0
    %1556 = vmatpush1.msra.mxu0 0.0
    %1557 = vmatprep.subr.mxu0 0.0
    %1558 = vmatpush1.msra.mxu0 0.0
    %1559 = vmatprep.subr.mxu0 0.0
    %1560 = vmatpush1.msra.mxu0 0.0
    %1561 = vmatprep.subr.mxu0 0.0
    %1562 = vmatpush1.msra.mxu0 0.0
    %1563 = vmatprep.subr.mxu0 0.0
    %1564 = vmatpush1.msra.mxu0 0.0
    %1565 = vmatprep.subr.mxu0 0.0
    %1566 = vmatpush1.msra.mxu0 0.0
    %1567 = vmatprep.subr.mxu0 0.0
    %1568 = vmatpush1.msra.mxu0 0.0
    %1569 = vmatprep.subr.mxu0 0.0
    %1570 = vmatpush1.msra.mxu0 0.0
    %1571 = vmatprep.subr.mxu0 0.0
    %1572 = vmatpush1.msra.mxu0 0.0
    %1573 = vmatprep.subr.mxu0 0.0
    %1574 = vmatpush1.msra.mxu0 0.0
    %1575 = vmatprep.subr.mxu0 0.0
    %1576 = vmatpush1.msra.mxu0 %v563
    %1577 = vmatprep.subr.mxu0 0.0
    %1578 = vmatpush1.msra.mxu0 %v558
    %1579 = vmatprep.subr.mxu0 0.0
    %1580 = vmatpush2.msra.mxu0 0.0
    %1581 = vmatprep.subr.mxu0 0.0
    %1582 = vmatpush2.msra.mxu0 0.0
    %1583 = vmatprep.subr.mxu0 0.0
    %1584 = vmatpush2.msra.mxu0 0.0
    %1585 = vmatprep.subr.mxu0 0.0
    %1586 = vmatpush2.msra.mxu0 0.0
    %1587 = vmatprep.subr.mxu0 0.0
    %1588 = vmatpush2.msra.mxu0 0.0
    %1589 = vmatprep.subr.mxu0 0.0
    %1590 = vmatpush2.msra.mxu0 0.0
    %1591 = vmatprep.subr.mxu0 0.0
    %1592 = vmatpush2.msra.mxu0 0.0
    %1593 = vmatprep.subr.mxu0 0.0
    %1594 = vmatpush2.msra.mxu0 0.0
    %1595 = vmatprep.subr.mxu0 0.0
    %1596 = vmatpush2.msra.mxu0 0.0
    %1597 = vmatprep.subr.mxu0 0.0
    %1598 = vmatpush2.msra.mxu0 0.0
    %1599 = vmatprep.subr.mxu0 0.0
    %1600 = vmatpush2.msra.mxu0 0.0
    %1601 = vmatprep.subr.mxu0 0.0
    %1602 = vmatpush2.msra.mxu0 0.0
    %1603 = vmatprep.subr.mxu0 0.0
    %1604 = vmatpush2.msra.mxu0 0.0
    %1605 = vmatprep.subr.mxu0 0.0
    %1606 = vmatpush2.msra.mxu0 0.0
    %1607 = vmatprep.subr.mxu0 0.0
    %1608 = vmatpush2.msra.mxu0 0.0
    %1609 = vmatprep.subr.mxu0 0.0
    %1610 = vmatpush2.msra.mxu0 0.0
    %1611 = vmatprep.mubr.f32.mxu0 0.0
    %1612 = vmatmul.mubr.f32.gmra.mxu0 %v867
    %v1613 = vpop.f32.mrf.mxu0
    %v1614 = vadd.f32 0.0, %v1613
    %v1615 = vpop.f32.mrf.mxu0
    %1616 = vmatprep.mubr.f32.mxu0 0.0
    %1617 = vmatmul.mubr.f32.gmra.mxu0 %v870
    %v1618 = vpop.f32.mrf.mxu0
    %v1619 = vadd.f32 0.0, %v1618
    %v1620 = vpop.f32.mrf.mxu0
    %1621 = vdwg.mxu0
    %1622 = vmatprep.subr.mxu0 0.0
    %1623 = vmatpush1.msra.mxu0 0.0
    %1624 = vmatprep.subr.mxu0 0.0
    %1625 = vmatpush1.msra.mxu0 0.0
    %1626 = vmatprep.subr.mxu0 0.0
    %1627 = vmatpush1.msra.mxu0 0.0
    %1628 = vmatprep.subr.mxu0 0.0
    %1629 = vmatpush1.msra.mxu0 0.0
    %1630 = vmatprep.subr.mxu0 0.0
    %1631 = vmatpush1.msra.mxu0 0.0
    %1632 = vmatprep.subr.mxu0 0.0
    %1633 = vmatpush1.msra.mxu0 0.0
    %1634 = vmatprep.subr.mxu0 0.0
    %1635 = vmatpush1.msra.mxu0 0.0
    %1636 = vmatprep.subr.mxu0 0.0
    %1637 = vmatpush1.msra.mxu0 0.0
    %1638 = vmatprep.subr.mxu0 0.0
    %1639 = vmatpush1.msra.mxu0 0.0
    %1640 = vmatprep.subr.mxu0 0.0
    %1641 = vmatpush1.msra.mxu0 0.0
    %1642 = vmatprep.subr.mxu0 0.0
    %1643 = vmatpush1.msra.mxu0 0.0
    %1644 = vmatprep.subr.mxu0 0.0
    %1645 = vmatpush1.msra.mxu0 0.0
    %1646 = vmatprep.subr.mxu0 0.0
    %1647 = vmatpush1.msra.mxu0 0.0
    %1648 = vmatprep.subr.mxu0 0.0
    %1649 = vmatpush1.msra.mxu0 0.0
    %1650 = vmatprep.subr.mxu0 0.0
    %1651 = vmatpush1.msra.mxu0 %v573
    %1652 = vmatprep.subr.mxu0 0.0
    %1653 = vmatpush1.msra.mxu0 %v568
    %1654 = vmatprep.subr.mxu0 0.0
    %1655 = vmatpush2.msra.mxu0 0.0
    %1656 = vmatprep.subr.mxu0 0.0
    %1657 = vmatpush2.msra.mxu0 0.0
    %1658 = vmatprep.subr.mxu0 0.0
    %1659 = vmatpush2.msra.mxu0 0.0
    %1660 = vmatprep.subr.mxu0 0.0
    %1661 = vmatpush2.msra.mxu0 0.0
    %1662 = vmatprep.subr.mxu0 0.0
    %1663 = vmatpush2.msra.mxu0 0.0
    %1664 = vmatprep.subr.mxu0 0.0
    %1665 = vmatpush2.msra.mxu0 0.0
    %1666 = vmatprep.subr.mxu0 0.0
    %1667 = vmatpush2.msra.mxu0 0.0
    %1668 = vmatprep.subr.mxu0 0.0
    %1669 = vmatpush2.msra.mxu0 0.0
    %1670 = vmatprep.subr.mxu0 0.0
    %1671 = vmatpush2.msra.mxu0 0.0
    %1672 = vmatprep.subr.mxu0 0.0
    %1673 = vmatpush2.msra.mxu0 0.0
    %1674 = vmatprep.subr.mxu0 0.0
    %1675 = vmatpush2.msra.mxu0 0.0
    %1676 = vmatprep.subr.mxu0 0.0
    %1677 = vmatpush2.msra.mxu0 0.0
    %1678 = vmatprep.subr.mxu0 0.0
    %1679 = vmatpush2.msra.mxu0 0.0
    %1680 = vmatprep.subr.mxu0 0.0
    %1681 = vmatpush2.msra.mxu0 0.0
    %1682 = vmatprep.subr.mxu0 0.0
    %1683 = vmatpush2.msra.mxu0 0.0
    %1684 = vmatprep.subr.mxu0 0.0
    %1685 = vmatpush2.msra.mxu0 0.0
    %1686 = vmatprep.mubr.f32.mxu0 0.0
    %1687 = vmatmul.mubr.f32.gmra.mxu0 %v867
    %v1688 = vpop.f32.mrf.mxu0
    %v1689 = vadd.f32 0.0, %v1688
    %v1690 = vpop.f32.mrf.mxu0
    %1691 = vmatprep.mubr.f32.mxu0 0.0
    %1692 = vmatmul.mubr.f32.gmra.mxu0 %v870
    %v1693 = vpop.f32.mrf.mxu0
    %v1694 = vadd.f32 0.0, %v1693
    %v1695 = vpop.f32.mrf.mxu0
    %1696 = vdwg.mxu0
    %1697 = vmatprep.subr.mxu0 0.0
    %1698 = vmatpush1.msra.mxu0 0.0
    %1699 = vmatprep.subr.mxu0 0.0
    %1700 = vmatpush1.msra.mxu0 0.0
    %1701 = vmatprep.subr.mxu0 0.0
    %1702 = vmatpush1.msra.mxu0 0.0
    %1703 = vmatprep.subr.mxu0 0.0
    %1704 = vmatpush1.msra.mxu0 0.0
    %1705 = vmatprep.subr.mxu0 0.0
    %1706 = vmatpush1.msra.mxu0 0.0
    %1707 = vmatprep.subr.mxu0 0.0
    %1708 = vmatpush1.msra.mxu0 0.0
    %1709 = vmatprep.subr.mxu0 0.0
    %1710 = vmatpush1.msra.mxu0 0.0
    %1711 = vmatprep.subr.mxu0 0.0
    %1712 = vmatpush1.msra.mxu0 0.0
    %1713 = vmatprep.subr.mxu0 0.0
    %1714 = vmatpush1.msra.mxu0 0.0
    %1715 = vmatprep.subr.mxu0 0.0
    %1716 = vmatpush1.msra.mxu0 0.0
    %1717 = vmatprep.subr.mxu0 0.0
    %1718 = vmatpush1.msra.mxu0 0.0
    %1719 = vmatprep.subr.mxu0 0.0
    %1720 = vmatpush1.msra.mxu0 0.0
    %1721 = vmatprep.subr.mxu0 0.0
    %1722 = vmatpush1.msra.mxu0 0.0
    %1723 = vmatprep.subr.mxu0 0.0
    %1724 = vmatpush1.msra.mxu0 0.0
    %1725 = vmatprep.subr.mxu0 0.0
    %1726 = vmatpush1.msra.mxu0 %v583
    %1727 = vmatprep.subr.mxu0 0.0
    %1728 = vmatpush1.msra.mxu0 %v578
    %1729 = vmatprep.subr.mxu0 0.0
    %1730 = vmatpush2.msra.mxu0 0.0
    %1731 = vmatprep.subr.mxu0 0.0
    %1732 = vmatpush2.msra.mxu0 0.0
    %1733 = vmatprep.subr.mxu0 0.0
    %1734 = vmatpush2.msra.mxu0 0.0
    %1735 = vmatprep.subr.mxu0 0.0
    %1736 = vmatpush2.msra.mxu0 0.0
    %1737 = vmatprep.subr.mxu0 0.0
    %1738 = vmatpush2.msra.mxu0 0.0
    %1739 = vmatprep.subr.mxu0 0.0
    %1740 = vmatpush2.msra.mxu0 0.0
    %1741 = vmatprep.subr.mxu0 0.0
    %1742 = vmatpush2.msra.mxu0 0.0
    %1743 = vmatprep.subr.mxu0 0.0
    %1744 = vmatpush2.msra.mxu0 0.0
    %1745 = vmatprep.subr.mxu0 0.0
    %1746 = vmatpush2.msra.mxu0 0.0
    %1747 = vmatprep.subr.mxu0 0.0
    %1748 = vmatpush2.msra.mxu0 0.0
    %1749 = vmatprep.subr.mxu0 0.0
    %1750 = vmatpush2.msra.mxu0 0.0
    %1751 = vmatprep.subr.mxu0 0.0
    %1752 = vmatpush2.msra.mxu0 0.0
    %1753 = vmatprep.subr.mxu0 0.0
    %1754 = vmatpush2.msra.mxu0 0.0
    %1755 = vmatprep.subr.mxu0 0.0
    %1756 = vmatpush2.msra.mxu0 0.0
    %1757 = vmatprep.subr.mxu0 0.0
    %1758 = vmatpush2.msra.mxu0 0.0
    %1759 = vmatprep.subr.mxu0 0.0
    %1760 = vmatpush2.msra.mxu0 0.0
    %1761 = vmatprep.mubr.f32.mxu0 0.0
    %1762 = vmatmul.mubr.f32.gmra.mxu0 %v867
    %v1763 = vpop.f32.mrf.mxu0
    %v1764 = vadd.f32 0.0, %v1763
    %v1765 = vpop.f32.mrf.mxu0
    %1766 = vmatprep.mubr.f32.mxu0 0.0
    %1767 = vmatmul.mubr.f32.gmra.mxu0 %v870
    %v1768 = vpop.f32.mrf.mxu0
    %v1769 = vadd.f32 0.0, %v1768
    %v1770 = vpop.f32.mrf.mxu0
    %1771 = vdwg.mxu0
    %1772 = vmatprep.subr.mxu0 0.0
    %1773 = vmatpush1.msra.mxu0 0.0
    %1774 = vmatprep.subr.mxu0 0.0
    %1775 = vmatpush1.msra.mxu0 0.0
    %1776 = vmatprep.subr.mxu0 0.0
    %1777 = vmatpush1.msra.mxu0 0.0
    %1778 = vmatprep.subr.mxu0 0.0
    %1779 = vmatpush1.msra.mxu0 0.0
    %1780 = vmatprep.subr.mxu0 0.0
    %1781 = vmatpush1.msra.mxu0 0.0
    %1782 = vmatprep.subr.mxu0 0.0
    %1783 = vmatpush1.msra.mxu0 0.0
    %1784 = vmatprep.subr.mxu0 0.0
    %1785 = vmatpush1.msra.mxu0 0.0
    %1786 = vmatprep.subr.mxu0 0.0
    %1787 = vmatpush1.msra.mxu0 0.0
    %1788 = vmatprep.subr.mxu0 0.0
    %1789 = vmatpush1.msra.mxu0 0.0
    %1790 = vmatprep.subr.mxu0 0.0
    %1791 = vmatpush1.msra.mxu0 0.0
    %1792 = vmatprep.subr.mxu0 0.0
    %1793 = vmatpush1.msra.mxu0 0.0
    %1794 = vmatprep.subr.mxu0 0.0
    %1795 = vmatpush1.msra.mxu0 0.0
    %1796 = vmatprep.subr.mxu0 0.0
    %1797 = vmatpush1.msra.mxu0 0.0
    %1798 = vmatprep.subr.mxu0 0.0
    %1799 = vmatpush1.msra.mxu0 0.0
    %1800 = vmatprep.subr.mxu0 0.0
    %1801 = vmatpush1.msra.mxu0 %v593
    %1802 = vmatprep.subr.mxu0 0.0
    %1803 = vmatpush1.msra.mxu0 %v588
    %1804 = vmatprep.subr.mxu0 0.0
    %1805 = vmatpush2.msra.mxu0 0.0
    %1806 = vmatprep.subr.mxu0 0.0
    %1807 = vmatpush2.msra.mxu0 0.0
    %1808 = vmatprep.subr.mxu0 0.0
    %1809 = vmatpush2.msra.mxu0 0.0
    %1810 = vmatprep.subr.mxu0 0.0
    %1811 = vmatpush2.msra.mxu0 0.0
    %1812 = vmatprep.subr.mxu0 0.0
    %1813 = vmatpush2.msra.mxu0 0.0
    %1814 = vmatprep.subr.mxu0 0.0
    %1815 = vmatpush2.msra.mxu0 0.0
    %1816 = vmatprep.subr.mxu0 0.0
    %1817 = vmatpush2.msra.mxu0 0.0
    %1818 = vmatprep.subr.mxu0 0.0
    %1819 = vmatpush2.msra.mxu0 0.0
    %1820 = vmatprep.subr.mxu0 0.0
    %1821 = vmatpush2.msra.mxu0 0.0
    %1822 = vmatprep.subr.mxu0 0.0
    %1823 = vmatpush2.msra.mxu0 0.0
    %1824 = vmatprep.subr.mxu0 0.0
    %1825 = vmatpush2.msra.mxu0 0.0
    %1826 = vmatprep.subr.mxu0 0.0
    %1827 = vmatpush2.msra.mxu0 0.0
    %1828 = vmatprep.subr.mxu0 0.0
    %1829 = vmatpush2.msra.mxu0 0.0
    %1830 = vmatprep.subr.mxu0 0.0
    %1831 = vmatpush2.msra.mxu0 0.0
    %1832 = vmatprep.subr.mxu0 0.0
    %1833 = vmatpush2.msra.mxu0 0.0
    %1834 = vmatprep.subr.mxu0 0.0
    %1835 = vmatpush2.msra.mxu0 0.0
    %1836 = vmatprep.mubr.f32.mxu0 0.0
    %1837 = vmatmul.mubr.f32.gmra.mxu0 %v867
    %v1838 = vpop.f32.mrf.mxu0
    %v1839 = vadd.f32 0.0, %v1838
    %v1840 = vpop.f32.mrf.mxu0
    %1841 = vmatprep.mubr.f32.mxu0 0.0
    %1842 = vmatmul.mubr.f32.gmra.mxu0 %v870
    %v1843 = vpop.f32.mrf.mxu0
    %v1844 = vadd.f32 0.0, %v1843
    %v1845 = vpop.f32.mrf.mxu0
    %1846 = vdwg.mxu0
    %1847 = vmatprep.subr.mxu0 0.0
    %1848 = vmatpush1.msra.mxu0 0.0
    %1849 = vmatprep.subr.mxu0 0.0
    %1850 = vmatpush1.msra.mxu0 0.0
    %1851 = vmatprep.subr.mxu0 0.0
    %1852 = vmatpush1.msra.mxu0 0.0
    %1853 = vmatprep.subr.mxu0 0.0
    %1854 = vmatpush1.msra.mxu0 0.0
    %1855 = vmatprep.subr.mxu0 0.0
    %1856 = vmatpush1.msra.mxu0 0.0
    %1857 = vmatprep.subr.mxu0 0.0
    %1858 = vmatpush1.msra.mxu0 0.0
    %1859 = vmatprep.subr.mxu0 0.0
    %1860 = vmatpush1.msra.mxu0 0.0
    %1861 = vmatprep.subr.mxu0 0.0
    %1862 = vmatpush1.msra.mxu0 0.0
    %1863 = vmatprep.subr.mxu0 0.0
    %1864 = vmatpush1.msra.mxu0 0.0
    %1865 = vmatprep.subr.mxu0 0.0
    %1866 = vmatpush1.msra.mxu0 0.0
    %1867 = vmatprep.subr.mxu0 0.0
    %1868 = vmatpush1.msra.mxu0 0.0
    %1869 = vmatprep.subr.mxu0 0.0
    %1870 = vmatpush1.msra.mxu0 0.0
    %1871 = vmatprep.subr.mxu0 0.0
    %1872 = vmatpush1.msra.mxu0 0.0
    %1873 = vmatprep.subr.mxu0 0.0
    %1874 = vmatpush1.msra.mxu0 0.0
    %1875 = vmatprep.subr.mxu0 0.0
    %1876 = vmatpush1.msra.mxu0 %v603
    %1877 = vmatprep.subr.mxu0 0.0
    %1878 = vmatpush1.msra.mxu0 %v598
    %1879 = vmatprep.subr.mxu0 0.0
    %1880 = vmatpush2.msra.mxu0 0.0
    %1881 = vmatprep.subr.mxu0 0.0
    %1882 = vmatpush2.msra.mxu0 0.0
    %1883 = vmatprep.subr.mxu0 0.0
    %1884 = vmatpush2.msra.mxu0 0.0
    %1885 = vmatprep.subr.mxu0 0.0
    %1886 = vmatpush2.msra.mxu0 0.0
    %1887 = vmatprep.subr.mxu0 0.0
    %1888 = vmatpush2.msra.mxu0 0.0
    %1889 = vmatprep.subr.mxu0 0.0
    %1890 = vmatpush2.msra.mxu0 0.0
    %1891 = vmatprep.subr.mxu0 0.0
    %1892 = vmatpush2.msra.mxu0 0.0
    %1893 = vmatprep.subr.mxu0 0.0
    %1894 = vmatpush2.msra.mxu0 0.0
    %1895 = vmatprep.subr.mxu0 0.0
    %1896 = vmatpush2.msra.mxu0 0.0
    %1897 = vmatprep.subr.mxu0 0.0
    %1898 = vmatpush2.msra.mxu0 0.0
    %1899 = vmatprep.subr.mxu0 0.0
    %1900 = vmatpush2.msra.mxu0 0.0
    %1901 = vmatprep.subr.mxu0 0.0
    %1902 = vmatpush2.msra.mxu0 0.0
    %1903 = vmatprep.subr.mxu0 0.0
    %1904 = vmatpush2.msra.mxu0 0.0
    %1905 = vmatprep.subr.mxu0 0.0
    %1906 = vmatpush2.msra.mxu0 0.0
    %1907 = vmatprep.subr.mxu0 0.0
    %1908 = vmatpush2.msra.mxu0 0.0
    %1909 = vmatprep.subr.mxu0 0.0
    %1910 = vmatpush2.msra.mxu0 0.0
    %1911 = vmatprep.mubr.f32.mxu0 0.0
    %1912 = vmatmul.mubr.f32.gmra.mxu0 %v867
    %v1913 = vpop.f32.mrf.mxu0
    %v1914 = vadd.f32 0.0, %v1913
    %v1915 = vpop.f32.mrf.mxu0
    %1916 = vmatprep.mubr.f32.mxu0 0.0
    %1917 = vmatmul.mubr.f32.gmra.mxu0 %v870
    %v1918 = vpop.f32.mrf.mxu0
    %v1919 = vadd.f32 0.0, %v1918
    %v1920 = vpop.f32.mrf.mxu0
    %1921 = vdwg.mxu0
    %1922 = vmatprep.subr.mxu0 0.0
    %1923 = vmatpush1.msra.mxu0 0.0
    %1924 = vmatprep.subr.mxu0 0.0
    %1925 = vmatpush1.msra.mxu0 0.0
    %1926 = vmatprep.subr.mxu0 0.0
    %1927 = vmatpush1.msra.mxu0 0.0
    %1928 = vmatprep.subr.mxu0 0.0
    %1929 = vmatpush1.msra.mxu0 0.0
    %1930 = vmatprep.subr.mxu0 0.0
    %1931 = vmatpush1.msra.mxu0 0.0
    %1932 = vmatprep.subr.mxu0 0.0
    %1933 = vmatpush1.msra.mxu0 0.0
    %1934 = vmatprep.subr.mxu0 0.0
    %1935 = vmatpush1.msra.mxu0 0.0
    %1936 = vmatprep.subr.mxu0 0.0
    %1937 = vmatpush1.msra.mxu0 0.0
    %1938 = vmatprep.subr.mxu0 0.0
    %1939 = vmatpush1.msra.mxu0 0.0
    %1940 = vmatprep.subr.mxu0 0.0
    %1941 = vmatpush1.msra.mxu0 0.0
    %1942 = vmatprep.subr.mxu0 0.0
    %1943 = vmatpush1.msra.mxu0 0.0
    %1944 = vmatprep.subr.mxu0 0.0
    %1945 = vmatpush1.msra.mxu0 0.0
    %1946 = vmatprep.subr.mxu0 0.0
    %1947 = vmatpush1.msra.mxu0 0.0
    %1948 = vmatprep.subr.mxu0 0.0
    %1949 = vmatpush1.msra.mxu0 0.0
    %1950 = vmatprep.subr.mxu0 0.0
    %1951 = vmatpush1.msra.mxu0 %v613
    %1952 = vmatprep.subr.mxu0 0.0
    %1953 = vmatpush1.msra.mxu0 %v608
    %1954 = vmatprep.subr.mxu0 0.0
    %1955 = vmatpush2.msra.mxu0 0.0
    %1956 = vmatprep.subr.mxu0 0.0
    %1957 = vmatpush2.msra.mxu0 0.0
    %1958 = vmatprep.subr.mxu0 0.0
    %1959 = vmatpush2.msra.mxu0 0.0
    %1960 = vmatprep.subr.mxu0 0.0
    %1961 = vmatpush2.msra.mxu0 0.0
    %1962 = vmatprep.subr.mxu0 0.0
    %1963 = vmatpush2.msra.mxu0 0.0
    %1964 = vmatprep.subr.mxu0 0.0
    %1965 = vmatpush2.msra.mxu0 0.0
    %1966 = vmatprep.subr.mxu0 0.0
    %1967 = vmatpush2.msra.mxu0 0.0
    %1968 = vmatprep.subr.mxu0 0.0
    %1969 = vmatpush2.msra.mxu0 0.0
    %1970 = vmatprep.subr.mxu0 0.0
    %1971 = vmatpush2.msra.mxu0 0.0
    %1972 = vmatprep.subr.mxu0 0.0
    %1973 = vmatpush2.msra.mxu0 0.0
    %1974 = vmatprep.subr.mxu0 0.0
    %1975 = vmatpush2.msra.mxu0 0.0
    %1976 = vmatprep.subr.mxu0 0.0
    %1977 = vmatpush2.msra.mxu0 0.0
    %1978 = vmatprep.subr.mxu0 0.0
    %1979 = vmatpush2.msra.mxu0 0.0
    %1980 = vmatprep.subr.mxu0 0.0
    %1981 = vmatpush2.msra.mxu0 0.0
    %1982 = vmatprep.subr.mxu0 0.0
    %1983 = vmatpush2.msra.mxu0 0.0
    %1984 = vmatprep.subr.mxu0 0.0
    %1985 = vmatpush2.msra.mxu0 0.0
    %1986 = vmatprep.mubr.f32.mxu0 0.0
    %1987 = vmatmul.mubr.f32.gmra.mxu0 %v867
    %v1988 = vpop.f32.mrf.mxu0
    %v1989 = vadd.f32 0.0, %v1988
    %v1990 = vpop.f32.mrf.mxu0
    %1991 = vmatprep.mubr.f32.mxu0 0.0
    %1992 = vmatmul.mubr.f32.gmra.mxu0 %v870
    %v1993 = vpop.f32.mrf.mxu0
    %v1994 = vadd.f32 0.0, %v1993
    %v1995 = vpop.f32.mrf.mxu0
    %1996 = vdwg.mxu0
    %1997 = vmatprep.subr.mxu0 0.0
    %1998 = vmatpush1.msra.mxu0 0.0
    %1999 = vmatprep.subr.mxu0 0.0
    %2000 = vmatpush1.msra.mxu0 0.0
    %2001 = vmatprep.subr.mxu0 0.0
    %2002 = vmatpush1.msra.mxu0 0.0
    %2003 = vmatprep.subr.mxu0 0.0
    %2004 = vmatpush1.msra.mxu0 0.0
    %2005 = vmatprep.subr.mxu0 0.0
    %2006 = vmatpush1.msra.mxu0 0.0
    %2007 = vmatprep.subr.mxu0 0.0
    %2008 = vmatpush1.msra.mxu0 0.0
    %2009 = vmatprep.subr.mxu0 0.0
    %2010 = vmatpush1.msra.mxu0 0.0
    %2011 = vmatprep.subr.mxu0 0.0
    %2012 = vmatpush1.msra.mxu0 0.0
    %2013 = vmatprep.subr.mxu0 0.0
    %2014 = vmatpush1.msra.mxu0 0.0
    %2015 = vmatprep.subr.mxu0 0.0
    %2016 = vmatpush1.msra.mxu0 0.0
    %2017 = vmatprep.subr.mxu0 0.0
    %2018 = vmatpush1.msra.mxu0 0.0
    %2019 = vmatprep.subr.mxu0 0.0
    %2020 = vmatpush1.msra.mxu0 0.0
    %2021 = vmatprep.subr.mxu0 0.0
    %2022 = vmatpush1.msra.mxu0 0.0
    %2023 = vmatprep.subr.mxu0 0.0
    %2024 = vmatpush1.msra.mxu0 0.0
    %2025 = vmatprep.subr.mxu0 0.0
    %2026 = vmatpush1.msra.mxu0 %v623
    %2027 = vmatprep.subr.mxu0 0.0
    %2028 = vmatpush1.msra.mxu0 %v618
    %2029 = vmatprep.subr.mxu0 0.0
    %2030 = vmatpush2.msra.mxu0 0.0
    %2031 = vmatprep.subr.mxu0 0.0
    %2032 = vmatpush2.msra.mxu0 0.0
    %2033 = vmatprep.subr.mxu0 0.0
    %2034 = vmatpush2.msra.mxu0 0.0
    %2035 = vmatprep.subr.mxu0 0.0
    %2036 = vmatpush2.msra.mxu0 0.0
    %2037 = vmatprep.subr.mxu0 0.0
    %2038 = vmatpush2.msra.mxu0 0.0
    %2039 = vmatprep.subr.mxu0 0.0
    %2040 = vmatpush2.msra.mxu0 0.0
    %2041 = vmatprep.subr.mxu0 0.0
    %2042 = vmatpush2.msra.mxu0 0.0
    %2043 = vmatprep.subr.mxu0 0.0
    %2044 = vmatpush2.msra.mxu0 0.0
    %2045 = vmatprep.subr.mxu0 0.0
    %2046 = vmatpush2.msra.mxu0 0.0
    %2047 = vmatprep.subr.mxu0 0.0
    %2048 = vmatpush2.msra.mxu0 0.0
    %2049 = vmatprep.subr.mxu0 0.0
    %2050 = vmatpush2.msra.mxu0 0.0
    %2051 = vmatprep.subr.mxu0 0.0
    %2052 = vmatpush2.msra.mxu0 0.0
    %2053 = vmatprep.subr.mxu0 0.0
    %2054 = vmatpush2.msra.mxu0 0.0
    %2055 = vmatprep.subr.mxu0 0.0
    %2056 = vmatpush2.msra.mxu0 0.0
    %2057 = vmatprep.subr.mxu0 0.0
    %2058 = vmatpush2.msra.mxu0 0.0
    %2059 = vmatprep.subr.mxu0 0.0
    %2060 = vmatpush2.msra.mxu0 0.0
    %2061 = vmatprep.mubr.f32.mxu0 0.0
    %2062 = vmatmul.mubr.f32.gmra.mxu0 %v867
    %v2063 = vpop.f32.mrf.mxu0
    %v2064 = vadd.f32 0.0, %v2063
    %v2065 = vpop.f32.mrf.mxu0
    %2066 = vmatprep.mubr.f32.mxu0 0.0
    %2067 = vmatmul.mubr.f32.gmra.mxu0 %v870
    %v2068 = vpop.f32.mrf.mxu0
    %v2069 = vadd.f32 0.0, %v2068
    %v2070 = vpop.f32.mrf.mxu0
    %2071 = vdwg.mxu0
    %2072 = vmatprep.subr.mxu0 0.0
    %2073 = vmatpush1.msra.mxu0 0.0
    %2074 = vmatprep.subr.mxu0 0.0
    %2075 = vmatpush1.msra.mxu0 0.0
    %2076 = vmatprep.subr.mxu0 0.0
    %2077 = vmatpush1.msra.mxu0 0.0
    %2078 = vmatprep.subr.mxu0 0.0
    %2079 = vmatpush1.msra.mxu0 0.0
    %2080 = vmatprep.subr.mxu0 0.0
    %2081 = vmatpush1.msra.mxu0 0.0
    %2082 = vmatprep.subr.mxu0 0.0
    %2083 = vmatpush1.msra.mxu0 0.0
    %2084 = vmatprep.subr.mxu0 0.0
    %2085 = vmatpush1.msra.mxu0 0.0
    %2086 = vmatprep.subr.mxu0 0.0
    %2087 = vmatpush1.msra.mxu0 0.0
    %2088 = vmatprep.subr.mxu0 0.0
    %2089 = vmatpush1.msra.mxu0 0.0
    %2090 = vmatprep.subr.mxu0 0.0
    %2091 = vmatpush1.msra.mxu0 0.0
    %2092 = vmatprep.subr.mxu0 0.0
    %2093 = vmatpush1.msra.mxu0 0.0
    %2094 = vmatprep.subr.mxu0 0.0
    %2095 = vmatpush1.msra.mxu0 0.0
    %2096 = vmatprep.subr.mxu0 0.0
    %2097 = vmatpush1.msra.mxu0 0.0
    %2098 = vmatprep.subr.mxu0 0.0
    %2099 = vmatpush1.msra.mxu0 0.0
    %2100 = vmatprep.subr.mxu0 0.0
    %2101 = vmatpush1.msra.mxu0 %v633
    %2102 = vmatprep.subr.mxu0 0.0
    %2103 = vmatpush1.msra.mxu0 %v628
    %2104 = vmatprep.subr.mxu0 0.0
    %2105 = vmatpush2.msra.mxu0 0.0
    %2106 = vmatprep.subr.mxu0 0.0
    %2107 = vmatpush2.msra.mxu0 0.0
    %2108 = vmatprep.subr.mxu0 0.0
    %2109 = vmatpush2.msra.mxu0 0.0
    %2110 = vmatprep.subr.mxu0 0.0
    %2111 = vmatpush2.msra.mxu0 0.0
    %2112 = vmatprep.subr.mxu0 0.0
    %2113 = vmatpush2.msra.mxu0 0.0
    %2114 = vmatprep.subr.mxu0 0.0
    %2115 = vmatpush2.msra.mxu0 0.0
    %2116 = vmatprep.subr.mxu0 0.0
    %2117 = vmatpush2.msra.mxu0 0.0
    %2118 = vmatprep.subr.mxu0 0.0
    %2119 = vmatpush2.msra.mxu0 0.0
    %2120 = vmatprep.subr.mxu0 0.0
    %2121 = vmatpush2.msra.mxu0 0.0
    %2122 = vmatprep.subr.mxu0 0.0
    %2123 = vmatpush2.msra.mxu0 0.0
    %2124 = vmatprep.subr.mxu0 0.0
    %2125 = vmatpush2.msra.mxu0 0.0
    %2126 = vmatprep.subr.mxu0 0.0
    %2127 = vmatpush2.msra.mxu0 0.0
    %2128 = vmatprep.subr.mxu0 0.0
    %2129 = vmatpush2.msra.mxu0 0.0
    %2130 = vmatprep.subr.mxu0 0.0
    %2131 = vmatpush2.msra.mxu0 0.0
    %2132 = vmatprep.subr.mxu0 0.0
    %2133 = vmatpush2.msra.mxu0 0.0
    %2134 = vmatprep.subr.mxu0 0.0
    %2135 = vmatpush2.msra.mxu0 0.0
    %2136 = vmatprep.mubr.f32.mxu0 0.0
    %2137 = vmatmul.mubr.f32.gmra.mxu0 %v867
    %v2138 = vpop.f32.mrf.mxu0
    %v2139 = vadd.f32 0.0, %v2138
    %v2140 = vpop.f32.mrf.mxu0
    %2141 = vmatprep.mubr.f32.mxu0 0.0
    %2142 = vmatmul.mubr.f32.gmra.mxu0 %v870
    %v2143 = vpop.f32.mrf.mxu0
    %v2144 = vadd.f32 0.0, %v2143
    %v2145 = vpop.f32.mrf.mxu0
    %2146 = vdwg.mxu0
    %2147 = vmatprep.subr.mxu0 0.0
    %2148 = vmatpush1.msra.mxu0 0.0
    %2149 = vmatprep.subr.mxu0 0.0
    %2150 = vmatpush1.msra.mxu0 0.0
    %2151 = vmatprep.subr.mxu0 0.0
    %2152 = vmatpush1.msra.mxu0 0.0
    %2153 = vmatprep.subr.mxu0 0.0
    %2154 = vmatpush1.msra.mxu0 0.0
    %2155 = vmatprep.subr.mxu0 0.0
    %2156 = vmatpush1.msra.mxu0 0.0
    %2157 = vmatprep.subr.mxu0 0.0
    %2158 = vmatpush1.msra.mxu0 0.0
    %2159 = vmatprep.subr.mxu0 0.0
    %2160 = vmatpush1.msra.mxu0 0.0
    %2161 = vmatprep.subr.mxu0 0.0
    %2162 = vmatpush1.msra.mxu0 0.0
    %2163 = vmatprep.subr.mxu0 0.0
    %2164 = vmatpush1.msra.mxu0 0.0
    %2165 = vmatprep.subr.mxu0 0.0
    %2166 = vmatpush1.msra.mxu0 0.0
    %2167 = vmatprep.subr.mxu0 0.0
    %2168 = vmatpush1.msra.mxu0 0.0
    %2169 = vmatprep.subr.mxu0 0.0
    %2170 = vmatpush1.msra.mxu0 0.0
    %2171 = vmatprep.subr.mxu0 0.0
    %2172 = vmatpush1.msra.mxu0 0.0
    %2173 = vmatprep.subr.mxu0 0.0
    %2174 = vmatpush1.msra.mxu0 0.0
    %2175 = vmatprep.subr.mxu0 0.0
    %2176 = vmatpush1.msra.mxu0 %v643
    %2177 = vmatprep.subr.mxu0 0.0
    %2178 = vmatpush1.msra.mxu0 %v638
    %2179 = vmatprep.subr.mxu0 0.0
    %2180 = vmatpush2.msra.mxu0 0.0
    %2181 = vmatprep.subr.mxu0 0.0
    %2182 = vmatpush2.msra.mxu0 0.0
    %2183 = vmatprep.subr.mxu0 0.0
    %2184 = vmatpush2.msra.mxu0 0.0
    %2185 = vmatprep.subr.mxu0 0.0
    %2186 = vmatpush2.msra.mxu0 0.0
    %2187 = vmatprep.subr.mxu0 0.0
    %2188 = vmatpush2.msra.mxu0 0.0
    %2189 = vmatprep.subr.mxu0 0.0
    %2190 = vmatpush2.msra.mxu0 0.0
    %2191 = vmatprep.subr.mxu0 0.0
    %2192 = vmatpush2.msra.mxu0 0.0
    %2193 = vmatprep.subr.mxu0 0.0
    %2194 = vmatpush2.msra.mxu0 0.0
    %2195 = vmatprep.subr.mxu0 0.0
    %2196 = vmatpush2.msra.mxu0 0.0
    %2197 = vmatprep.subr.mxu0 0.0
    %2198 = vmatpush2.msra.mxu0 0.0
    %2199 = vmatprep.subr.mxu0 0.0
    %2200 = vmatpush2.msra.mxu0 0.0
    %2201 = vmatprep.subr.mxu0 0.0
    %2202 = vmatpush2.msra.mxu0 0.0
    %2203 = vmatprep.subr.mxu0 0.0
    %2204 = vmatpush2.msra.mxu0 0.0
    %2205 = vmatprep.subr.mxu0 0.0
    %2206 = vmatpush2.msra.mxu0 0.0
    %2207 = vmatprep.subr.mxu0 0.0
    %2208 = vmatpush2.msra.mxu0 0.0
    %2209 = vmatprep.subr.mxu0 0.0
    %2210 = vmatpush2.msra.mxu0 0.0
    %2211 = vmatprep.mubr.f32.mxu0 0.0
    %2212 = vmatmul.mubr.f32.gmra.mxu0 %v867
    %v2213 = vpop.f32.mrf.mxu0
    %v2214 = vadd.f32 0.0, %v2213
    %v2215 = vpop.f32.mrf.mxu0
    %2216 = vmatprep.mubr.f32.mxu0 0.0
    %2217 = vmatmul.mubr.f32.gmra.mxu0 %v870
    %v2218 = vpop.f32.mrf.mxu0
    %v2219 = vadd.f32 0.0, %v2218
    %v2220 = vpop.f32.mrf.mxu0
    %2221 = vdwg.mxu0
    %2222 = vmatprep.subr.mxu0 0.0
    %2223 = vmatpush1.msra.mxu0 0.0
    %2224 = vmatprep.subr.mxu0 0.0
    %2225 = vmatpush1.msra.mxu0 0.0
    %2226 = vmatprep.subr.mxu0 0.0
    %2227 = vmatpush1.msra.mxu0 0.0
    %2228 = vmatprep.subr.mxu0 0.0
    %2229 = vmatpush1.msra.mxu0 0.0
    %2230 = vmatprep.subr.mxu0 0.0
    %2231 = vmatpush1.msra.mxu0 0.0
    %2232 = vmatprep.subr.mxu0 0.0
    %2233 = vmatpush1.msra.mxu0 0.0
    %2234 = vmatprep.subr.mxu0 0.0
    %2235 = vmatpush1.msra.mxu0 0.0
    %2236 = vmatprep.subr.mxu0 0.0
    %2237 = vmatpush1.msra.mxu0 0.0
    %2238 = vmatprep.subr.mxu0 0.0
    %2239 = vmatpush1.msra.mxu0 0.0
    %2240 = vmatprep.subr.mxu0 0.0
    %2241 = vmatpush1.msra.mxu0 0.0
    %2242 = vmatprep.subr.mxu0 0.0
    %2243 = vmatpush1.msra.mxu0 0.0
    %2244 = vmatprep.subr.mxu0 0.0
    %2245 = vmatpush1.msra.mxu0 0.0
    %2246 = vmatprep.subr.mxu0 0.0
    %2247 = vmatpush1.msra.mxu0 0.0
    %2248 = vmatprep.subr.mxu0 0.0
    %2249 = vmatpush1.msra.mxu0 0.0
    %2250 = vmatprep.subr.mxu0 0.0
    %2251 = vmatpush1.msra.mxu0 %v653
    %2252 = vmatprep.subr.mxu0 0.0
    %2253 = vmatpush1.msra.mxu0 %v648
    %2254 = vmatprep.subr.mxu0 0.0
    %2255 = vmatpush2.msra.mxu0 0.0
    %2256 = vmatprep.subr.mxu0 0.0
    %2257 = vmatpush2.msra.mxu0 0.0
    %2258 = vmatprep.subr.mxu0 0.0
    %2259 = vmatpush2.msra.mxu0 0.0
    %2260 = vmatprep.subr.mxu0 0.0
    %2261 = vmatpush2.msra.mxu0 0.0
    %2262 = vmatprep.subr.mxu0 0.0
    %2263 = vmatpush2.msra.mxu0 0.0
    %2264 = vmatprep.subr.mxu0 0.0
    %2265 = vmatpush2.msra.mxu0 0.0
    %2266 = vmatprep.subr.mxu0 0.0
    %2267 = vmatpush2.msra.mxu0 0.0
    %2268 = vmatprep.subr.mxu0 0.0
    %2269 = vmatpush2.msra.mxu0 0.0
    %2270 = vmatprep.subr.mxu0 0.0
    %2271 = vmatpush2.msra.mxu0 0.0
    %2272 = vmatprep.subr.mxu0 0.0
    %2273 = vmatpush2.msra.mxu0 0.0
    %2274 = vmatprep.subr.mxu0 0.0
    %2275 = vmatpush2.msra.mxu0 0.0
    %2276 = vmatprep.subr.mxu0 0.0
    %2277 = vmatpush2.msra.mxu0 0.0
    %2278 = vmatprep.subr.mxu0 0.0
    %2279 = vmatpush2.msra.mxu0 0.0
    %2280 = vmatprep.subr.mxu0 0.0
    %2281 = vmatpush2.msra.mxu0 0.0
    %2282 = vmatprep.subr.mxu0 0.0
    %2283 = vmatpush2.msra.mxu0 0.0
    %2284 = vmatprep.subr.mxu0 0.0
    %2285 = vmatpush2.msra.mxu0 0.0
    %2286 = vmatprep.mubr.f32.mxu0 0.0
    %2287 = vmatmul.mubr.f32.gmra.mxu0 %v867
    %v2288 = vpop.f32.mrf.mxu0
    %v2289 = vadd.f32 0.0, %v2288
    %v2290 = vpop.f32.mrf.mxu0
    %2291 = vmatprep.mubr.f32.mxu0 0.0
    %2292 = vmatmul.mubr.f32.gmra.mxu0 %v870
    %v2293 = vpop.f32.mrf.mxu0
    %v2294 = vadd.f32 0.0, %v2293
    %v2295 = vpop.f32.mrf.mxu0
    %2296 = vdwg.mxu0
    %2297 = vmatprep.subr.mxu0 0.0
    %2298 = vmatpush1.msra.mxu0 0.0
    %2299 = vmatprep.subr.mxu0 0.0
    %2300 = vmatpush1.msra.mxu0 0.0
    %2301 = vmatprep.subr.mxu0 0.0
    %2302 = vmatpush1.msra.mxu0 0.0
    %2303 = vmatprep.subr.mxu0 0.0
    %2304 = vmatpush1.msra.mxu0 0.0
    %2305 = vmatprep.subr.mxu0 0.0
    %2306 = vmatpush1.msra.mxu0 0.0
    %2307 = vmatprep.subr.mxu0 0.0
    %2308 = vmatpush1.msra.mxu0 0.0
    %2309 = vmatprep.subr.mxu0 0.0
    %2310 = vmatpush1.msra.mxu0 0.0
    %2311 = vmatprep.subr.mxu0 0.0
    %2312 = vmatpush1.msra.mxu0 0.0
    %2313 = vmatprep.subr.mxu0 0.0
    %2314 = vmatpush1.msra.mxu0 0.0
    %2315 = vmatprep.subr.mxu0 0.0
    %2316 = vmatpush1.msra.mxu0 0.0
    %2317 = vmatprep.subr.mxu0 0.0
    %2318 = vmatpush1.msra.mxu0 0.0
    %2319 = vmatprep.subr.mxu0 0.0
    %2320 = vmatpush1.msra.mxu0 0.0
    %2321 = vmatprep.subr.mxu0 0.0
    %2322 = vmatpush1.msra.mxu0 0.0
    %2323 = vmatprep.subr.mxu0 0.0
    %2324 = vmatpush1.msra.mxu0 0.0
    %2325 = vmatprep.subr.mxu0 0.0
    %2326 = vmatpush1.msra.mxu0 %v663
    %2327 = vmatprep.subr.mxu0 0.0
    %2328 = vmatpush1.msra.mxu0 %v658
    %2329 = vmatprep.subr.mxu0 0.0
    %2330 = vmatpush2.msra.mxu0 0.0
    %2331 = vmatprep.subr.mxu0 0.0
    %2332 = vmatpush2.msra.mxu0 0.0
    %2333 = vmatprep.subr.mxu0 0.0
    %2334 = vmatpush2.msra.mxu0 0.0
    %2335 = vmatprep.subr.mxu0 0.0
    %2336 = vmatpush2.msra.mxu0 0.0
    %2337 = vmatprep.subr.mxu0 0.0
    %2338 = vmatpush2.msra.mxu0 0.0
    %2339 = vmatprep.subr.mxu0 0.0
    %2340 = vmatpush2.msra.mxu0 0.0
    %2341 = vmatprep.subr.mxu0 0.0
    %2342 = vmatpush2.msra.mxu0 0.0
    %2343 = vmatprep.subr.mxu0 0.0
    %2344 = vmatpush2.msra.mxu0 0.0
    %2345 = vmatprep.subr.mxu0 0.0
    %2346 = vmatpush2.msra.mxu0 0.0
    %2347 = vmatprep.subr.mxu0 0.0
    %2348 = vmatpush2.msra.mxu0 0.0
    %2349 = vmatprep.subr.mxu0 0.0
    %2350 = vmatpush2.msra.mxu0 0.0
    %2351 = vmatprep.subr.mxu0 0.0
    %2352 = vmatpush2.msra.mxu0 0.0
    %2353 = vmatprep.subr.mxu0 0.0
    %2354 = vmatpush2.msra.mxu0 0.0
    %2355 = vmatprep.subr.mxu0 0.0
    %2356 = vmatpush2.msra.mxu0 0.0
    %2357 = vmatprep.subr.mxu0 0.0
    %2358 = vmatpush2.msra.mxu0 0.0
    %2359 = vmatprep.subr.mxu0 0.0
    %2360 = vmatpush2.msra.mxu0 0.0
    %2361 = vmatprep.mubr.f32.mxu0 0.0
    %2362 = vmatmul.mubr.f32.gmra.mxu0 %v867
    %v2363 = vpop.f32.mrf.mxu0
    %v2364 = vadd.f32 0.0, %v2363
    %v2365 = vpop.f32.mrf.mxu0
    %2366 = vmatprep.mubr.f32.mxu0 0.0
    %2367 = vmatmul.mubr.f32.gmra.mxu0 %v870
    %v2368 = vpop.f32.mrf.mxu0
    %v2369 = vadd.f32 0.0, %v2368
    %v2370 = vpop.f32.mrf.mxu0
    %2371 = vdwg.mxu0
    %2372 = vmatprep.subr.mxu0 0.0
    %2373 = vmatpush1.msra.mxu0 0.0
    %2374 = vmatprep.subr.mxu0 0.0
    %2375 = vmatpush1.msra.mxu0 0.0
    %2376 = vmatprep.subr.mxu0 0.0
    %2377 = vmatpush1.msra.mxu0 0.0
    %2378 = vmatprep.subr.mxu0 0.0
    %2379 = vmatpush1.msra.mxu0 0.0
    %2380 = vmatprep.subr.mxu0 0.0
    %2381 = vmatpush1.msra.mxu0 0.0
    %2382 = vmatprep.subr.mxu0 0.0
    %2383 = vmatpush1.msra.mxu0 0.0
    %2384 = vmatprep.subr.mxu0 0.0
    %2385 = vmatpush1.msra.mxu0 0.0
    %2386 = vmatprep.subr.mxu0 0.0
    %2387 = vmatpush1.msra.mxu0 0.0
    %2388 = vmatprep.subr.mxu0 0.0
    %2389 = vmatpush1.msra.mxu0 0.0
    %2390 = vmatprep.subr.mxu0 0.0
    %2391 = vmatpush1.msra.mxu0 0.0
    %2392 = vmatprep.subr.mxu0 0.0
    %2393 = vmatpush1.msra.mxu0 0.0
    %2394 = vmatprep.subr.mxu0 0.0
    %2395 = vmatpush1.msra.mxu0 0.0
    %2396 = vmatprep.subr.mxu0 0.0
    %2397 = vmatpush1.msra.mxu0 0.0
    %2398 = vmatprep.subr.mxu0 0.0
    %2399 = vmatpush1.msra.mxu0 0.0
    %2400 = vmatprep.subr.mxu0 0.0
    %2401 = vmatpush1.msra.mxu0 %v673
    %2402 = vmatprep.subr.mxu0 0.0
    %2403 = vmatpush1.msra.mxu0 %v668
    %2404 = vmatprep.subr.mxu0 0.0
    %2405 = vmatpush2.msra.mxu0 0.0
    %2406 = vmatprep.subr.mxu0 0.0
    %2407 = vmatpush2.msra.mxu0 0.0
    %2408 = vmatprep.subr.mxu0 0.0
    %2409 = vmatpush2.msra.mxu0 0.0
    %2410 = vmatprep.subr.mxu0 0.0
    %2411 = vmatpush2.msra.mxu0 0.0
    %2412 = vmatprep.subr.mxu0 0.0
    %2413 = vmatpush2.msra.mxu0 0.0
    %2414 = vmatprep.subr.mxu0 0.0
    %2415 = vmatpush2.msra.mxu0 0.0
    %2416 = vmatprep.subr.mxu0 0.0
    %2417 = vmatpush2.msra.mxu0 0.0
    %2418 = vmatprep.subr.mxu0 0.0
    %2419 = vmatpush2.msra.mxu0 0.0
    %2420 = vmatprep.subr.mxu0 0.0
    %2421 = vmatpush2.msra.mxu0 0.0
    %2422 = vmatprep.subr.mxu0 0.0
    %2423 = vmatpush2.msra.mxu0 0.0
    %2424 = vmatprep.subr.mxu0 0.0
    %2425 = vmatpush2.msra.mxu0 0.0
    %2426 = vmatprep.subr.mxu0 0.0
    %2427 = vmatpush2.msra.mxu0 0.0
    %2428 = vmatprep.subr.mxu0 0.0
    %2429 = vmatpush2.msra.mxu0 0.0
    %2430 = vmatprep.subr.mxu0 0.0
    %2431 = vmatpush2.msra.mxu0 0.0
    %2432 = vmatprep.subr.mxu0 0.0
    %2433 = vmatpush2.msra.mxu0 0.0
    %2434 = vmatprep.subr.mxu0 0.0
    %2435 = vmatpush2.msra.mxu0 0.0
    %2436 = vmatprep.mubr.f32.mxu0 0.0
    %2437 = vmatmul.mubr.f32.gmra.mxu0 %v867
    %v2438 = vpop.f32.mrf.mxu0
    %v2439 = vadd.f32 0.0, %v2438
    %v2440 = vpop.f32.mrf.mxu0
    %2441 = vmatprep.mubr.f32.mxu0 0.0
    %2442 = vmatmul.mubr.f32.gmra.mxu0 %v870
    %v2443 = vpop.f32.mrf.mxu0
    %v2444 = vadd.f32 0.0, %v2443
    %v2445 = vpop.f32.mrf.mxu0
    %2446 = vdwg.mxu0
    %2447 = vmatprep.subr.mxu0 0.0
    %2448 = vmatpush1.msra.mxu0 0.0
    %2449 = vmatprep.subr.mxu0 0.0
    %2450 = vmatpush1.msra.mxu0 0.0
    %2451 = vmatprep.subr.mxu0 0.0
    %2452 = vmatpush1.msra.mxu0 0.0
    %2453 = vmatprep.subr.mxu0 0.0
    %2454 = vmatpush1.msra.mxu0 0.0
    %2455 = vmatprep.subr.mxu0 0.0
    %2456 = vmatpush1.msra.mxu0 0.0
    %2457 = vmatprep.subr.mxu0 0.0
    %2458 = vmatpush1.msra.mxu0 0.0
    %2459 = vmatprep.subr.mxu0 0.0
    %2460 = vmatpush1.msra.mxu0 0.0
    %2461 = vmatprep.subr.mxu0 0.0
    %2462 = vmatpush1.msra.mxu0 0.0
    %2463 = vmatprep.subr.mxu0 0.0
    %2464 = vmatpush1.msra.mxu0 0.0
    %2465 = vmatprep.subr.mxu0 0.0
    %2466 = vmatpush1.msra.mxu0 0.0
    %2467 = vmatprep.subr.mxu0 0.0
    %2468 = vmatpush1.msra.mxu0 0.0
    %2469 = vmatprep.subr.mxu0 0.0
    %2470 = vmatpush1.msra.mxu0 0.0
    %2471 = vmatprep.subr.mxu0 0.0
    %2472 = vmatpush1.msra.mxu0 0.0
    %2473 = vmatprep.subr.mxu0 0.0
    %2474 = vmatpush1.msra.mxu0 0.0
    %2475 = vmatprep.subr.mxu0 0.0
    %2476 = vmatpush1.msra.mxu0 %v683
    %2477 = vmatprep.subr.mxu0 0.0
    %2478 = vmatpush1.msra.mxu0 %v678
    %2479 = vmatprep.subr.mxu0 0.0
    %2480 = vmatpush2.msra.mxu0 0.0
    %2481 = vmatprep.subr.mxu0 0.0
    %2482 = vmatpush2.msra.mxu0 0.0
    %2483 = vmatprep.subr.mxu0 0.0
    %2484 = vmatpush2.msra.mxu0 0.0
    %2485 = vmatprep.subr.mxu0 0.0
    %2486 = vmatpush2.msra.mxu0 0.0
    %2487 = vmatprep.subr.mxu0 0.0
    %2488 = vmatpush2.msra.mxu0 0.0
    %2489 = vmatprep.subr.mxu0 0.0
    %2490 = vmatpush2.msra.mxu0 0.0
    %2491 = vmatprep.subr.mxu0 0.0
    %2492 = vmatpush2.msra.mxu0 0.0
    %2493 = vmatprep.subr.mxu0 0.0
    %2494 = vmatpush2.msra.mxu0 0.0
    %2495 = vmatprep.subr.mxu0 0.0
    %2496 = vmatpush2.msra.mxu0 0.0
    %2497 = vmatprep.subr.mxu0 0.0
    %2498 = vmatpush2.msra.mxu0 0.0
    %2499 = vmatprep.subr.mxu0 0.0
    %2500 = vmatpush2.msra.mxu0 0.0
    %2501 = vmatprep.subr.mxu0 0.0
    %2502 = vmatpush2.msra.mxu0 0.0
    %2503 = vmatprep.subr.mxu0 0.0
    %2504 = vmatpush2.msra.mxu0 0.0
    %2505 = vmatprep.subr.mxu0 0.0
    %2506 = vmatpush2.msra.mxu0 0.0
    %2507 = vmatprep.subr.mxu0 0.0
    %2508 = vmatpush2.msra.mxu0 0.0
    %2509 = vmatprep.subr.mxu0 0.0
    %2510 = vmatpush2.msra.mxu0 0.0
    %2511 = vmatprep.mubr.f32.mxu0 0.0
    %2512 = vmatmul.mubr.f32.gmra.mxu0 %v867
    %v2513 = vpop.f32.mrf.mxu0
    %v2514 = vadd.f32 0.0, %v2513
    %v2515 = vpop.f32.mrf.mxu0
    %2516 = vmatprep.mubr.f32.mxu0 0.0
    %2517 = vmatmul.mubr.f32.gmra.mxu0 %v870
    %v2518 = vpop.f32.mrf.mxu0
    %v2519 = vadd.f32 0.0, %v2518
    %v2520 = vpop.f32.mrf.mxu0
    %2521 = vdwg.mxu0
    %2522 = vmatprep.subr.mxu0 0.0
    %2523 = vmatpush1.msra.mxu0 0.0
    %2524 = vmatprep.subr.mxu0 0.0
    %2525 = vmatpush1.msra.mxu0 0.0
    %2526 = vmatprep.subr.mxu0 0.0
    %2527 = vmatpush1.msra.mxu0 0.0
    %2528 = vmatprep.subr.mxu0 0.0
    %2529 = vmatpush1.msra.mxu0 0.0
    %2530 = vmatprep.subr.mxu0 0.0
    %2531 = vmatpush1.msra.mxu0 0.0
    %2532 = vmatprep.subr.mxu0 0.0
    %2533 = vmatpush1.msra.mxu0 0.0
    %2534 = vmatprep.subr.mxu0 0.0
    %2535 = vmatpush1.msra.mxu0 0.0
    %2536 = vmatprep.subr.mxu0 0.0
    %2537 = vmatpush1.msra.mxu0 0.0
    %2538 = vmatprep.subr.mxu0 0.0
    %2539 = vmatpush1.msra.mxu0 0.0
    %2540 = vmatprep.subr.mxu0 0.0
    %2541 = vmatpush1.msra.mxu0 0.0
    %2542 = vmatprep.subr.mxu0 0.0
    %2543 = vmatpush1.msra.mxu0 0.0
    %2544 = vmatprep.subr.mxu0 0.0
    %2545 = vmatpush1.msra.mxu0 0.0
    %2546 = vmatprep.subr.mxu0 0.0
    %2547 = vmatpush1.msra.mxu0 0.0
    %2548 = vmatprep.subr.mxu0 0.0
    %2549 = vmatpush1.msra.mxu0 0.0
    %2550 = vmatprep.subr.mxu0 0.0
    %2551 = vmatpush1.msra.mxu0 %v693
    %2552 = vmatprep.subr.mxu0 0.0
    %2553 = vmatpush1.msra.mxu0 %v688
    %2554 = vmatprep.subr.mxu0 0.0
    %2555 = vmatpush2.msra.mxu0 0.0
    %2556 = vmatprep.subr.mxu0 0.0
    %2557 = vmatpush2.msra.mxu0 0.0
    %2558 = vmatprep.subr.mxu0 0.0
    %2559 = vmatpush2.msra.mxu0 0.0
    %2560 = vmatprep.subr.mxu0 0.0
    %2561 = vmatpush2.msra.mxu0 0.0
    %2562 = vmatprep.subr.mxu0 0.0
    %2563 = vmatpush2.msra.mxu0 0.0
    %2564 = vmatprep.subr.mxu0 0.0
    %2565 = vmatpush2.msra.mxu0 0.0
    %2566 = vmatprep.subr.mxu0 0.0
    %2567 = vmatpush2.msra.mxu0 0.0
    %2568 = vmatprep.subr.mxu0 0.0
    %2569 = vmatpush2.msra.mxu0 0.0
    %2570 = vmatprep.subr.mxu0 0.0
    %2571 = vmatpush2.msra.mxu0 0.0
    %2572 = vmatprep.subr.mxu0 0.0
    %2573 = vmatpush2.msra.mxu0 0.0
    %2574 = vmatprep.subr.mxu0 0.0
    %2575 = vmatpush2.msra.mxu0 0.0
    %2576 = vmatprep.subr.mxu0 0.0
    %2577 = vmatpush2.msra.mxu0 0.0
    %2578 = vmatprep.subr.mxu0 0.0
    %2579 = vmatpush2.msra.mxu0 0.0
    %2580 = vmatprep.subr.mxu0 0.0
    %2581 = vmatpush2.msra.mxu0 0.0
    %2582 = vmatprep.subr.mxu0 0.0
    %2583 = vmatpush2.msra.mxu0 0.0
    %2584 = vmatprep.subr.mxu0 0.0
    %2585 = vmatpush2.msra.mxu0 0.0
    %2586 = vmatprep.mubr.f32.mxu0 0.0
    %2587 = vmatmul.mubr.f32.gmra.mxu0 %v867
    %v2588 = vpop.f32.mrf.mxu0
    %v2589 = vadd.f32 0.0, %v2588
    %v2590 = vpop.f32.mrf.mxu0
    %2591 = vmatprep.mubr.f32.mxu0 0.0
    %2592 = vmatmul.mubr.f32.gmra.mxu0 %v870
    %v2593 = vpop.f32.mrf.mxu0
    %v2594 = vadd.f32 0.0, %v2593
    %v2595 = vpop.f32.mrf.mxu0
    %2596 = vdwg.mxu0
    %2597 = vmatprep.subr.mxu0 0.0
    %2598 = vmatpush1.msra.mxu0 0.0
    %2599 = vmatprep.subr.mxu0 0.0
    %2600 = vmatpush1.msra.mxu0 0.0
    %2601 = vmatprep.subr.mxu0 0.0
    %2602 = vmatpush1.msra.mxu0 0.0
    %2603 = vmatprep.subr.mxu0 0.0
    %2604 = vmatpush1.msra.mxu0 0.0
    %2605 = vmatprep.subr.mxu0 0.0
    %2606 = vmatpush1.msra.mxu0 0.0
    %2607 = vmatprep.subr.mxu0 0.0
    %2608 = vmatpush1.msra.mxu0 0.0
    %2609 = vmatprep.subr.mxu0 0.0
    %2610 = vmatpush1.msra.mxu0 0.0
    %2611 = vmatprep.subr.mxu0 0.0
    %2612 = vmatpush1.msra.mxu0 0.0
    %2613 = vmatprep.subr.mxu0 0.0
    %2614 = vmatpush1.msra.mxu0 0.0
    %2615 = vmatprep.subr.mxu0 0.0
    %2616 = vmatpush1.msra.mxu0 0.0
    %2617 = vmatprep.subr.mxu0 0.0
    %2618 = vmatpush1.msra.mxu0 0.0
    %2619 = vmatprep.subr.mxu0 0.0
    %2620 = vmatpush1.msra.mxu0 0.0
    %2621 = vmatprep.subr.mxu0 0.0
    %2622 = vmatpush1.msra.mxu0 0.0
    %2623 = vmatprep.subr.mxu0 0.0
    %2624 = vmatpush1.msra.mxu0 0.0
    %2625 = vmatprep.subr.mxu0 0.0
    %2626 = vmatpush1.msra.mxu0 %v703
    %2627 = vmatprep.subr.mxu0 0.0
    %2628 = vmatpush1.msra.mxu0 %v698
    %2629 = vmatprep.subr.mxu0 0.0
    %2630 = vmatpush2.msra.mxu0 0.0
    %2631 = vmatprep.subr.mxu0 0.0
    %2632 = vmatpush2.msra.mxu0 0.0
    %2633 = vmatprep.subr.mxu0 0.0
    %2634 = vmatpush2.msra.mxu0 0.0
    %2635 = vmatprep.subr.mxu0 0.0
    %2636 = vmatpush2.msra.mxu0 0.0
    %2637 = vmatprep.subr.mxu0 0.0
    %2638 = vmatpush2.msra.mxu0 0.0
    %2639 = vmatprep.subr.mxu0 0.0
    %2640 = vmatpush2.msra.mxu0 0.0
    %2641 = vmatprep.subr.mxu0 0.0
    %2642 = vmatpush2.msra.mxu0 0.0
    %2643 = vmatprep.subr.mxu0 0.0
    %2644 = vmatpush2.msra.mxu0 0.0
    %2645 = vmatprep.subr.mxu0 0.0
    %2646 = vmatpush2.msra.mxu0 0.0
    %2647 = vmatprep.subr.mxu0 0.0
    %2648 = vmatpush2.msra.mxu0 0.0
    %2649 = vmatprep.subr.mxu0 0.0
    %2650 = vmatpush2.msra.mxu0 0.0
    %2651 = vmatprep.subr.mxu0 0.0
    %2652 = vmatpush2.msra.mxu0 0.0
    %2653 = vmatprep.subr.mxu0 0.0
    %2654 = vmatpush2.msra.mxu0 0.0
    %2655 = vmatprep.subr.mxu0 0.0
    %2656 = vmatpush2.msra.mxu0 0.0
    %2657 = vmatprep.subr.mxu0 0.0
    %2658 = vmatpush2.msra.mxu0 0.0
    %2659 = vmatprep.subr.mxu0 0.0
    %2660 = vmatpush2.msra.mxu0 0.0
    %2661 = vmatprep.mubr.f32.mxu0 0.0
    %2662 = vmatmul.mubr.f32.gmra.mxu0 %v867
    %v2663 = vpop.f32.mrf.mxu0
    %v2664 = vadd.f32 0.0, %v2663
    %v2665 = vpop.f32.mrf.mxu0
    %2666 = vmatprep.mubr.f32.mxu0 0.0
    %2667 = vmatmul.mubr.f32.gmra.mxu0 %v870
    %v2668 = vpop.f32.mrf.mxu0
    %v2669 = vadd.f32 0.0, %v2668
    %v2670 = vpop.f32.mrf.mxu0
    %2671 = vdwg.mxu0
    %2672 = vmatprep.subr.mxu0 0.0
    %2673 = vmatpush1.msra.mxu0 0.0
    %2674 = vmatprep.subr.mxu0 0.0
    %2675 = vmatpush1.msra.mxu0 0.0
    %2676 = vmatprep.subr.mxu0 0.0
    %2677 = vmatpush1.msra.mxu0 0.0
    %2678 = vmatprep.subr.mxu0 0.0
    %2679 = vmatpush1.msra.mxu0 0.0
    %2680 = vmatprep.subr.mxu0 0.0
    %2681 = vmatpush1.msra.mxu0 0.0
    %2682 = vmatprep.subr.mxu0 0.0
    %2683 = vmatpush1.msra.mxu0 0.0
    %2684 = vmatprep.subr.mxu0 0.0
    %2685 = vmatpush1.msra.mxu0 0.0
    %2686 = vmatprep.subr.mxu0 0.0
    %2687 = vmatpush1.msra.mxu0 0.0
    %2688 = vmatprep.subr.mxu0 0.0
    %2689 = vmatpush1.msra.mxu0 0.0
    %2690 = vmatprep.subr.mxu0 0.0
    %2691 = vmatpush1.msra.mxu0 0.0
    %2692 = vmatprep.subr.mxu0 0.0
    %2693 = vmatpush1.msra.mxu0 0.0
    %2694 = vmatprep.subr.mxu0 0.0
    %2695 = vmatpush1.msra.mxu0 0.0
    %2696 = vmatprep.subr.mxu0 0.0
    %2697 = vmatpush1.msra.mxu0 0.0
    %2698 = vmatprep.subr.mxu0 0.0
    %2699 = vmatpush1.msra.mxu0 0.0
    %2700 = vmatprep.subr.mxu0 0.0
    %2701 = vmatpush1.msra.mxu0 %v713
    %2702 = vmatprep.subr.mxu0 0.0
    %2703 = vmatpush1.msra.mxu0 %v708
    %2704 = vmatprep.subr.mxu0 0.0
    %2705 = vmatpush2.msra.mxu0 0.0
    %2706 = vmatprep.subr.mxu0 0.0
    %2707 = vmatpush2.msra.mxu0 0.0
    %2708 = vmatprep.subr.mxu0 0.0
    %2709 = vmatpush2.msra.mxu0 0.0
    %2710 = vmatprep.subr.mxu0 0.0
    %2711 = vmatpush2.msra.mxu0 0.0
    %2712 = vmatprep.subr.mxu0 0.0
    %2713 = vmatpush2.msra.mxu0 0.0
    %2714 = vmatprep.subr.mxu0 0.0
    %2715 = vmatpush2.msra.mxu0 0.0
    %2716 = vmatprep.subr.mxu0 0.0
    %2717 = vmatpush2.msra.mxu0 0.0
    %2718 = vmatprep.subr.mxu0 0.0
    %2719 = vmatpush2.msra.mxu0 0.0
    %2720 = vmatprep.subr.mxu0 0.0
    %2721 = vmatpush2.msra.mxu0 0.0
    %2722 = vmatprep.subr.mxu0 0.0
    %2723 = vmatpush2.msra.mxu0 0.0
    %2724 = vmatprep.subr.mxu0 0.0
    %2725 = vmatpush2.msra.mxu0 0.0
    %2726 = vmatprep.subr.mxu0 0.0
    %2727 = vmatpush2.msra.mxu0 0.0
    %2728 = vmatprep.subr.mxu0 0.0
    %2729 = vmatpush2.msra.mxu0 0.0
    %2730 = vmatprep.subr.mxu0 0.0
    %2731 = vmatpush2.msra.mxu0 0.0
    %2732 = vmatprep.subr.mxu0 0.0
    %2733 = vmatpush2.msra.mxu0 0.0
    %2734 = vmatprep.subr.mxu0 0.0
    %2735 = vmatpush2.msra.mxu0 0.0
    %2736 = vmatprep.mubr.f32.mxu0 0.0
    %2737 = vmatmul.mubr.f32.gmra.mxu0 %v867
    %v2738 = vpop.f32.mrf.mxu0
    %v2739 = vadd.f32 0.0, %v2738
    %v2740 = vpop.f32.mrf.mxu0
    %2741 = vmatprep.mubr.f32.mxu0 0.0
    %2742 = vmatmul.mubr.f32.gmra.mxu0 %v870
    %v2743 = vpop.f32.mrf.mxu0
    %v2744 = vadd.f32 0.0, %v2743
    %v2745 = vpop.f32.mrf.mxu0
    %2746 = vdwg.mxu0
    %2747 = vmatprep.subr.mxu0 0.0
    %2748 = vmatpush1.msra.mxu0 0.0
    %2749 = vmatprep.subr.mxu0 0.0
    %2750 = vmatpush1.msra.mxu0 0.0
    %2751 = vmatprep.subr.mxu0 0.0
    %2752 = vmatpush1.msra.mxu0 0.0
    %2753 = vmatprep.subr.mxu0 0.0
    %2754 = vmatpush1.msra.mxu0 0.0
    %2755 = vmatprep.subr.mxu0 0.0
    %2756 = vmatpush1.msra.mxu0 0.0
    %2757 = vmatprep.subr.mxu0 0.0
    %2758 = vmatpush1.msra.mxu0 0.0
    %2759 = vmatprep.subr.mxu0 0.0
    %2760 = vmatpush1.msra.mxu0 0.0
    %2761 = vmatprep.subr.mxu0 0.0
    %2762 = vmatpush1.msra.mxu0 0.0
    %2763 = vmatprep.subr.mxu0 0.0
    %2764 = vmatpush1.msra.mxu0 0.0
    %2765 = vmatprep.subr.mxu0 0.0
    %2766 = vmatpush1.msra.mxu0 0.0
    %2767 = vmatprep.subr.mxu0 0.0
    %2768 = vmatpush1.msra.mxu0 0.0
    %2769 = vmatprep.subr.mxu0 0.0
    %2770 = vmatpush1.msra.mxu0 0.0
    %2771 = vmatprep.subr.mxu0 0.0
    %2772 = vmatpush1.msra.mxu0 0.0
    %2773 = vmatprep.subr.mxu0 0.0
    %2774 = vmatpush1.msra.mxu0 0.0
    %2775 = vmatprep.subr.mxu0 0.0
    %2776 = vmatpush1.msra.mxu0 %v723
    %2777 = vmatprep.subr.mxu0 0.0
    %2778 = vmatpush1.msra.mxu0 %v718
    %2779 = vmatprep.subr.mxu0 0.0
    %2780 = vmatpush2.msra.mxu0 0.0
    %2781 = vmatprep.subr.mxu0 0.0
    %2782 = vmatpush2.msra.mxu0 0.0
    %2783 = vmatprep.subr.mxu0 0.0
    %2784 = vmatpush2.msra.mxu0 0.0
    %2785 = vmatprep.subr.mxu0 0.0
    %2786 = vmatpush2.msra.mxu0 0.0
    %2787 = vmatprep.subr.mxu0 0.0
    %2788 = vmatpush2.msra.mxu0 0.0
    %2789 = vmatprep.subr.mxu0 0.0
    %2790 = vmatpush2.msra.mxu0 0.0
    %2791 = vmatprep.subr.mxu0 0.0
    %2792 = vmatpush2.msra.mxu0 0.0
    %2793 = vmatprep.subr.mxu0 0.0
    %2794 = vmatpush2.msra.mxu0 0.0
    %2795 = vmatprep.subr.mxu0 0.0
    %2796 = vmatpush2.msra.mxu0 0.0
    %2797 = vmatprep.subr.mxu0 0.0
    %2798 = vmatpush2.msra.mxu0 0.0
    %2799 = vmatprep.subr.mxu0 0.0
    %2800 = vmatpush2.msra.mxu0 0.0
    %2801 = vmatprep.subr.mxu0 0.0
    %2802 = vmatpush2.msra.mxu0 0.0
    %2803 = vmatprep.subr.mxu0 0.0
    %2804 = vmatpush2.msra.mxu0 0.0
    %2805 = vmatprep.subr.mxu0 0.0
    %2806 = vmatpush2.msra.mxu0 0.0
    %2807 = vmatprep.subr.mxu0 0.0
    %2808 = vmatpush2.msra.mxu0 0.0
    %2809 = vmatprep.subr.mxu0 0.0
    %2810 = vmatpush2.msra.mxu0 0.0
    %2811 = vmatprep.mubr.f32.mxu0 0.0
    %2812 = vmatmul.mubr.f32.gmra.mxu0 %v867
    %v2813 = vpop.f32.mrf.mxu0
    %v2814 = vadd.f32 0.0, %v2813
    %v2815 = vpop.f32.mrf.mxu0
    %2816 = vmatprep.mubr.f32.mxu0 0.0
    %2817 = vmatmul.mubr.f32.gmra.mxu0 %v870
    %v2818 = vpop.f32.mrf.mxu0
    %v2819 = vadd.f32 0.0, %v2818
    %v2820 = vpop.f32.mrf.mxu0
    %2821 = vdwg.mxu0
    %2822 = vmatprep.subr.mxu0 0.0
    %2823 = vmatpush1.msra.mxu0 0.0
    %2824 = vmatprep.subr.mxu0 0.0
    %2825 = vmatpush1.msra.mxu0 0.0
    %2826 = vmatprep.subr.mxu0 0.0
    %2827 = vmatpush1.msra.mxu0 0.0
    %2828 = vmatprep.subr.mxu0 0.0
    %2829 = vmatpush1.msra.mxu0 0.0
    %2830 = vmatprep.subr.mxu0 0.0
    %2831 = vmatpush1.msra.mxu0 0.0
    %2832 = vmatprep.subr.mxu0 0.0
    %2833 = vmatpush1.msra.mxu0 0.0
    %2834 = vmatprep.subr.mxu0 0.0
    %2835 = vmatpush1.msra.mxu0 0.0
    %2836 = vmatprep.subr.mxu0 0.0
    %2837 = vmatpush1.msra.mxu0 0.0
    %2838 = vmatprep.subr.mxu0 0.0
    %2839 = vmatpush1.msra.mxu0 0.0
    %2840 = vmatprep.subr.mxu0 0.0
    %2841 = vmatpush1.msra.mxu0 0.0
    %2842 = vmatprep.subr.mxu0 0.0
    %2843 = vmatpush1.msra.mxu0 0.0
    %2844 = vmatprep.subr.mxu0 0.0
    %2845 = vmatpush1.msra.mxu0 0.0
    %2846 = vmatprep.subr.mxu0 0.0
    %2847 = vmatpush1.msra.mxu0 0.0
    %2848 = vmatprep.subr.mxu0 0.0
    %2849 = vmatpush1.msra.mxu0 0.0
    %2850 = vmatprep.subr.mxu0 0.0
    %2851 = vmatpush1.msra.mxu0 %v733
    %2852 = vmatprep.subr.mxu0 0.0
    %2853 = vmatpush1.msra.mxu0 %v728
    %2854 = vmatprep.subr.mxu0 0.0
    %2855 = vmatpush2.msra.mxu0 0.0
    %2856 = vmatprep.subr.mxu0 0.0
    %2857 = vmatpush2.msra.mxu0 0.0
    %2858 = vmatprep.subr.mxu0 0.0
    %2859 = vmatpush2.msra.mxu0 0.0
    %2860 = vmatprep.subr.mxu0 0.0
    %2861 = vmatpush2.msra.mxu0 0.0
    %2862 = vmatprep.subr.mxu0 0.0
    %2863 = vmatpush2.msra.mxu0 0.0
    %2864 = vmatprep.subr.mxu0 0.0
    %2865 = vmatpush2.msra.mxu0 0.0
    %2866 = vmatprep.subr.mxu0 0.0
    %2867 = vmatpush2.msra.mxu0 0.0
    %2868 = vmatprep.subr.mxu0 0.0
    %2869 = vmatpush2.msra.mxu0 0.0
    %2870 = vmatprep.subr.mxu0 0.0
    %2871 = vmatpush2.msra.mxu0 0.0
    %2872 = vmatprep.subr.mxu0 0.0
    %2873 = vmatpush2.msra.mxu0 0.0
    %2874 = vmatprep.subr.mxu0 0.0
    %2875 = vmatpush2.msra.mxu0 0.0
    %2876 = vmatprep.subr.mxu0 0.0
    %2877 = vmatpush2.msra.mxu0 0.0
    %2878 = vmatprep.subr.mxu0 0.0
    %2879 = vmatpush2.msra.mxu0 0.0
    %2880 = vmatprep.subr.mxu0 0.0
    %2881 = vmatpush2.msra.mxu0 0.0
    %2882 = vmatprep.subr.mxu0 0.0
    %2883 = vmatpush2.msra.mxu0 0.0
    %2884 = vmatprep.subr.mxu0 0.0
    %2885 = vmatpush2.msra.mxu0 0.0
    %2886 = vmatprep.mubr.f32.mxu0 0.0
    %2887 = vmatmul.mubr.f32.gmra.mxu0 %v867
    %v2888 = vpop.f32.mrf.mxu0
    %v2889 = vadd.f32 0.0, %v2888
    %v2890 = vpop.f32.mrf.mxu0
    %2891 = vmatprep.mubr.f32.mxu0 0.0
    %2892 = vmatmul.mubr.f32.gmra.mxu0 %v870
    %v2893 = vpop.f32.mrf.mxu0
    %v2894 = vadd.f32 0.0, %v2893
    %v2895 = vpop.f32.mrf.mxu0
    %2896 = vdwg.mxu0
    %2897 = vmatprep.subr.mxu0 0.0
    %2898 = vmatpush1.msra.mxu0 0.0
    %2899 = vmatprep.subr.mxu0 0.0
    %2900 = vmatpush1.msra.mxu0 0.0
    %2901 = vmatprep.subr.mxu0 0.0
    %2902 = vmatpush1.msra.mxu0 0.0
    %2903 = vmatprep.subr.mxu0 0.0
    %2904 = vmatpush1.msra.mxu0 0.0
    %2905 = vmatprep.subr.mxu0 0.0
    %2906 = vmatpush1.msra.mxu0 0.0
    %2907 = vmatprep.subr.mxu0 0.0
    %2908 = vmatpush1.msra.mxu0 0.0
    %2909 = vmatprep.subr.mxu0 0.0
    %2910 = vmatpush1.msra.mxu0 0.0
    %2911 = vmatprep.subr.mxu0 0.0
    %2912 = vmatpush1.msra.mxu0 0.0
    %2913 = vmatprep.subr.mxu0 0.0
    %2914 = vmatpush1.msra.mxu0 0.0
    %2915 = vmatprep.subr.mxu0 0.0
    %2916 = vmatpush1.msra.mxu0 0.0
    %2917 = vmatprep.subr.mxu0 0.0
    %2918 = vmatpush1.msra.mxu0 0.0
    %2919 = vmatprep.subr.mxu0 0.0
    %2920 = vmatpush1.msra.mxu0 0.0
    %2921 = vmatprep.subr.mxu0 0.0
    %2922 = vmatpush1.msra.mxu0 0.0
    %2923 = vmatprep.subr.mxu0 0.0
    %2924 = vmatpush1.msra.mxu0 0.0
    %2925 = vmatprep.subr.mxu0 0.0
    %2926 = vmatpush1.msra.mxu0 %v743
    %2927 = vmatprep.subr.mxu0 0.0
    %2928 = vmatpush1.msra.mxu0 %v738
    %2929 = vmatprep.subr.mxu0 0.0
    %2930 = vmatpush2.msra.mxu0 0.0
    %2931 = vmatprep.subr.mxu0 0.0
    %2932 = vmatpush2.msra.mxu0 0.0
    %2933 = vmatprep.subr.mxu0 0.0
    %2934 = vmatpush2.msra.mxu0 0.0
    %2935 = vmatprep.subr.mxu0 0.0
    %2936 = vmatpush2.msra.mxu0 0.0
    %2937 = vmatprep.subr.mxu0 0.0
    %2938 = vmatpush2.msra.mxu0 0.0
    %2939 = vmatprep.subr.mxu0 0.0
    %2940 = vmatpush2.msra.mxu0 0.0
    %2941 = vmatprep.subr.mxu0 0.0
    %2942 = vmatpush2.msra.mxu0 0.0
    %2943 = vmatprep.subr.mxu0 0.0
    %2944 = vmatpush2.msra.mxu0 0.0
    %2945 = vmatprep.subr.mxu0 0.0
    %2946 = vmatpush2.msra.mxu0 0.0
    %2947 = vmatprep.subr.mxu0 0.0
    %2948 = vmatpush2.msra.mxu0 0.0
    %2949 = vmatprep.subr.mxu0 0.0
    %2950 = vmatpush2.msra.mxu0 0.0
    %2951 = vmatprep.subr.mxu0 0.0
    %2952 = vmatpush2.msra.mxu0 0.0
    %2953 = vmatprep.subr.mxu0 0.0
    %2954 = vmatpush2.msra.mxu0 0.0
    %2955 = vmatprep.subr.mxu0 0.0
    %2956 = vmatpush2.msra.mxu0 0.0
    %2957 = vmatprep.subr.mxu0 0.0
    %2958 = vmatpush2.msra.mxu0 0.0
    %2959 = vmatprep.subr.mxu0 0.0
    %2960 = vmatpush2.msra.mxu0 0.0
    %2961 = vmatprep.mubr.f32.mxu0 0.0
    %2962 = vmatmul.mubr.f32.gmra.mxu0 %v867
    %v2963 = vpop.f32.mrf.mxu0
    %v2964 = vadd.f32 0.0, %v2963
    %v2965 = vpop.f32.mrf.mxu0
    %2966 = vmatprep.mubr.f32.mxu0 0.0
    %2967 = vmatmul.mubr.f32.gmra.mxu0 %v870
    %v2968 = vpop.f32.mrf.mxu0
    %v2969 = vadd.f32 0.0, %v2968
    %v2970 = vpop.f32.mrf.mxu0
    %2971 = vdwg.mxu0
    %2972 = vmatprep.subr.mxu0 0.0
    %2973 = vmatpush1.msra.mxu0 0.0
    %2974 = vmatprep.subr.mxu0 0.0
    %2975 = vmatpush1.msra.mxu0 0.0
    %2976 = vmatprep.subr.mxu0 0.0
    %2977 = vmatpush1.msra.mxu0 0.0
    %2978 = vmatprep.subr.mxu0 0.0
    %2979 = vmatpush1.msra.mxu0 0.0
    %2980 = vmatprep.subr.mxu0 0.0
    %2981 = vmatpush1.msra.mxu0 0.0
    %2982 = vmatprep.subr.mxu0 0.0
    %2983 = vmatpush1.msra.mxu0 0.0
    %2984 = vmatprep.subr.mxu0 0.0
    %2985 = vmatpush1.msra.mxu0 0.0
    %2986 = vmatprep.subr.mxu0 0.0
    %2987 = vmatpush1.msra.mxu0 0.0
    %2988 = vmatprep.subr.mxu0 0.0
    %2989 = vmatpush1.msra.mxu0 0.0
    %2990 = vmatprep.subr.mxu0 0.0
    %2991 = vmatpush1.msra.mxu0 0.0
    %2992 = vmatprep.subr.mxu0 0.0
    %2993 = vmatpush1.msra.mxu0 0.0
    %2994 = vmatprep.subr.mxu0 0.0
    %2995 = vmatpush1.msra.mxu0 0.0
    %2996 = vmatprep.subr.mxu0 0.0
    %2997 = vmatpush1.msra.mxu0 0.0
    %2998 = vmatprep.subr.mxu0 0.0
    %2999 = vmatpush1.msra.mxu0 0.0
    %3000 = vmatprep.subr.mxu0 0.0
    %3001 = vmatpush1.msra.mxu0 %v753
    %3002 = vmatprep.subr.mxu0 0.0
    %3003 = vmatpush1.msra.mxu0 %v748
    %3004 = vmatprep.subr.mxu0 0.0
    %3005 = vmatpush2.msra.mxu0 0.0
    %3006 = vmatprep.subr.mxu0 0.0
    %3007 = vmatpush2.msra.mxu0 0.0
    %3008 = vmatprep.subr.mxu0 0.0
    %3009 = vmatpush2.msra.mxu0 0.0
    %3010 = vmatprep.subr.mxu0 0.0
    %3011 = vmatpush2.msra.mxu0 0.0
    %3012 = vmatprep.subr.mxu0 0.0
    %3013 = vmatpush2.msra.mxu0 0.0
    %3014 = vmatprep.subr.mxu0 0.0
    %3015 = vmatpush2.msra.mxu0 0.0
    %3016 = vmatprep.subr.mxu0 0.0
    %3017 = vmatpush2.msra.mxu0 0.0
    %3018 = vmatprep.subr.mxu0 0.0
    %3019 = vmatpush2.msra.mxu0 0.0
    %3020 = vmatprep.subr.mxu0 0.0
    %3021 = vmatpush2.msra.mxu0 0.0
    %3022 = vmatprep.subr.mxu0 0.0
    %3023 = vmatpush2.msra.mxu0 0.0
    %3024 = vmatprep.subr.mxu0 0.0
    %3025 = vmatpush2.msra.mxu0 0.0
    %3026 = vmatprep.subr.mxu0 0.0
    %3027 = vmatpush2.msra.mxu0 0.0
    %3028 = vmatprep.subr.mxu0 0.0
    %3029 = vmatpush2.msra.mxu0 0.0
    %3030 = vmatprep.subr.mxu0 0.0
    %3031 = vmatpush2.msra.mxu0 0.0
    %3032 = vmatprep.subr.mxu0 0.0
    %3033 = vmatpush2.msra.mxu0 0.0
    %3034 = vmatprep.subr.mxu0 0.0
    %3035 = vmatpush2.msra.mxu0 0.0
    %3036 = vmatprep.mubr.f32.mxu0 0.0
    %3037 = vmatmul.mubr.f32.gmra.mxu0 %v867
    %v3038 = vpop.f32.mrf.mxu0
    %v3039 = vadd.f32 0.0, %v3038
    %v3040 = vpop.f32.mrf.mxu0
    %3041 = vmatprep.mubr.f32.mxu0 0.0
    %3042 = vmatmul.mubr.f32.gmra.mxu0 %v870
    %v3043 = vpop.f32.mrf.mxu0
    %v3044 = vadd.f32 0.0, %v3043
    %v3045 = vpop.f32.mrf.mxu0
    %3046 = vdwg.mxu0
    %3047 = vmatprep.subr.mxu0 0.0
    %3048 = vmatpush1.msra.mxu0 0.0
    %3049 = vmatprep.subr.mxu0 0.0
    %3050 = vmatpush1.msra.mxu0 0.0
    %3051 = vmatprep.subr.mxu0 0.0
    %3052 = vmatpush1.msra.mxu0 0.0
    %3053 = vmatprep.subr.mxu0 0.0
    %3054 = vmatpush1.msra.mxu0 0.0
    %3055 = vmatprep.subr.mxu0 0.0
    %3056 = vmatpush1.msra.mxu0 0.0
    %3057 = vmatprep.subr.mxu0 0.0
    %3058 = vmatpush1.msra.mxu0 0.0
    %3059 = vmatprep.subr.mxu0 0.0
    %3060 = vmatpush1.msra.mxu0 0.0
    %3061 = vmatprep.subr.mxu0 0.0
    %3062 = vmatpush1.msra.mxu0 0.0
    %3063 = vmatprep.subr.mxu0 0.0
    %3064 = vmatpush1.msra.mxu0 0.0
    %3065 = vmatprep.subr.mxu0 0.0
    %3066 = vmatpush1.msra.mxu0 0.0
    %3067 = vmatprep.subr.mxu0 0.0
    %3068 = vmatpush1.msra.mxu0 0.0
    %3069 = vmatprep.subr.mxu0 0.0
    %3070 = vmatpush1.msra.mxu0 0.0
    %3071 = vmatprep.subr.mxu0 0.0
    %3072 = vmatpush1.msra.mxu0 0.0
    %3073 = vmatprep.subr.mxu0 0.0
    %3074 = vmatpush1.msra.mxu0 0.0
    %3075 = vmatprep.subr.mxu0 0.0
    %3076 = vmatpush1.msra.mxu0 %v763
    %3077 = vmatprep.subr.mxu0 0.0
    %3078 = vmatpush1.msra.mxu0 %v758
    %3079 = vmatprep.subr.mxu0 0.0
    %3080 = vmatpush2.msra.mxu0 0.0
    %3081 = vmatprep.subr.mxu0 0.0
    %3082 = vmatpush2.msra.mxu0 0.0
    %3083 = vmatprep.subr.mxu0 0.0
    %3084 = vmatpush2.msra.mxu0 0.0
    %3085 = vmatprep.subr.mxu0 0.0
    %3086 = vmatpush2.msra.mxu0 0.0
    %3087 = vmatprep.subr.mxu0 0.0
    %3088 = vmatpush2.msra.mxu0 0.0
    %3089 = vmatprep.subr.mxu0 0.0
    %3090 = vmatpush2.msra.mxu0 0.0
    %3091 = vmatprep.subr.mxu0 0.0
    %3092 = vmatpush2.msra.mxu0 0.0
    %3093 = vmatprep.subr.mxu0 0.0
    %3094 = vmatpush2.msra.mxu0 0.0
    %3095 = vmatprep.subr.mxu0 0.0
    %3096 = vmatpush2.msra.mxu0 0.0
    %3097 = vmatprep.subr.mxu0 0.0
    %3098 = vmatpush2.msra.mxu0 0.0
    %3099 = vmatprep.subr.mxu0 0.0
    %3100 = vmatpush2.msra.mxu0 0.0
    %3101 = vmatprep.subr.mxu0 0.0
    %3102 = vmatpush2.msra.mxu0 0.0
    %3103 = vmatprep.subr.mxu0 0.0
    %3104 = vmatpush2.msra.mxu0 0.0
    %3105 = vmatprep.subr.mxu0 0.0
    %3106 = vmatpush2.msra.mxu0 0.0
    %3107 = vmatprep.subr.mxu0 0.0
    %3108 = vmatpush2.msra.mxu0 0.0
    %3109 = vmatprep.subr.mxu0 0.0
    %3110 = vmatpush2.msra.mxu0 0.0
    %3111 = vmatprep.mubr.f32.mxu0 0.0
    %3112 = vmatmul.mubr.f32.gmra.mxu0 %v867
    %v3113 = vpop.f32.mrf.mxu0
    %v3114 = vadd.f32 0.0, %v3113
    %v3115 = vpop.f32.mrf.mxu0
    %3116 = vmatprep.mubr.f32.mxu0 0.0
    %3117 = vmatmul.mubr.f32.gmra.mxu0 %v870
    %v3118 = vpop.f32.mrf.mxu0
    %v3119 = vadd.f32 0.0, %v3118
    %v3120 = vpop.f32.mrf.mxu0
    %3121 = vdwg.mxu0
    %3122 = vmatprep.subr.mxu0 0.0
    %3123 = vmatpush1.msra.mxu0 0.0
    %3124 = vmatprep.subr.mxu0 0.0
    %3125 = vmatpush1.msra.mxu0 0.0
    %3126 = vmatprep.subr.mxu0 0.0
    %3127 = vmatpush1.msra.mxu0 0.0
    %3128 = vmatprep.subr.mxu0 0.0
    %3129 = vmatpush1.msra.mxu0 0.0
    %3130 = vmatprep.subr.mxu0 0.0
    %3131 = vmatpush1.msra.mxu0 0.0
    %3132 = vmatprep.subr.mxu0 0.0
    %3133 = vmatpush1.msra.mxu0 0.0
    %3134 = vmatprep.subr.mxu0 0.0
    %3135 = vmatpush1.msra.mxu0 0.0
    %3136 = vmatprep.subr.mxu0 0.0
    %3137 = vmatpush1.msra.mxu0 0.0
    %3138 = vmatprep.subr.mxu0 0.0
    %3139 = vmatpush1.msra.mxu0 0.0
    %3140 = vmatprep.subr.mxu0 0.0
    %3141 = vmatpush1.msra.mxu0 0.0
    %3142 = vmatprep.subr.mxu0 0.0
    %3143 = vmatpush1.msra.mxu0 0.0
    %3144 = vmatprep.subr.mxu0 0.0
    %3145 = vmatpush1.msra.mxu0 0.0
    %3146 = vmatprep.subr.mxu0 0.0
    %3147 = vmatpush1.msra.mxu0 0.0
    %3148 = vmatprep.subr.mxu0 0.0
    %3149 = vmatpush1.msra.mxu0 0.0
    %3150 = vmatprep.subr.mxu0 0.0
    %3151 = vmatpush1.msra.mxu0 %v773
    %3152 = vmatprep.subr.mxu0 0.0
    %3153 = vmatpush1.msra.mxu0 %v768
    %3154 = vmatprep.subr.mxu0 0.0
    %3155 = vmatpush2.msra.mxu0 0.0
    %3156 = vmatprep.subr.mxu0 0.0
    %3157 = vmatpush2.msra.mxu0 0.0
    %3158 = vmatprep.subr.mxu0 0.0
    %3159 = vmatpush2.msra.mxu0 0.0
    %3160 = vmatprep.subr.mxu0 0.0
    %3161 = vmatpush2.msra.mxu0 0.0
    %3162 = vmatprep.subr.mxu0 0.0
    %3163 = vmatpush2.msra.mxu0 0.0
    %3164 = vmatprep.subr.mxu0 0.0
    %3165 = vmatpush2.msra.mxu0 0.0
    %3166 = vmatprep.subr.mxu0 0.0
    %3167 = vmatpush2.msra.mxu0 0.0
    %3168 = vmatprep.subr.mxu0 0.0
    %3169 = vmatpush2.msra.mxu0 0.0
    %3170 = vmatprep.subr.mxu0 0.0
    %3171 = vmatpush2.msra.mxu0 0.0
    %3172 = vmatprep.subr.mxu0 0.0
    %3173 = vmatpush2.msra.mxu0 0.0
    %3174 = vmatprep.subr.mxu0 0.0
    %3175 = vmatpush2.msra.mxu0 0.0
    %3176 = vmatprep.subr.mxu0 0.0
    %3177 = vmatpush2.msra.mxu0 0.0
    %3178 = vmatprep.subr.mxu0 0.0
    %3179 = vmatpush2.msra.mxu0 0.0
    %3180 = vmatprep.subr.mxu0 0.0
    %3181 = vmatpush2.msra.mxu0 0.0
    %3182 = vmatprep.subr.mxu0 0.0
    %3183 = vmatpush2.msra.mxu0 0.0
    %3184 = vmatprep.subr.mxu0 0.0
    %3185 = vmatpush2.msra.mxu0 0.0
    %3186 = vmatprep.mubr.f32.mxu0 0.0
    %3187 = vmatmul.mubr.f32.gmra.mxu0 %v867
    %v3188 = vpop.f32.mrf.mxu0
    %v3189 = vadd.f32 0.0, %v3188
    %v3190 = vpop.f32.mrf.mxu0
    %3191 = vmatprep.mubr.f32.mxu0 0.0
    %3192 = vmatmul.mubr.f32.gmra.mxu0 %v870
    %v3193 = vpop.f32.mrf.mxu0
    %v3194 = vadd.f32 0.0, %v3193
    %v3195 = vpop.f32.mrf.mxu0
    %3196 = vdwg.mxu0
    %3197 = vmatprep.subr.mxu0 0.0
    %3198 = vmatpush1.msra.mxu0 0.0
    %3199 = vmatprep.subr.mxu0 0.0
    %3200 = vmatpush1.msra.mxu0 0.0
    %3201 = vmatprep.subr.mxu0 0.0
    %3202 = vmatpush1.msra.mxu0 0.0
    %3203 = vmatprep.subr.mxu0 0.0
    %3204 = vmatpush1.msra.mxu0 0.0
    %3205 = vmatprep.subr.mxu0 0.0
    %3206 = vmatpush1.msra.mxu0 0.0
    %3207 = vmatprep.subr.mxu0 0.0
    %3208 = vmatpush1.msra.mxu0 0.0
    %3209 = vmatprep.subr.mxu0 0.0
    %3210 = vmatpush1.msra.mxu0 0.0
    %3211 = vmatprep.subr.mxu0 0.0
    %3212 = vmatpush1.msra.mxu0 0.0
    %3213 = vmatprep.subr.mxu0 0.0
    %3214 = vmatpush1.msra.mxu0 0.0
    %3215 = vmatprep.subr.mxu0 0.0
    %3216 = vmatpush1.msra.mxu0 0.0
    %3217 = vmatprep.subr.mxu0 0.0
    %3218 = vmatpush1.msra.mxu0 0.0
    %3219 = vmatprep.subr.mxu0 0.0
    %3220 = vmatpush1.msra.mxu0 0.0
    %3221 = vmatprep.subr.mxu0 0.0
    %3222 = vmatpush1.msra.mxu0 0.0
    %3223 = vmatprep.subr.mxu0 0.0
    %3224 = vmatpush1.msra.mxu0 0.0
    %3225 = vmatprep.subr.mxu0 0.0
    %3226 = vmatpush1.msra.mxu0 %v783
    %3227 = vmatprep.subr.mxu0 0.0
    %3228 = vmatpush1.msra.mxu0 %v778
    %3229 = vmatprep.subr.mxu0 0.0
    %3230 = vmatpush2.msra.mxu0 0.0
    %3231 = vmatprep.subr.mxu0 0.0
    %3232 = vmatpush2.msra.mxu0 0.0
    %3233 = vmatprep.subr.mxu0 0.0
    %3234 = vmatpush2.msra.mxu0 0.0
    %3235 = vmatprep.subr.mxu0 0.0
    %3236 = vmatpush2.msra.mxu0 0.0
    %3237 = vmatprep.subr.mxu0 0.0
    %3238 = vmatpush2.msra.mxu0 0.0
    %3239 = vmatprep.subr.mxu0 0.0
    %3240 = vmatpush2.msra.mxu0 0.0
    %3241 = vmatprep.subr.mxu0 0.0
    %3242 = vmatpush2.msra.mxu0 0.0
    %3243 = vmatprep.subr.mxu0 0.0
    %3244 = vmatpush2.msra.mxu0 0.0
    %3245 = vmatprep.subr.mxu0 0.0
    %3246 = vmatpush2.msra.mxu0 0.0
    %3247 = vmatprep.subr.mxu0 0.0
    %3248 = vmatpush2.msra.mxu0 0.0
    %3249 = vmatprep.subr.mxu0 0.0
    %3250 = vmatpush2.msra.mxu0 0.0
    %3251 = vmatprep.subr.mxu0 0.0
    %3252 = vmatpush2.msra.mxu0 0.0
    %3253 = vmatprep.subr.mxu0 0.0
    %3254 = vmatpush2.msra.mxu0 0.0
    %3255 = vmatprep.subr.mxu0 0.0
    %3256 = vmatpush2.msra.mxu0 0.0
    %3257 = vmatprep.subr.mxu0 0.0
    %3258 = vmatpush2.msra.mxu0 0.0
    %3259 = vmatprep.subr.mxu0 0.0
    %3260 = vmatpush2.msra.mxu0 0.0
    %3261 = vmatprep.mubr.f32.mxu0 0.0
    %3262 = vmatmul.mubr.f32.gmra.mxu0 %v867
    %v3263 = vpop.f32.mrf.mxu0
    %v3264 = vadd.f32 0.0, %v3263
    %v3265 = vpop.f32.mrf.mxu0
    %3266 = vmatprep.mubr.f32.mxu0 0.0
    %3267 = vmatmul.mubr.f32.gmra.mxu0 %v870
    %v3268 = vpop.f32.mrf.mxu0
    %v3269 = vadd.f32 0.0, %v3268
    %v3270 = vpop.f32.mrf.mxu0
    %3271 = vdwg.mxu0
    %3272 = vmatprep.subr.mxu0 0.0
    %3273 = vmatpush1.msra.mxu0 0.0
    %3274 = vmatprep.subr.mxu0 0.0
    %3275 = vmatpush1.msra.mxu0 0.0
    %3276 = vmatprep.subr.mxu0 0.0
    %3277 = vmatpush1.msra.mxu0 0.0
    %3278 = vmatprep.subr.mxu0 0.0
    %3279 = vmatpush1.msra.mxu0 0.0
    %3280 = vmatprep.subr.mxu0 0.0
    %3281 = vmatpush1.msra.mxu0 0.0
    %3282 = vmatprep.subr.mxu0 0.0
    %3283 = vmatpush1.msra.mxu0 0.0
    %3284 = vmatprep.subr.mxu0 0.0
    %3285 = vmatpush1.msra.mxu0 0.0
    %3286 = vmatprep.subr.mxu0 0.0
    %3287 = vmatpush1.msra.mxu0 0.0
    %3288 = vmatprep.subr.mxu0 0.0
    %3289 = vmatpush1.msra.mxu0 0.0
    %3290 = vmatprep.subr.mxu0 0.0
    %3291 = vmatpush1.msra.mxu0 0.0
    %3292 = vmatprep.subr.mxu0 0.0
    %3293 = vmatpush1.msra.mxu0 0.0
    %3294 = vmatprep.subr.mxu0 0.0
    %3295 = vmatpush1.msra.mxu0 0.0
    %3296 = vmatprep.subr.mxu0 0.0
    %3297 = vmatpush1.msra.mxu0 0.0
    %3298 = vmatprep.subr.mxu0 0.0
    %3299 = vmatpush1.msra.mxu0 0.0
    %3300 = vmatprep.subr.mxu0 0.0
    %3301 = vmatpush1.msra.mxu0 %v793
    %3302 = vmatprep.subr.mxu0 0.0
    %3303 = vmatpush1.msra.mxu0 %v788
    %3304 = vmatprep.subr.mxu0 0.0
    %3305 = vmatpush2.msra.mxu0 0.0
    %3306 = vmatprep.subr.mxu0 0.0
    %3307 = vmatpush2.msra.mxu0 0.0
    %3308 = vmatprep.subr.mxu0 0.0
    %3309 = vmatpush2.msra.mxu0 0.0
    %3310 = vmatprep.subr.mxu0 0.0
    %3311 = vmatpush2.msra.mxu0 0.0
    %3312 = vmatprep.subr.mxu0 0.0
    %3313 = vmatpush2.msra.mxu0 0.0
    %3314 = vmatprep.subr.mxu0 0.0
    %3315 = vmatpush2.msra.mxu0 0.0
    %3316 = vmatprep.subr.mxu0 0.0
    %3317 = vmatpush2.msra.mxu0 0.0
    %3318 = vmatprep.subr.mxu0 0.0
    %3319 = vmatpush2.msra.mxu0 0.0
    %3320 = vmatprep.subr.mxu0 0.0
    %3321 = vmatpush2.msra.mxu0 0.0
    %3322 = vmatprep.subr.mxu0 0.0
    %3323 = vmatpush2.msra.mxu0 0.0
    %3324 = vmatprep.subr.mxu0 0.0
    %3325 = vmatpush2.msra.mxu0 0.0
    %3326 = vmatprep.subr.mxu0 0.0
    %3327 = vmatpush2.msra.mxu0 0.0
    %3328 = vmatprep.subr.mxu0 0.0
    %3329 = vmatpush2.msra.mxu0 0.0
    %3330 = vmatprep.subr.mxu0 0.0
    %3331 = vmatpush2.msra.mxu0 0.0
    %3332 = vmatprep.subr.mxu0 0.0
    %3333 = vmatpush2.msra.mxu0 0.0
    %3334 = vmatprep.subr.mxu0 0.0
    %3335 = vmatpush2.msra.mxu0 0.0
    %3336 = vmatprep.mubr.f32.mxu0 0.0
    %3337 = vmatmul.mubr.f32.gmra.mxu0 %v867
    %v3338 = vpop.f32.mrf.mxu0
    %v3339 = vadd.f32 0.0, %v3338
    %v3340 = vpop.f32.mrf.mxu0
    %3341 = vmatprep.mubr.f32.mxu0 0.0
    %3342 = vmatmul.mubr.f32.gmra.mxu0 %v870
    %v3343 = vpop.f32.mrf.mxu0
    %v3344 = vadd.f32 0.0, %v3343
    %v3345 = vpop.f32.mrf.mxu0
    %3346 = vdwg.mxu0
    %3347 = vmatprep.subr.mxu0 0.0
    %3348 = vmatpush1.msra.mxu0 0.0
    %3349 = vmatprep.subr.mxu0 0.0
    %3350 = vmatpush1.msra.mxu0 0.0
    %3351 = vmatprep.subr.mxu0 0.0
    %3352 = vmatpush1.msra.mxu0 0.0
    %3353 = vmatprep.subr.mxu0 0.0
    %3354 = vmatpush1.msra.mxu0 0.0
    %3355 = vmatprep.subr.mxu0 0.0
    %3356 = vmatpush1.msra.mxu0 0.0
    %3357 = vmatprep.subr.mxu0 0.0
    %3358 = vmatpush1.msra.mxu0 0.0
    %3359 = vmatprep.subr.mxu0 0.0
    %3360 = vmatpush1.msra.mxu0 0.0
    %3361 = vmatprep.subr.mxu0 0.0
    %3362 = vmatpush1.msra.mxu0 0.0
    %3363 = vmatprep.subr.mxu0 0.0
    %3364 = vmatpush1.msra.mxu0 0.0
    %3365 = vmatprep.subr.mxu0 0.0
    %3366 = vmatpush1.msra.mxu0 0.0
    %3367 = vmatprep.subr.mxu0 0.0
    %3368 = vmatpush1.msra.mxu0 0.0
    %3369 = vmatprep.subr.mxu0 0.0
    %3370 = vmatpush1.msra.mxu0 0.0
    %3371 = vmatprep.subr.mxu0 0.0
    %3372 = vmatpush1.msra.mxu0 0.0
    %3373 = vmatprep.subr.mxu0 0.0
    %3374 = vmatpush1.msra.mxu0 0.0
    %3375 = vmatprep.subr.mxu0 0.0
    %3376 = vmatpush1.msra.mxu0 %v803
    %3377 = vmatprep.subr.mxu0 0.0
    %3378 = vmatpush1.msra.mxu0 %v798
    %3379 = vmatprep.subr.mxu0 0.0
    %3380 = vmatpush2.msra.mxu0 0.0
    %3381 = vmatprep.subr.mxu0 0.0
    %3382 = vmatpush2.msra.mxu0 0.0
    %3383 = vmatprep.subr.mxu0 0.0
    %3384 = vmatpush2.msra.mxu0 0.0
    %3385 = vmatprep.subr.mxu0 0.0
    %3386 = vmatpush2.msra.mxu0 0.0
    %3387 = vmatprep.subr.mxu0 0.0
    %3388 = vmatpush2.msra.mxu0 0.0
    %3389 = vmatprep.subr.mxu0 0.0
    %3390 = vmatpush2.msra.mxu0 0.0
    %3391 = vmatprep.subr.mxu0 0.0
    %3392 = vmatpush2.msra.mxu0 0.0
    %3393 = vmatprep.subr.mxu0 0.0
    %3394 = vmatpush2.msra.mxu0 0.0
    %3395 = vmatprep.subr.mxu0 0.0
    %3396 = vmatpush2.msra.mxu0 0.0
    %3397 = vmatprep.subr.mxu0 0.0
    %3398 = vmatpush2.msra.mxu0 0.0
    %3399 = vmatprep.subr.mxu0 0.0
    %3400 = vmatpush2.msra.mxu0 0.0
    %3401 = vmatprep.subr.mxu0 0.0
    %3402 = vmatpush2.msra.mxu0 0.0
    %3403 = vmatprep.subr.mxu0 0.0
    %3404 = vmatpush2.msra.mxu0 0.0
    %3405 = vmatprep.subr.mxu0 0.0
    %3406 = vmatpush2.msra.mxu0 0.0
    %3407 = vmatprep.subr.mxu0 0.0
    %3408 = vmatpush2.msra.mxu0 0.0
    %3409 = vmatprep.subr.mxu0 0.0
    %3410 = vmatpush2.msra.mxu0 0.0
    %3411 = vmatprep.mubr.f32.mxu0 0.0
    %3412 = vmatmul.mubr.f32.gmra.mxu0 %v867
    %v3413 = vpop.f32.mrf.mxu0
    %v3414 = vadd.f32 0.0, %v3413
    %v3415 = vpop.f32.mrf.mxu0
    %3416 = vmatprep.mubr.f32.mxu0 0.0
    %3417 = vmatmul.mubr.f32.gmra.mxu0 %v870
    %v3418 = vpop.f32.mrf.mxu0
    %v3419 = vadd.f32 0.0, %v3418
    %v3420 = vpop.f32.mrf.mxu0
    %3421 = vdwg.mxu0
    %3422 = vmatprep.subr.mxu0 0.0
    %3423 = vmatpush1.msra.mxu0 0.0
    %3424 = vmatprep.subr.mxu0 0.0
    %3425 = vmatpush1.msra.mxu0 0.0
    %3426 = vmatprep.subr.mxu0 0.0
    %3427 = vmatpush1.msra.mxu0 0.0
    %3428 = vmatprep.subr.mxu0 0.0
    %3429 = vmatpush1.msra.mxu0 0.0
    %3430 = vmatprep.subr.mxu0 0.0
    %3431 = vmatpush1.msra.mxu0 0.0
    %3432 = vmatprep.subr.mxu0 0.0
    %3433 = vmatpush1.msra.mxu0 0.0
    %3434 = vmatprep.subr.mxu0 0.0
    %3435 = vmatpush1.msra.mxu0 0.0
    %3436 = vmatprep.subr.mxu0 0.0
    %3437 = vmatpush1.msra.mxu0 0.0
    %3438 = vmatprep.subr.mxu0 0.0
    %3439 = vmatpush1.msra.mxu0 0.0
    %3440 = vmatprep.subr.mxu0 0.0
    %3441 = vmatpush1.msra.mxu0 0.0
    %3442 = vmatprep.subr.mxu0 0.0
    %3443 = vmatpush1.msra.mxu0 0.0
    %3444 = vmatprep.subr.mxu0 0.0
    %3445 = vmatpush1.msra.mxu0 0.0
    %3446 = vmatprep.subr.mxu0 0.0
    %3447 = vmatpush1.msra.mxu0 0.0
    %3448 = vmatprep.subr.mxu0 0.0
    %3449 = vmatpush1.msra.mxu0 0.0
    %3450 = vmatprep.subr.mxu0 0.0
    %3451 = vmatpush1.msra.mxu0 %v813
    %3452 = vmatprep.subr.mxu0 0.0
    %3453 = vmatpush1.msra.mxu0 %v808
    %3454 = vmatprep.subr.mxu0 0.0
    %3455 = vmatpush2.msra.mxu0 0.0
    %3456 = vmatprep.subr.mxu0 0.0
    %3457 = vmatpush2.msra.mxu0 0.0
    %3458 = vmatprep.subr.mxu0 0.0
    %3459 = vmatpush2.msra.mxu0 0.0
    %3460 = vmatprep.subr.mxu0 0.0
    %3461 = vmatpush2.msra.mxu0 0.0
    %3462 = vmatprep.subr.mxu0 0.0
    %3463 = vmatpush2.msra.mxu0 0.0
    %3464 = vmatprep.subr.mxu0 0.0
    %3465 = vmatpush2.msra.mxu0 0.0
    %3466 = vmatprep.subr.mxu0 0.0
    %3467 = vmatpush2.msra.mxu0 0.0
    %3468 = vmatprep.subr.mxu0 0.0
    %3469 = vmatpush2.msra.mxu0 0.0
    %3470 = vmatprep.subr.mxu0 0.0
    %3471 = vmatpush2.msra.mxu0 0.0
    %3472 = vmatprep.subr.mxu0 0.0
    %3473 = vmatpush2.msra.mxu0 0.0
    %3474 = vmatprep.subr.mxu0 0.0
    %3475 = vmatpush2.msra.mxu0 0.0
    %3476 = vmatprep.subr.mxu0 0.0
    %3477 = vmatpush2.msra.mxu0 0.0
    %3478 = vmatprep.subr.mxu0 0.0
    %3479 = vmatpush2.msra.mxu0 0.0
    %3480 = vmatprep.subr.mxu0 0.0
    %3481 = vmatpush2.msra.mxu0 0.0
    %3482 = vmatprep.subr.mxu0 0.0
    %3483 = vmatpush2.msra.mxu0 0.0
    %3484 = vmatprep.subr.mxu0 0.0
    %3485 = vmatpush2.msra.mxu0 0.0
    %3486 = vmatprep.mubr.f32.mxu0 0.0
    %3487 = vmatmul.mubr.f32.gmra.mxu0 %v867
    %v3488 = vpop.f32.mrf.mxu0
    %v3489 = vadd.f32 0.0, %v3488
    %v3490 = vpop.f32.mrf.mxu0
    %3491 = vmatprep.mubr.f32.mxu0 0.0
    %3492 = vmatmul.mubr.f32.gmra.mxu0 %v870
    %v3493 = vpop.f32.mrf.mxu0
    %v3494 = vadd.f32 0.0, %v3493
    %v3495 = vpop.f32.mrf.mxu0
    %3496 = vdwg.mxu0
    %3497 = vmatprep.subr.mxu0 0.0
    %3498 = vmatpush1.msra.mxu0 0.0
    %3499 = vmatprep.subr.mxu0 0.0
    %3500 = vmatpush1.msra.mxu0 0.0
    %3501 = vmatprep.subr.mxu0 0.0
    %3502 = vmatpush1.msra.mxu0 0.0
    %3503 = vmatprep.subr.mxu0 0.0
    %3504 = vmatpush1.msra.mxu0 0.0
    %3505 = vmatprep.subr.mxu0 0.0
    %3506 = vmatpush1.msra.mxu0 0.0
    %3507 = vmatprep.subr.mxu0 0.0
    %3508 = vmatpush1.msra.mxu0 0.0
    %3509 = vmatprep.subr.mxu0 0.0
    %3510 = vmatpush1.msra.mxu0 0.0
    %3511 = vmatprep.subr.mxu0 0.0
    %3512 = vmatpush1.msra.mxu0 0.0
    %3513 = vmatprep.subr.mxu0 0.0
    %3514 = vmatpush1.msra.mxu0 0.0
    %3515 = vmatprep.subr.mxu0 0.0
    %3516 = vmatpush1.msra.mxu0 0.0
    %3517 = vmatprep.subr.mxu0 0.0
    %3518 = vmatpush1.msra.mxu0 0.0
    %3519 = vmatprep.subr.mxu0 0.0
    %3520 = vmatpush1.msra.mxu0 0.0
    %3521 = vmatprep.subr.mxu0 0.0
    %3522 = vmatpush1.msra.mxu0 0.0
    %3523 = vmatprep.subr.mxu0 0.0
    %3524 = vmatpush1.msra.mxu0 0.0
    %3525 = vmatprep.subr.mxu0 0.0
    %3526 = vmatpush1.msra.mxu0 %v823
    %3527 = vmatprep.subr.mxu0 0.0
    %3528 = vmatpush1.msra.mxu0 %v818
    %3529 = vmatprep.subr.mxu0 0.0
    %3530 = vmatpush2.msra.mxu0 0.0
    %3531 = vmatprep.subr.mxu0 0.0
    %3532 = vmatpush2.msra.mxu0 0.0
    %3533 = vmatprep.subr.mxu0 0.0
    %3534 = vmatpush2.msra.mxu0 0.0
    %3535 = vmatprep.subr.mxu0 0.0
    %3536 = vmatpush2.msra.mxu0 0.0
    %3537 = vmatprep.subr.mxu0 0.0
    %3538 = vmatpush2.msra.mxu0 0.0
    %3539 = vmatprep.subr.mxu0 0.0
    %3540 = vmatpush2.msra.mxu0 0.0
    %3541 = vmatprep.subr.mxu0 0.0
    %3542 = vmatpush2.msra.mxu0 0.0
    %3543 = vmatprep.subr.mxu0 0.0
    %3544 = vmatpush2.msra.mxu0 0.0
    %3545 = vmatprep.subr.mxu0 0.0
    %3546 = vmatpush2.msra.mxu0 0.0
    %3547 = vmatprep.subr.mxu0 0.0
    %3548 = vmatpush2.msra.mxu0 0.0
    %3549 = vmatprep.subr.mxu0 0.0
    %3550 = vmatpush2.msra.mxu0 0.0
    %3551 = vmatprep.subr.mxu0 0.0
    %3552 = vmatpush2.msra.mxu0 0.0
    %3553 = vmatprep.subr.mxu0 0.0
    %3554 = vmatpush2.msra.mxu0 0.0
    %3555 = vmatprep.subr.mxu0 0.0
    %3556 = vmatpush2.msra.mxu0 0.0
    %3557 = vmatprep.subr.mxu0 0.0
    %3558 = vmatpush2.msra.mxu0 0.0
    %3559 = vmatprep.subr.mxu0 0.0
    %3560 = vmatpush2.msra.mxu0 0.0
    %3561 = vmatprep.mubr.f32.mxu0 0.0
    %3562 = vmatmul.mubr.f32.gmra.mxu0 %v867
    %v3563 = vpop.f32.mrf.mxu0
    %v3564 = vadd.f32 0.0, %v3563
    %v3565 = vpop.f32.mrf.mxu0
    %3566 = vmatprep.mubr.f32.mxu0 0.0
    %3567 = vmatmul.mubr.f32.gmra.mxu0 %v870
    %v3568 = vpop.f32.mrf.mxu0
    %v3569 = vadd.f32 0.0, %v3568
    %v3570 = vpop.f32.mrf.mxu0
    %3571 = vdwg.mxu0
    %3572 = vmatprep.subr.mxu0 0.0
    %3573 = vmatpush1.msra.mxu0 0.0
    %3574 = vmatprep.subr.mxu0 0.0
    %3575 = vmatpush1.msra.mxu0 0.0
    %3576 = vmatprep.subr.mxu0 0.0
    %3577 = vmatpush1.msra.mxu0 0.0
    %3578 = vmatprep.subr.mxu0 0.0
    %3579 = vmatpush1.msra.mxu0 0.0
    %3580 = vmatprep.subr.mxu0 0.0
    %3581 = vmatpush1.msra.mxu0 0.0
    %3582 = vmatprep.subr.mxu0 0.0
    %3583 = vmatpush1.msra.mxu0 0.0
    %3584 = vmatprep.subr.mxu0 0.0
    %3585 = vmatpush1.msra.mxu0 0.0
    %3586 = vmatprep.subr.mxu0 0.0
    %3587 = vmatpush1.msra.mxu0 0.0
    %3588 = vmatprep.subr.mxu0 0.0
    %3589 = vmatpush1.msra.mxu0 0.0
    %3590 = vmatprep.subr.mxu0 0.0
    %3591 = vmatpush1.msra.mxu0 0.0
    %3592 = vmatprep.subr.mxu0 0.0
    %3593 = vmatpush1.msra.mxu0 0.0
    %3594 = vmatprep.subr.mxu0 0.0
    %3595 = vmatpush1.msra.mxu0 0.0
    %3596 = vmatprep.subr.mxu0 0.0
    %3597 = vmatpush1.msra.mxu0 0.0
    %3598 = vmatprep.subr.mxu0 0.0
    %3599 = vmatpush1.msra.mxu0 0.0
    %3600 = vmatprep.subr.mxu0 0.0
    %3601 = vmatpush1.msra.mxu0 %v833
    %3602 = vmatprep.subr.mxu0 0.0
    %3603 = vmatpush1.msra.mxu0 %v828
    %3604 = vmatprep.subr.mxu0 0.0
    %3605 = vmatpush2.msra.mxu0 0.0
    %3606 = vmatprep.subr.mxu0 0.0
    %3607 = vmatpush2.msra.mxu0 0.0
    %3608 = vmatprep.subr.mxu0 0.0
    %3609 = vmatpush2.msra.mxu0 0.0
    %3610 = vmatprep.subr.mxu0 0.0
    %3611 = vmatpush2.msra.mxu0 0.0
    %3612 = vmatprep.subr.mxu0 0.0
    %3613 = vmatpush2.msra.mxu0 0.0
    %3614 = vmatprep.subr.mxu0 0.0
    %3615 = vmatpush2.msra.mxu0 0.0
    %3616 = vmatprep.subr.mxu0 0.0
    %3617 = vmatpush2.msra.mxu0 0.0
    %3618 = vmatprep.subr.mxu0 0.0
    %3619 = vmatpush2.msra.mxu0 0.0
    %3620 = vmatprep.subr.mxu0 0.0
    %3621 = vmatpush2.msra.mxu0 0.0
    %3622 = vmatprep.subr.mxu0 0.0
    %3623 = vmatpush2.msra.mxu0 0.0
    %3624 = vmatprep.subr.mxu0 0.0
    %3625 = vmatpush2.msra.mxu0 0.0
    %3626 = vmatprep.subr.mxu0 0.0
    %3627 = vmatpush2.msra.mxu0 0.0
    %3628 = vmatprep.subr.mxu0 0.0
    %3629 = vmatpush2.msra.mxu0 0.0
    %3630 = vmatprep.subr.mxu0 0.0
    %3631 = vmatpush2.msra.mxu0 0.0
    %3632 = vmatprep.subr.mxu0 0.0
    %3633 = vmatpush2.msra.mxu0 0.0
    %3634 = vmatprep.subr.mxu0 0.0
    %3635 = vmatpush2.msra.mxu0 0.0
    %3636 = vmatprep.mubr.f32.mxu0 0.0
    %3637 = vmatmul.mubr.f32.gmra.mxu0 %v867
    %v3638 = vpop.f32.mrf.mxu0
    %v3639 = vadd.f32 0.0, %v3638
    %v3640 = vpop.f32.mrf.mxu0
    %3641 = vmatprep.mubr.f32.mxu0 0.0
    %3642 = vmatmul.mubr.f32.gmra.mxu0 %v870
    %v3643 = vpop.f32.mrf.mxu0
    %v3644 = vadd.f32 0.0, %v3643
    %v3645 = vpop.f32.mrf.mxu0
    %3646 = vdwg.mxu0
    %3647 = vmatprep.subr.mxu0 0.0
    %3648 = vmatpush1.msra.mxu0 0.0
    %3649 = vmatprep.subr.mxu0 0.0
    %3650 = vmatpush1.msra.mxu0 0.0
    %3651 = vmatprep.subr.mxu0 0.0
    %3652 = vmatpush1.msra.mxu0 0.0
    %3653 = vmatprep.subr.mxu0 0.0
    %3654 = vmatpush1.msra.mxu0 0.0
    %3655 = vmatprep.subr.mxu0 0.0
    %3656 = vmatpush1.msra.mxu0 0.0
    %3657 = vmatprep.subr.mxu0 0.0
    %3658 = vmatpush1.msra.mxu0 0.0
    %3659 = vmatprep.subr.mxu0 0.0
    %3660 = vmatpush1.msra.mxu0 0.0
    %3661 = vmatprep.subr.mxu0 0.0
    %3662 = vmatpush1.msra.mxu0 0.0
    %3663 = vmatprep.subr.mxu0 0.0
    %3664 = vmatpush1.msra.mxu0 0.0
    %3665 = vmatprep.subr.mxu0 0.0
    %3666 = vmatpush1.msra.mxu0 0.0
    %3667 = vmatprep.subr.mxu0 0.0
    %3668 = vmatpush1.msra.mxu0 0.0
    %3669 = vmatprep.subr.mxu0 0.0
    %3670 = vmatpush1.msra.mxu0 0.0
    %3671 = vmatprep.subr.mxu0 0.0
    %3672 = vmatpush1.msra.mxu0 0.0
    %3673 = vmatprep.subr.mxu0 0.0
    %3674 = vmatpush1.msra.mxu0 0.0
    %3675 = vmatprep.subr.mxu0 0.0
    %3676 = vmatpush1.msra.mxu0 %v843
    %3677 = vmatprep.subr.mxu0 0.0
    %3678 = vmatpush1.msra.mxu0 %v838
    %3679 = vmatprep.subr.mxu0 0.0
    %3680 = vmatpush2.msra.mxu0 0.0
    %3681 = vmatprep.subr.mxu0 0.0
    %3682 = vmatpush2.msra.mxu0 0.0
    %3683 = vmatprep.subr.mxu0 0.0
    %3684 = vmatpush2.msra.mxu0 0.0
    %3685 = vmatprep.subr.mxu0 0.0
    %3686 = vmatpush2.msra.mxu0 0.0
    %3687 = vmatprep.subr.mxu0 0.0
    %3688 = vmatpush2.msra.mxu0 0.0
    %3689 = vmatprep.subr.mxu0 0.0
    %3690 = vmatpush2.msra.mxu0 0.0
    %3691 = vmatprep.subr.mxu0 0.0
    %3692 = vmatpush2.msra.mxu0 0.0
    %3693 = vmatprep.subr.mxu0 0.0
    %3694 = vmatpush2.msra.mxu0 0.0
    %3695 = vmatprep.subr.mxu0 0.0
    %3696 = vmatpush2.msra.mxu0 0.0
    %3697 = vmatprep.subr.mxu0 0.0
    %3698 = vmatpush2.msra.mxu0 0.0
    %3699 = vmatprep.subr.mxu0 0.0
    %3700 = vmatpush2.msra.mxu0 0.0
    %3701 = vmatprep.subr.mxu0 0.0
    %3702 = vmatpush2.msra.mxu0 0.0
    %3703 = vmatprep.subr.mxu0 0.0
    %3704 = vmatpush2.msra.mxu0 0.0
    %3705 = vmatprep.subr.mxu0 0.0
    %3706 = vmatpush2.msra.mxu0 0.0
    %3707 = vmatprep.subr.mxu0 0.0
    %3708 = vmatpush2.msra.mxu0 0.0
    %3709 = vmatprep.subr.mxu0 0.0
    %3710 = vmatpush2.msra.mxu0 0.0
    %3711 = vmatprep.mubr.f32.mxu0 0.0
    %3712 = vmatmul.mubr.f32.gmra.mxu0 %v867
    %v3713 = vpop.f32.mrf.mxu0
    %v3714 = vadd.f32 0.0, %v3713
    %v3715 = vpop.f32.mrf.mxu0
    %3716 = vmatprep.mubr.f32.mxu0 0.0
    %3717 = vmatmul.mubr.f32.gmra.mxu0 %v870
    %v3718 = vpop.f32.mrf.mxu0
    %v3719 = vadd.f32 0.0, %v3718
    %v3720 = vpop.f32.mrf.mxu0
    %3721 = vdwg.mxu0
    %3722 = vmatprep.subr.mxu0 0.0
    %3723 = vmatpush1.msra.mxu0 0.0
    %3724 = vmatprep.subr.mxu0 0.0
    %3725 = vmatpush1.msra.mxu0 0.0
    %3726 = vmatprep.subr.mxu0 0.0
    %3727 = vmatpush1.msra.mxu0 0.0
    %3728 = vmatprep.subr.mxu0 0.0
    %3729 = vmatpush1.msra.mxu0 0.0
    %3730 = vmatprep.subr.mxu0 0.0
    %3731 = vmatpush1.msra.mxu0 0.0
    %3732 = vmatprep.subr.mxu0 0.0
    %3733 = vmatpush1.msra.mxu0 0.0
    %3734 = vmatprep.subr.mxu0 0.0
    %3735 = vmatpush1.msra.mxu0 0.0
    %3736 = vmatprep.subr.mxu0 0.0
    %3737 = vmatpush1.msra.mxu0 0.0
    %3738 = vmatprep.subr.mxu0 0.0
    %3739 = vmatpush1.msra.mxu0 0.0
    %3740 = vmatprep.subr.mxu0 0.0
    %3741 = vmatpush1.msra.mxu0 0.0
    %3742 = vmatprep.subr.mxu0 0.0
    %3743 = vmatpush1.msra.mxu0 0.0
    %3744 = vmatprep.subr.mxu0 0.0
    %3745 = vmatpush1.msra.mxu0 0.0
    %3746 = vmatprep.subr.mxu0 0.0
    %3747 = vmatpush1.msra.mxu0 0.0
    %3748 = vmatprep.subr.mxu0 0.0
    %3749 = vmatpush1.msra.mxu0 0.0
    %3750 = vmatprep.subr.mxu0 0.0
    %3751 = vmatpush1.msra.mxu0 %v853
    %3752 = vmatprep.subr.mxu0 0.0
    %3753 = vmatpush1.msra.mxu0 %v848
    %3754 = vmatprep.subr.mxu0 0.0
    %3755 = vmatpush2.msra.mxu0 0.0
    %3756 = vmatprep.subr.mxu0 0.0
    %3757 = vmatpush2.msra.mxu0 0.0
    %3758 = vmatprep.subr.mxu0 0.0
    %3759 = vmatpush2.msra.mxu0 0.0
    %3760 = vmatprep.subr.mxu0 0.0
    %3761 = vmatpush2.msra.mxu0 0.0
    %3762 = vmatprep.subr.mxu0 0.0
    %3763 = vmatpush2.msra.mxu0 0.0
    %3764 = vmatprep.subr.mxu0 0.0
    %3765 = vmatpush2.msra.mxu0 0.0
    %3766 = vmatprep.subr.mxu0 0.0
    %3767 = vmatpush2.msra.mxu0 0.0
    %3768 = vmatprep.subr.mxu0 0.0
    %3769 = vmatpush2.msra.mxu0 0.0
    %3770 = vmatprep.subr.mxu0 0.0
    %3771 = vmatpush2.msra.mxu0 0.0
    %3772 = vmatprep.subr.mxu0 0.0
    %3773 = vmatpush2.msra.mxu0 0.0
    %3774 = vmatprep.subr.mxu0 0.0
    %3775 = vmatpush2.msra.mxu0 0.0
    %3776 = vmatprep.subr.mxu0 0.0
    %3777 = vmatpush2.msra.mxu0 0.0
    %3778 = vmatprep.subr.mxu0 0.0
    %3779 = vmatpush2.msra.mxu0 0.0
    %3780 = vmatprep.subr.mxu0 0.0
    %3781 = vmatpush2.msra.mxu0 0.0
    %3782 = vmatprep.subr.mxu0 0.0
    %3783 = vmatpush2.msra.mxu0 0.0
    %3784 = vmatprep.subr.mxu0 0.0
    %3785 = vmatpush2.msra.mxu0 0.0
    %3786 = vmatprep.mubr.f32.mxu0 0.0
    %3787 = vmatmul.mubr.f32.gmra.mxu0 %v867
    %v3788 = vpop.f32.mrf.mxu0
    %v3789 = vadd.f32 0.0, %v3788
    %v3790 = vpop.f32.mrf.mxu0
    %3791 = vmatprep.mubr.f32.mxu0 0.0
    %3792 = vmatmul.mubr.f32.gmra.mxu0 %v870
    %v3793 = vpop.f32.mrf.mxu0
    %v3794 = vadd.f32 0.0, %v3793
    %v3795 = vpop.f32.mrf.mxu0
    %3796 = vdwg.mxu0
    %3797 = vmatprep.subr.mxu0 0.0
    %3798 = vmatpush1.msra.mxu0 0.0
    %3799 = vmatprep.subr.mxu0 0.0
    %3800 = vmatpush1.msra.mxu0 0.0
    %3801 = vmatprep.subr.mxu0 0.0
    %3802 = vmatpush1.msra.mxu0 0.0
    %3803 = vmatprep.subr.mxu0 0.0
    %3804 = vmatpush1.msra.mxu0 0.0
    %3805 = vmatprep.subr.mxu0 0.0
    %3806 = vmatpush1.msra.mxu0 0.0
    %3807 = vmatprep.subr.mxu0 0.0
    %3808 = vmatpush1.msra.mxu0 0.0
    %3809 = vmatprep.subr.mxu0 0.0
    %3810 = vmatpush1.msra.mxu0 0.0
    %3811 = vmatprep.subr.mxu0 0.0
    %3812 = vmatpush1.msra.mxu0 0.0
    %3813 = vmatprep.subr.mxu0 0.0
    %3814 = vmatpush1.msra.mxu0 0.0
    %3815 = vmatprep.subr.mxu0 0.0
    %3816 = vmatpush1.msra.mxu0 0.0
    %3817 = vmatprep.subr.mxu0 0.0
    %3818 = vmatpush1.msra.mxu0 0.0
    %3819 = vmatprep.subr.mxu0 0.0
    %3820 = vmatpush1.msra.mxu0 0.0
    %3821 = vmatprep.subr.mxu0 0.0
    %3822 = vmatpush1.msra.mxu0 0.0
    %3823 = vmatprep.subr.mxu0 0.0
    %3824 = vmatpush1.msra.mxu0 0.0
    %3825 = vmatprep.subr.mxu0 0.0
    %3826 = vmatpush1.msra.mxu0 %v863
    %3827 = vmatprep.subr.mxu0 0.0
    %3828 = vmatpush1.msra.mxu0 %v858
    %3829 = vmatprep.subr.mxu0 0.0
    %3830 = vmatpush2.msra.mxu0 0.0
    %3831 = vmatprep.subr.mxu0 0.0
    %3832 = vmatpush2.msra.mxu0 0.0
    %3833 = vmatprep.subr.mxu0 0.0
    %3834 = vmatpush2.msra.mxu0 0.0
    %3835 = vmatprep.subr.mxu0 0.0
    %3836 = vmatpush2.msra.mxu0 0.0
    %3837 = vmatprep.subr.mxu0 0.0
    %3838 = vmatpush2.msra.mxu0 0.0
    %3839 = vmatprep.subr.mxu0 0.0
    %3840 = vmatpush2.msra.mxu0 0.0
    %3841 = vmatprep.subr.mxu0 0.0
    %3842 = vmatpush2.msra.mxu0 0.0
    %3843 = vmatprep.subr.mxu0 0.0
    %3844 = vmatpush2.msra.mxu0 0.0
    %3845 = vmatprep.subr.mxu0 0.0
    %3846 = vmatpush2.msra.mxu0 0.0
    %3847 = vmatprep.subr.mxu0 0.0
    %3848 = vmatpush2.msra.mxu0 0.0
    %3849 = vmatprep.subr.mxu0 0.0
    %3850 = vmatpush2.msra.mxu0 0.0
    %3851 = vmatprep.subr.mxu0 0.0
    %3852 = vmatpush2.msra.mxu0 0.0
    %3853 = vmatprep.subr.mxu0 0.0
    %3854 = vmatpush2.msra.mxu0 0.0
    %3855 = vmatprep.subr.mxu0 0.0
    %3856 = vmatpush2.msra.mxu0 0.0
    %3857 = vmatprep.subr.mxu0 0.0
    %3858 = vmatpush2.msra.mxu0 0.0
    %3859 = vmatprep.subr.mxu0 0.0
    %3860 = vmatpush2.msra.mxu0 0.0
    %3861 = vmatprep.mubr.f32.mxu0 0.0
    %3862 = vmatmul.mubr.f32.gmra.mxu0 %v867
    %v3863 = vpop.f32.mrf.mxu0
    %v3864 = vadd.f32 0.0, %v3863
    %v3865 = vpop.f32.mrf.mxu0
    %3866 = vmatprep.mubr.f32.mxu0 0.0
    %3867 = vmatmul.mubr.f32.gmra.mxu0 %v870
    %v3868 = vpop.f32.mrf.mxu0
    %v3869 = vadd.f32 0.0, %v3868
    %v3870 = vpop.f32.mrf.mxu0
    %3871 = vdwg.mxu0
    %v3872 = vmul.f32 %v939, %v939
    %v3873 = vmul.f32 %v944, %v944
    %v3874 = vmul.f32 %v1014, %v1014
    %v3875 = vmul.f32 %v1019, %v1019
    %v3876 = vmul.f32 %v1089, %v1089
    %v3877 = vmul.f32 %v1094, %v1094
    %v3878 = vmul.f32 %v1164, %v1164
    %v3879 = vmul.f32 %v1169, %v1169
    %v3880 = vmul.f32 %v1239, %v1239
    %v3881 = vmul.f32 %v1244, %v1244
    %v3882 = vmul.f32 %v1314, %v1314
    %v3883 = vmul.f32 %v1319, %v1319
    %v3884 = vmul.f32 %v1389, %v1389
    %v3885 = vmul.f32 %v1394, %v1394
    %v3886 = vmul.f32 %v1464, %v1464
    %v3887 = vmul.f32 %v1469, %v1469
    %v3888 = vsub.f32 %v2139, %v3872
    %v3889 = vsub.f32 %v2144, %v3873
    %v3890 = vsub.f32 %v2214, %v3874
    %v3891 = vsub.f32 %v2219, %v3875
    %v3892 = vsub.f32 %v2289, %v3876
    %v3893 = vsub.f32 %v2294, %v3877
    %v3894 = vsub.f32 %v2364, %v3878
    %v3895 = vsub.f32 %v2369, %v3879
    %v3896 = vsub.f32 %v2439, %v3880
    %v3897 = vsub.f32 %v2444, %v3881
    %v3898 = vsub.f32 %v2514, %v3882
    %v3899 = vsub.f32 %v2519, %v3883
    %v3900 = vsub.f32 %v2589, %v3884
    %v3901 = vsub.f32 %v2594, %v3885
    %v3902 = vsub.f32 %v2664, %v3886
    %v3903 = vsub.f32 %v2669, %v3887
    %v3904 = vmul.f32 %v1539, %v1539
    %v3905 = vmul.f32 %v1544, %v1544
    %v3906 = vmul.f32 %v1614, %v1614
    %v3907 = vmul.f32 %v1619, %v1619
    %v3908 = vmul.f32 %v1689, %v1689
    %v3909 = vmul.f32 %v1694, %v1694
    %v3910 = vmul.f32 %v1764, %v1764
    %v3911 = vmul.f32 %v1769, %v1769
    %v3912 = vmul.f32 %v1839, %v1839
    %v3913 = vmul.f32 %v1844, %v1844
    %v3914 = vmul.f32 %v1914, %v1914
    %v3915 = vmul.f32 %v1919, %v1919
    %v3916 = vmul.f32 %v1989, %v1989
    %v3917 = vmul.f32 %v1994, %v1994
    %v3918 = vmul.f32 %v2064, %v2064
    %v3919 = vmul.f32 %v2069, %v2069
    %v3920 = vsub.f32 %v2739, %v3904
    %v3921 = vsub.f32 %v2744, %v3905
    %v3922 = vsub.f32 %v2814, %v3906
    %v3923 = vsub.f32 %v2819, %v3907
    %v3924 = vsub.f32 %v2889, %v3908
    %v3925 = vsub.f32 %v2894, %v3909
    %v3926 = vsub.f32 %v2964, %v3910
    %v3927 = vsub.f32 %v2969, %v3911
    %v3928 = vsub.f32 %v3039, %v3912
    %v3929 = vsub.f32 %v3044, %v3913
    %v3930 = vsub.f32 %v3114, %v3914
    %v3931 = vsub.f32 %v3119, %v3915
    %v3932 = vsub.f32 %v3189, %v3916
    %v3933 = vsub.f32 %v3194, %v3917
    %v3934 = vsub.f32 %v3264, %v3918
    %v3935 = vsub.f32 %v3269, %v3919
    %v3936 = vmul.f32 %v939, %v1539
    %v3937 = vmul.f32 %v944, %v1544
    %v3938 = vmul.f32 %v1014, %v1614
    %v3939 = vmul.f32 %v1019, %v1619
    %v3940 = vmul.f32 %v1089, %v1689
    %v3941 = vmul.f32 %v1094, %v1694
    %v3942 = vmul.f32 %v1164, %v1764
    %v3943 = vmul.f32 %v1169, %v1769
    %v3944 = vmul.f32 %v1239, %v1839
    %v3945 = vmul.f32 %v1244, %v1844
    %v3946 = vmul.f32 %v1314, %v1914
    %v3947 = vmul.f32 %v1319, %v1919
    %v3948 = vmul.f32 %v1389, %v1989
    %v3949 = vmul.f32 %v1394, %v1994
    %v3950 = vmul.f32 %v1464, %v2064
    %v3951 = vmul.f32 %v1469, %v2069
    %v3952 = vsub.f32 %v3339, %v3936
    %v3953 = vsub.f32 %v3344, %v3937
    %v3954 = vsub.f32 %v3414, %v3938
    %v3955 = vsub.f32 %v3419, %v3939
    %v3956 = vsub.f32 %v3489, %v3940
    %v3957 = vsub.f32 %v3494, %v3941
    %v3958 = vsub.f32 %v3564, %v3942
    %v3959 = vsub.f32 %v3569, %v3943
    %v3960 = vsub.f32 %v3639, %v3944
    %v3961 = vsub.f32 %v3644, %v3945
    %v3962 = vsub.f32 %v3714, %v3946
    %v3963 = vsub.f32 %v3719, %v3947
    %v3964 = vsub.f32 %v3789, %v3948
    %v3965 = vsub.f32 %v3794, %v3949
    %v3966 = vsub.f32 %v3864, %v3950
    %v3967 = vsub.f32 %v3869, %v3951
    %v3968 = vmul.f32 %v939, 2.0
    %v3969 = vmul.f32 %v944, 2.0
    %v3970 = vmul.f32 %v1014, 2.0
    %v3971 = vmul.f32 %v1019, 2.0
    %v3972 = vmul.f32 %v1089, 2.0
    %v3973 = vmul.f32 %v1094, 2.0
    %v3974 = vmul.f32 %v1164, 2.0
    %v3975 = vmul.f32 %v1169, 2.0
    %v3976 = vmul.f32 %v1239, 2.0
    %v3977 = vmul.f32 %v1244, 2.0
    %v3978 = vmul.f32 %v1314, 2.0
    %v3979 = vmul.f32 %v1319, 2.0
    %v3980 = vmul.f32 %v1389, 2.0
    %v3981 = vmul.f32 %v1394, 2.0
    %v3982 = vmul.f32 %v1464, 2.0
    %v3983 = vmul.f32 %v1469, 2.0
    %v3984 = vmul.f32 %v3968, %v1539
    %v3985 = vmul.f32 %v3969, %v1544
    %v3986 = vmul.f32 %v3970, %v1614
    %v3987 = vmul.f32 %v3971, %v1619
    %v3988 = vmul.f32 %v3972, %v1689
    %v3989 = vmul.f32 %v3973, %v1694
    %v3990 = vmul.f32 %v3974, %v1764
    %v3991 = vmul.f32 %v3975, %v1769
    %v3992 = vmul.f32 %v3976, %v1839
    %v3993 = vmul.f32 %v3977, %v1844
    %v3994 = vmul.f32 %v3978, %v1914
    %v3995 = vmul.f32 %v3979, %v1919
    %v3996 = vmul.f32 %v3980, %v1989
    %v3997 = vmul.f32 %v3981, %v1994
    %v3998 = vmul.f32 %v3982, %v2064
    %v3999 = vmul.f32 %v3983, %v2069
    %v4000 = vadd.f32 %v3984, 0.0001
    %v4001 = vadd.f32 %v3985, 0.0001
    %v4002 = vadd.f32 %v3986, 0.0001
    %v4003 = vadd.f32 %v3987, 0.0001
    %v4004 = vadd.f32 %v3988, 0.0001
    %v4005 = vadd.f32 %v3989, 0.0001
    %v4006 = vadd.f32 %v3990, 0.0001
    %v4007 = vadd.f32 %v3991, 0.0001
    %v4008 = vadd.f32 %v3992, 0.0001
    %v4009 = vadd.f32 %v3993, 0.0001
    %v4010 = vadd.f32 %v3994, 0.0001
    %v4011 = vadd.f32 %v3995, 0.0001
    %v4012 = vadd.f32 %v3996, 0.0001
    %v4013 = vadd.f32 %v3997, 0.0001
    %v4014 = vadd.f32 %v3998, 0.0001
    %v4015 = vadd.f32 %v3999, 0.0001
    %v4016 = vmul.f32 %v3952, 2.0
    %v4017 = vmul.f32 %v3953, 2.0
    %v4018 = vmul.f32 %v3954, 2.0
    %v4019 = vmul.f32 %v3955, 2.0
    %v4020 = vmul.f32 %v3956, 2.0
    %v4021 = vmul.f32 %v3957, 2.0
    %v4022 = vmul.f32 %v3958, 2.0
    %v4023 = vmul.f32 %v3959, 2.0
    %v4024 = vmul.f32 %v3960, 2.0
    %v4025 = vmul.f32 %v3961, 2.0
    %v4026 = vmul.f32 %v3962, 2.0
    %v4027 = vmul.f32 %v3963, 2.0
    %v4028 = vmul.f32 %v3964, 2.0
    %v4029 = vmul.f32 %v3965, 2.0
    %v4030 = vmul.f32 %v3966, 2.0
    %v4031 = vmul.f32 %v3967, 2.0
    %v4032 = vadd.f32 %v4016, 0.0009
    %v4033 = vadd.f32 %v4017, 0.0009
    %v4034 = vadd.f32 %v4018, 0.0009
    %v4035 = vadd.f32 %v4019, 0.0009
    %v4036 = vadd.f32 %v4020, 0.0009
    %v4037 = vadd.f32 %v4021, 0.0009
    %v4038 = vadd.f32 %v4022, 0.0009
    %v4039 = vadd.f32 %v4023, 0.0009
    %v4040 = vadd.f32 %v4024, 0.0009
    %v4041 = vadd.f32 %v4025, 0.0009
    %v4042 = vadd.f32 %v4026, 0.0009
    %v4043 = vadd.f32 %v4027, 0.0009
    %v4044 = vadd.f32 %v4028, 0.0009
    %v4045 = vadd.f32 %v4029, 0.0009
    %v4046 = vadd.f32 %v4030, 0.0009
    %v4047 = vadd.f32 %v4031, 0.0009
    %v4048 = vmul.f32 %v4000, %v4032
    %v4049 = vmul.f32 %v4001, %v4033
    %v4050 = vmul.f32 %v4002, %v4034
    %v4051 = vmul.f32 %v4003, %v4035
    %v4052 = vmul.f32 %v4004, %v4036
    %v4053 = vmul.f32 %v4005, %v4037
    %v4054 = vmul.f32 %v4006, %v4038
    %v4055 = vmul.f32 %v4007, %v4039
    %v4056 = vmul.f32 %v4008, %v4040
    %v4057 = vmul.f32 %v4009, %v4041
    %v4058 = vmul.f32 %v4010, %v4042
    %v4059 = vmul.f32 %v4011, %v4043
    %v4060 = vmul.f32 %v4012, %v4044
    %v4061 = vmul.f32 %v4013, %v4045
    %v4062 = vmul.f32 %v4014, %v4046
    %v4063 = vmul.f32 %v4015, %v4047
    %v4064 = vadd.f32 %v3872, %v3904
    %v4065 = vadd.f32 %v3873, %v3905
    %v4066 = vadd.f32 %v3874, %v3906
    %v4067 = vadd.f32 %v3875, %v3907
    %v4068 = vadd.f32 %v3876, %v3908
    %v4069 = vadd.f32 %v3877, %v3909
    %v4070 = vadd.f32 %v3878, %v3910
    %v4071 = vadd.f32 %v3879, %v3911
    %v4072 = vadd.f32 %v3880, %v3912
    %v4073 = vadd.f32 %v3881, %v3913
    %v4074 = vadd.f32 %v3882, %v3914
    %v4075 = vadd.f32 %v3883, %v3915
    %v4076 = vadd.f32 %v3884, %v3916
    %v4077 = vadd.f32 %v3885, %v3917
    %v4078 = vadd.f32 %v3886, %v3918
    %v4079 = vadd.f32 %v3887, %v3919
    %v4080 = vadd.f32 %v4064, 0.0001
    %v4081 = vadd.f32 %v4065, 0.0001
    %v4082 = vadd.f32 %v4066, 0.0001
    %v4083 = vadd.f32 %v4067, 0.0001
    %v4084 = vadd.f32 %v4068, 0.0001
    %v4085 = vadd.f32 %v4069, 0.0001
    %v4086 = vadd.f32 %v4070, 0.0001
    %v4087 = vadd.f32 %v4071, 0.0001
    %v4088 = vadd.f32 %v4072, 0.0001
    %v4089 = vadd.f32 %v4073, 0.0001
    %v4090 = vadd.f32 %v4074, 0.0001
    %v4091 = vadd.f32 %v4075, 0.0001
    %v4092 = vadd.f32 %v4076, 0.0001
    %v4093 = vadd.f32 %v4077, 0.0001
    %v4094 = vadd.f32 %v4078, 0.0001
    %v4095 = vadd.f32 %v4079, 0.0001
    %v4096 = vadd.f32 %v3888, %v3920
    %v4097 = vadd.f32 %v3889, %v3921
    %v4098 = vadd.f32 %v3890, %v3922
    %v4099 = vadd.f32 %v3891, %v3923
    %v4100 = vadd.f32 %v3892, %v3924
    %v4101 = vadd.f32 %v3893, %v3925
    %v4102 = vadd.f32 %v3894, %v3926
    %v4103 = vadd.f32 %v3895, %v3927
    %v4104 = vadd.f32 %v3896, %v3928
    %v4105 = vadd.f32 %v3897, %v3929
    %v4106 = vadd.f32 %v3898, %v3930
    %v4107 = vadd.f32 %v3899, %v3931
    %v4108 = vadd.f32 %v3900, %v3932
    %v4109 = vadd.f32 %v3901, %v3933
    %v4110 = vadd.f32 %v3902, %v3934
    %v4111 = vadd.f32 %v3903, %v3935
    %v4112 = vadd.f32 %v4096, 0.0009
    %v4113 = vadd.f32 %v4097, 0.0009
    %v4114 = vadd.f32 %v4098, 0.0009
    %v4115 = vadd.f32 %v4099, 0.0009
    %v4116 = vadd.f32 %v4100, 0.0009
    %v4117 = vadd.f32 %v4101, 0.0009
    %v4118 = vadd.f32 %v4102, 0.0009
    %v4119 = vadd.f32 %v4103, 0.0009
    %v4120 = vadd.f32 %v4104, 0.0009
    %v4121 = vadd.f32 %v4105, 0.0009
    %v4122 = vadd.f32 %v4106, 0.0009
    %v4123 = vadd.f32 %v4107, 0.0009
    %v4124 = vadd.f32 %v4108, 0.0009
    %v4125 = vadd.f32 %v4109, 0.0009
    %v4126 = vadd.f32 %v4110, 0.0009
    %v4127 = vadd.f32 %v4111, 0.0009
    %v4128 = vmul.f32 %v4080, %v4112
    %v4129 = vmul.f32 %v4081, %v4113
    %v4130 = vmul.f32 %v4082, %v4114
    %v4131 = vmul.f32 %v4083, %v4115
    %v4132 = vmul.f32 %v4084, %v4116
    %v4133 = vmul.f32 %v4085, %v4117
    %v4134 = vmul.f32 %v4086, %v4118
    %v4135 = vmul.f32 %v4087, %v4119
    %v4136 = vmul.f32 %v4088, %v4120
    %v4137 = vmul.f32 %v4089, %v4121
    %v4138 = vmul.f32 %v4090, %v4122
    %v4139 = vmul.f32 %v4091, %v4123
    %v4140 = vmul.f32 %v4092, %v4124
    %v4141 = vmul.f32 %v4093, %v4125
    %v4142 = vmul.f32 %v4094, %v4126
    %v4143 = vmul.f32 %v4095, %v4127
    %v4144 = vrcp.pop %v4128
    %v4145 = vrcp.pop %v4129
    %v4146 = vrcp.pop %v4130
    %v4147 = vrcp.pop %v4131
    %v4148 = vrcp.pop %v4132
    %v4149 = vrcp.pop %v4133
    %v4150 = vrcp.pop %v4134
    %v4151 = vrcp.pop %v4135
    %v4152 = vrcp.pop %v4136
    %v4153 = vrcp.pop %v4137
    %v4154 = vrcp.pop %v4138
    %v4155 = vrcp.pop %v4139
    %v4156 = vrcp.pop %v4140
    %v4157 = vrcp.pop %v4141
    %v4158 = vrcp.pop %v4142
    %v4159 = vrcp.pop %v4143
    %v4160 = vmul.f32 %v4048, %v4144
    %v4161 = vmul.f32 %v4049, %v4145
    %v4162 = vmul.f32 %v4050, %v4146
    %v4163 = vmul.f32 %v4051, %v4147
    %v4164 = vmul.f32 %v4052, %v4148
    %v4165 = vmul.f32 %v4053, %v4149
    %v4166 = vmul.f32 %v4054, %v4150
    %v4167 = vmul.f32 %v4055, %v4151
    %v4168 = vmul.f32 %v4056, %v4152
    %v4169 = vmul.f32 %v4057, %v4153
    %v4170 = vmul.f32 %v4058, %v4154
    %v4171 = vmul.f32 %v4059, %v4155
    %v4172 = vmul.f32 %v4060, %v4156
    %v4173 = vmul.f32 %v4061, %v4157
    %v4174 = vmul.f32 %v4062, %v4158
    %v4175 = vmul.f32 %v4063, %v4159
    %v4176 = vlaneseq
    %v4177 = vshrl.u32 %v4176, 7
    %v4178 = vadd.s32 %v4177, 8
    %v4179 = vlaneseq
    %v4180 = vand.u32 %v4179, 127
    %vm4181 = vcmp.ge.s32.totalorder %v4177, 5
    %vm4182 = vcmp.ge.s32.totalorder %v4178, 5
    %vm4183 = vcmp.lt.s32.totalorder %v4177, 11
    %vm4184 = vcmp.lt.s32.totalorder %v4178, 11
    %vm4185 = vmand %vm4181, %vm4183
    %vm4186 = vmand %vm4182, %vm4184
    %vm4187 = vcmp.ge.s32.totalorder %v4180, 5
    %vm4188 = vmand %vm4185, %vm4187
    %vm4189 = vmand %vm4186, %vm4187
    %vm4190 = vcmp.lt.s32.totalorder %v4180, 11
    %vm4191 = vmand %vm4188, %vm4190
    %vm4192 = vmand %vm4189, %vm4190
    %v4193 = vsel %vm4191, 1, 0
    %v4194 = vsel %vm4192, 1, 0
    %vm4195 = vcmp.eq.s32.totalorder %v4193, 1
    %vm4196 = vcmp.eq.s32.totalorder %v4194, 1
    %v4197 = vsel %vm4195, %v4160, 0.0
    %v4198 = vsel %vm4196, %v4161, 0.0
    %v4199 = vsel %vm4195, %v4162, 0.0
    %v4200 = vsel %vm4196, %v4163, 0.0
    %v4201 = vsel %vm4195, %v4164, 0.0
    %v4202 = vsel %vm4196, %v4165, 0.0
    %v4203 = vsel %vm4195, %v4166, 0.0
    %v4204 = vsel %vm4196, %v4167, 0.0
    %v4205 = vsel %vm4195, %v4168, 0.0
    %v4206 = vsel %vm4196, %v4169, 0.0
    %v4207 = vsel %vm4195, %v4170, 0.0
    %v4208 = vsel %vm4196, %v4171, 0.0
    %v4209 = vsel %vm4195, %v4172, 0.0
    %v4210 = vsel %vm4196, %v4173, 0.0
    %v4211 = vsel %vm4195, %v4174, 0.0
    %v4212 = vsel %vm4196, %v4175, 0.0
    %v4213 = vsel %vm160, %v4197, 0.0
    %v4214 = vsel %vm160, %v4198, 0.0
    %v4215 = vadd.f32 %v4213, %v4214
    %v4216 = vsel %vm160, %v4199, 0.0
    %v4217 = vadd.f32 %v4215, %v4216
    %v4218 = vsel %vm160, %v4200, 0.0
    %v4219 = vadd.f32 %v4217, %v4218
    %v4220 = vsel %vm160, %v4201, 0.0
    %v4221 = vadd.f32 %v4219, %v4220
    %v4222 = vsel %vm160, %v4202, 0.0
    %v4223 = vadd.f32 %v4221, %v4222
    %v4224 = vsel %vm160, %v4203, 0.0
    %v4225 = vadd.f32 %v4223, %v4224
    %v4226 = vsel %vm160, %v4204, 0.0
    %v4227 = vadd.f32 %v4225, %v4226
    %v4228 = vsel %vm160, %v4205, 0.0
    %v4229 = vadd.f32 %v4227, %v4228
    %v4230 = vsel %vm160, %v4206, 0.0
    %v4231 = vadd.f32 %v4229, %v4230
    %v4232 = vsel %vm160, %v4207, 0.0
    %v4233 = vadd.f32 %v4231, %v4232
    %v4234 = vsel %vm160, %v4208, 0.0
    %v4235 = vadd.f32 %v4233, %v4234
    %v4236 = vsel %vm160, %v4209, 0.0
    %v4237 = vadd.f32 %v4235, %v4236
    %v4238 = vsel %vm160, %v4210, 0.0
    %v4239 = vadd.f32 %v4237, %v4238
    %v4240 = vsel %vm160, %v4211, 0.0
    %v4241 = vadd.f32 %v4239, %v4240
    %v4242 = vsel %vm160, %v4212, 0.0
    %v4243 = vadd.f32 %v4241, %v4242
    %4244 = vadd.xlane.f32.xlu0 %v4243
    %v4245 = vpop.xlane.xlu0 %4244
    %v4246 = vrot.slane %v4245, 4
    %v4247 = vadd.f32 %v4245, %v4246
    %v4248 = vrot.slane %v4247, 2
    %v4249 = vadd.f32 %v4247, %v4248
    %v4250 = vrot.slane %v4249, 1
    %v4251 = vadd.f32 %v4249, %v4250
    %s4252 = vtos %v4251
    %v4253 = vstv %s4252
    %vm4254 = vcmask 0
    %4255 = vst.msk [vmem:[#allocation10] sm:$0x1] %vm4254, %v4253
    %v4256 = vsub.f32 %v92, %v76
    %v4257 = vsub.f32 %v93, %v77
    %v4258 = vsub.f32 %v94, %v78
    %v4259 = vsub.f32 %v95, %v79
    %v4260 = vsub.f32 %v96, %v80
    %v4261 = vsub.f32 %v97, %v81
    %v4262 = vsub.f32 %v98, %v82
    %v4263 = vsub.f32 %v99, %v83
    %v4264 = vsub.f32 %v100, %v84
    %v4265 = vsub.f32 %v101, %v85
    %v4266 = vsub.f32 %v102, %v86
    %v4267 = vsub.f32 %v103, %v87
    %v4268 = vsub.f32 %v104, %v88
    %v4269 = vsub.f32 %v105, %v89
    %v4270 = vsub.f32 %v106, %v90
    %v4271 = vsub.f32 %v107, %v91
    %v4272 = vmul.f32 %v4256, %v4256
    %v4273 = vmul.f32 %v4257, %v4257
    %v4274 = vmul.f32 %v4258, %v4258
    %v4275 = vmul.f32 %v4259, %v4259
    %v4276 = vmul.f32 %v4260, %v4260
    %v4277 = vmul.f32 %v4261, %v4261
    %v4278 = vmul.f32 %v4262, %v4262
    %v4279 = vmul.f32 %v4263, %v4263
    %v4280 = vmul.f32 %v4264, %v4264
    %v4281 = vmul.f32 %v4265, %v4265
    %v4282 = vmul.f32 %v4266, %v4266
    %v4283 = vmul.f32 %v4267, %v4267
    %v4284 = vmul.f32 %v4268, %v4268
    %v4285 = vmul.f32 %v4269, %v4269
    %v4286 = vmul.f32 %v4270, %v4270
    %v4287 = vmul.f32 %v4271, %v4271
    %v4288 = vsel %vm160, %v4272, 0.0
    %v4289 = vsel %vm160, %v4273, 0.0
    %v4290 = vadd.f32 %v4288, %v4289
    %v4291 = vsel %vm160, %v4274, 0.0
    %v4292 = vadd.f32 %v4290, %v4291
    %v4293 = vsel %vm160, %v4275, 0.0
    %v4294 = vadd.f32 %v4292, %v4293
    %v4295 = vsel %vm160, %v4276, 0.0
    %v4296 = vadd.f32 %v4294, %v4295
    %v4297 = vsel %vm160, %v4277, 0.0
    %v4298 = vadd.f32 %v4296, %v4297
    %v4299 = vsel %vm160, %v4278, 0.0
    %v4300 = vadd.f32 %v4298, %v4299
    %v4301 = vsel %vm160, %v4279, 0.0
    %v4302 = vadd.f32 %v4300, %v4301
    %v4303 = vsel %vm160, %v4280, 0.0
    %v4304 = vadd.f32 %v4302, %v4303
    %v4305 = vsel %vm160, %v4281, 0.0
    %v4306 = vadd.f32 %v4304, %v4305
    %v4307 = vsel %vm160, %v4282, 0.0
    %v4308 = vadd.f32 %v4306, %v4307
    %v4309 = vsel %vm160, %v4283, 0.0
    %v4310 = vadd.f32 %v4308, %v4309
    %v4311 = vsel %vm160, %v4284, 0.0
    %v4312 = vadd.f32 %v4310, %v4311
    %v4313 = vsel %vm160, %v4285, 0.0
    %v4314 = vadd.f32 %v4312, %v4313
    %v4315 = vsel %vm160, %v4286, 0.0
    %v4316 = vadd.f32 %v4314, %v4315
    %v4317 = vsel %vm160, %v4287, 0.0
    %v4318 = vadd.f32 %v4316, %v4317
    %4319 = vadd.xlane.f32.xlu0 %v4318
    %v4320 = vpop.xlane.xlu0 %4319
    %v4321 = vrot.slane %v4320, 4
    %v4322 = vadd.f32 %v4320, %v4321
    %v4323 = vrot.slane %v4322, 2
    %v4324 = vadd.f32 %v4322, %v4323
    %v4325 = vrot.slane %v4324, 1
    %v4326 = vadd.f32 %v4324, %v4325
    %s4327 = vtos %v4326
    %v4328 = vstv %s4327
    %4329 = vst.msk [vmem:[#allocation11] sm:$0x1] %vm4254, %v4328
    // Predicated region
    $region34: #{mse_ssim_loss.1} parent=1 // pred_check
      _
    $region35: #{mse_ssim_loss.1} parent=1 // pred_check_branch
      %4331 = sbr.rel (0) target = $region37
    $region36: #{mse_ssim_loss.1} parent=1 // pred_region
      %s4333 = ssub.s32 16, 16
      %4334 = vsyncadd [#allocation4], %s4333
      %s4336 = sshll.u32 [#allocation10], 4
      %s4337 = int_to_ptr.vmem [resolvable:$true] %s4336
      %4339 = dma.vmem_to_hbm [thread:$0]  %s4337, 16, %s4, [#allocation4]
    $region37: #{mse_ssim_loss.1} parent=1 // pred_fallthru
      _
    // Predicated region
    $region38: #{mse_ssim_loss.1} parent=1 // pred_check
      _
    $region39: #{mse_ssim_loss.1} parent=1 // pred_check_branch
      %4341 = sbr.rel (0) target = $region41
    $region40: #{mse_ssim_loss.1} parent=1 // pred_region
      %s4343 = ssub.s32 16, 16
      %4344 = vsyncadd [#allocation12], %s4343
      %s4346 = sshll.u32 [#allocation11], 4
      %s4347 = int_to_ptr.vmem [resolvable:$true] %s4346
      %4349 = dma.vmem_to_hbm [thread:$0]  %s4347, 16, %s5, [#allocation12]
    $region41: #{mse_ssim_loss.1} parent=1 // pred_fallthru
      _
    // Predicated region
    $region42: #{mse_ssim_loss.1} parent=1 // pred_check
      _
    $region43: #{mse_ssim_loss.1} parent=1 // pred_check_branch
      %4351 = sbr.rel (0) target = $region45
    $region44: #{mse_ssim_loss.1} parent=1 // pred_region
      %4352 = dma.done [#allocation4], 16
    $region45: #{mse_ssim_loss.1} parent=1 // pred_fallthru
      _
    // Predicated region
    $region46: #{mse_ssim_loss.1} parent=1 // pred_check
      _
    $region47: #{mse_ssim_loss.1} parent=1 // pred_check_branch
      %4354 = sbr.rel (0) target = $region49
    $region48: #{mse_ssim_loss.1} parent=1 // pred_region
      %4355 = dma.done [#allocation12], 16
    $region49: #{mse_ssim_loss.1} parent=1 // pred_fallthru
      _
    %4356 = vsyncpa [#allocation3], 1
    %4357 = vsyncpa [#allocation6], 1
    %4358 = vsyncpa [#allocation9], 1
    %4359 = vsyncpa [#allocation4], 1
    %4360 = vsyncpa [#allocation12], 1

</llo_original>
